<compile_context>
chip_gen: v6e
topology: v6e:2x2x1
jax: 0.10.0
libtpu: 0.0.40
codegen_flags: <defaults>
</compile_context>

<pallas_src>
import jax
import jax.numpy as jnp
from jax.experimental import pallas as pl
from jax.experimental.pallas import tpu as pltpu


def gru_self_attention_kernel(
    x_ref, mask_ref,
    emb_w_ref, emb_b_ref,
    w_ih_ref, b_ih_ref,
    w_hh_ref, b_hh_ref,
    attn_w_ref, attn_b_ref,
    fc_w_ref, fc_b_ref,
    out_ref,
):
    S, BT, _C = x_ref.shape
    H = w_hh_ref.shape[2]

    # ---- hoist all loop-invariant weight loads out of the recurrence ----
    emb_w = emb_w_ref[...]                     # (C, V)  pre-transposed
    emb_b = emb_b_ref[...]                     # (1, V)
    wir, wiz, win = w_ih_ref[0], w_ih_ref[1], w_ih_ref[2]    # each (V, H)
    bir, biz, bin_ = b_ih_ref[0], b_ih_ref[1], b_ih_ref[2]   # each (1, H)
    whr, whz, whn = w_hh_ref[0], w_hh_ref[1], w_hh_ref[2]    # each (H, H)
    bhr, bhz, bhn = b_hh_ref[0], b_hh_ref[1], b_hh_ref[2]    # each (1, H)
    aw = attn_w_ref[...]                       # (1, H)
    ab = attn_b_ref[...]                       # (1, 1)

    h = jnp.zeros((BT, H), jnp.float32)
    hs = []          # per-step hidden states (values, no scratch)
    scs = []         # per-step attention scores (BT, 1)

    # ---- fully unrolled recurrence (S is small & static) ----
    for t in range(S):
        x_t = x_ref[t]                                                     # (BT, C)
        e_t = jnp.maximum(
            jnp.dot(x_t, emb_w, preferred_element_type=jnp.float32) + emb_b, 0.0)

        # input-side gate projections (independent of h; scheduler overlaps them)
        xr = jnp.dot(e_t, wir, preferred_element_type=jnp.float32) + bir
        xz = jnp.dot(e_t, wiz, preferred_element_type=jnp.float32) + biz
        xn = jnp.dot(e_t, win, preferred_element_type=jnp.float32) + bin_

        # recurrent gate projections (per-gate weights: no lane-offset slicing)
        hr = jnp.dot(h, whr, preferred_element_type=jnp.float32) + bhr
        hz = jnp.dot(h, whz, preferred_element_type=jnp.float32) + bhz
        hn = jnp.dot(h, whn, preferred_element_type=jnp.float32) + bhn

        r = jax.nn.sigmoid(xr + hr)
        z = jax.nn.sigmoid(xz + hz)
        n = jnp.tanh(xn + r * hn)
        h = (1.0 - z) * n + z * h

        hs.append(h)
        # attention score folded into the recurrence: VPU multiply + lane reduce
        scs.append(jnp.sum(h * aw, axis=1, keepdims=True) + ab)            # (BT, 1)

    # ---- softmax over the seq axis (unrolled, per batch row) ----
    m = scs[0]
    for t in range(1, S):
        m = jnp.maximum(m, scs[t])
    es = [jnp.exp(sc - m) for sc in scs]
    denom = es[0]
    for t in range(1, S):
        denom = denom + es[t]

    # ---- weighted, masked sum over seq ----
    pooled = jnp.zeros((BT, H), jnp.float32)
    for t in range(S):
        pooled = pooled + hs[t] * (es[t] * mask_ref[t])                    # (BT, H)
    pooled = pooled / denom                                                # (BT, H)

    # (dropout = identity in eval mode)

    # ---- final FC ----
    out_ref[...] = (jnp.dot(pooled, fc_w_ref[...],
                            preferred_element_type=jnp.float32) + fc_b_ref[...])


def gru_self_attention(x, mask, params):
    S, B, C = x.shape
    V = params["emb_w"].shape[0]
    H = params["w_hh"].shape[1]
    L = params["fc_w"].shape[0]

    # Batch tile: sublane-aligned (multiple of 8), capped at 128 rows per program.
    BT = 128 if B > 128 else ((B + 7) // 8) * 8
    B_pad = ((B + BT - 1) // BT) * BT
    n_bt = B_pad // BT

    xf = x.astype(jnp.float32)
    mf = mask.astype(jnp.float32)
    if B_pad != B:
        xf = jnp.pad(xf, ((0, 0), (0, B_pad - B), (0, 0)))
        mf = jnp.pad(mf, ((0, 0), (0, B_pad - B)))
    mf = mf[:, :, None]                                        # (S, B_pad, 1)

    def gates_T(w):  # (3H, K) torch gate-stacked weight -> (3, K, H), per-gate, transposed
        return jnp.stack([w[0:H].T, w[H:2 * H].T, w[2 * H:3 * H].T], axis=0)

    args = (
        xf, mf,
        params["emb_w"].T,                     # (C, V)
        params["emb_b"].reshape(1, V),
        gates_T(params["w_ih"]),               # (3, V, H)
        params["b_ih"].reshape(3, 1, H),
        gates_T(params["w_hh"]),               # (3, H, H)
        params["b_hh"].reshape(3, 1, H),
        params["attn_w"].reshape(1, H),
        params["attn_b"].reshape(1, 1),
        params["fc_w"].T,                      # (H, L)
        params["fc_b"].reshape(1, L),
    )

    def full(shape):
        n = len(shape)
        return pl.BlockSpec(shape, lambda *_: (0,) * n)

    in_specs = [
        pl.BlockSpec((S, BT, C), lambda j: (0, j, 0)),    # x: tiled over batch
        pl.BlockSpec((S, BT, 1), lambda j: (0, j, 0)),    # mask: tiled over batch
        full((C, V)), full((1, V)),
        full((3, V, H)), full((3, 1, H)),
        full((3, H, H)), full((3, 1, H)),
        full((1, H)), full((1, 1)),
        full((H, L)), full((1, L)),
    ]

    out = pl.pallas_call(
        gru_self_attention_kernel,
        out_shape=jax.ShapeDtypeStruct((B_pad, L), jnp.float32),
        grid=(n_bt,),
        in_specs=in_specs,
        out_specs=pl.BlockSpec((BT, L), lambda j: (j, 0)),
        compiler_params=pltpu.CompilerParams(
            dimension_semantics=("parallel",)),
    )(*args)
    return out[:B]


def reference(x, mask, p):
    """Pure-JAX mirror of the PyTorch forward (eval mode)."""
    emb = jax.nn.relu(x @ p["emb_w"].T + p["emb_b"])
    H = p["w_hh"].shape[1]

    def step(h, xt):
        xg = xt @ p["w_ih"].T + p["b_ih"]
        hg = h @ p["w_hh"].T + p["b_hh"]
        r = jax.nn.sigmoid(xg[:, :H] + hg[:, :H])
        z = jax.nn.sigmoid(xg[:, H:2 * H] + hg[:, H:2 * H])
        n = jnp.tanh(xg[:, 2 * H:] + r * hg[:, 2 * H:])
        h_new = (1.0 - z) * n + z * h
        return h_new, h_new

    h0 = jnp.zeros((x.shape[1], H), jnp.float32)
    _, outs = jax.lax.scan(step, h0, emb)
    scores = outs @ p["attn_w"].T + p["attn_b"]          # (S, B, 1)
    w = jax.nn.softmax(scores, axis=0)
    pooled = (outs * w * mask[:, :, None]).sum(0)
    return pooled @ p["fc_w"].T + p["fc_b"]


def init_params(key, n_codes, visit_size, hidden_size, n_labels):
    ks = jax.random.split(key, 10)
    s = 0.1
    return {
        "emb_w": s * jax.random.normal(ks[0], (visit_size, n_codes), jnp.float32),
        "emb_b": s * jax.random.normal(ks[1], (visit_size,), jnp.float32),
        "w_ih": s * jax.random.normal(ks[2], (3 * hidden_size, visit_size), jnp.float32),
        "w_hh": s * jax.random.normal(ks[3], (3 * hidden_size, hidden_size), jnp.float32),
        "b_ih": s * jax.random.normal(ks[4], (3 * hidden_size,), jnp.float32),
        "b_hh": s * jax.random.normal(ks[5], (3 * hidden_size,), jnp.float32),
        "attn_w": s * jax.random.normal(ks[6], (1, hidden_size), jnp.float32),
        "attn_b": s * jax.random.normal(ks[7], (1,), jnp.float32),
        "fc_w": s * jax.random.normal(ks[8], (n_labels, hidden_size), jnp.float32),
        "fc_b": s * jax.random.normal(ks[9], (n_labels,), jnp.float32),
    }


if __name__ == "__main__":
    # options: n_diagnosis_codes=16, visit_size=32, hidden_size=32, n_labels=4
    S, B, C, V, H, L = 8, 2, 16, 32, 32, 4

    key = jax.random.PRNGKey(0)
    k_x, k_m, k_p = jax.random.split(key, 3)

    x = jax.random.normal(k_x, (S, B, C), jnp.float32)
    mask = (jax.random.uniform(k_m, (S, B)) > 0.25).astype(jnp.float32)
    params = init_params(k_p, C, V, H, L)

    logit = gru_self_attention(x, mask, params)
    logit = jax.block_until_ready(logit)

    ref = reference(x, mask, params)
    assert logit.shape == (B, L)
    assert jnp.allclose(logit, ref, atol=1e-3, rtol=1e-3), (
        f"mismatch: max abs err {jnp.max(jnp.abs(logit - ref))}"
    )
    print("KERNEL_OK")
</pallas_src>

<mosaic_0001>
module attributes {stable_mosaic.version = 11 : i64} {
  func.func @gru_self_attention_kernel(%arg0: i32, %arg1: memref<8x8x16xf32, #tpu.memory_space<vmem>>, %arg2: memref<8x8x1xf32, #tpu.memory_space<vmem>>, %arg3: memref<16x32xf32, #tpu.memory_space<vmem>>, %arg4: memref<1x32xf32, #tpu.memory_space<vmem>>, %arg5: memref<3x32x32xf32, #tpu.memory_space<vmem>>, %arg6: memref<3x1x32xf32, #tpu.memory_space<vmem>>, %arg7: memref<3x32x32xf32, #tpu.memory_space<vmem>>, %arg8: memref<3x1x32xf32, #tpu.memory_space<vmem>>, %arg9: memref<1x32xf32, #tpu.memory_space<vmem>>, %arg10: memref<1x1xf32, #tpu.memory_space<vmem>>, %arg11: memref<32x4xf32, #tpu.memory_space<vmem>>, %arg12: memref<1x4xf32, #tpu.memory_space<vmem>>, %arg13: memref<8x4xf32, #tpu.memory_space<vmem>>) attributes {dimension_semantics = [#tpu.dimension_semantics<parallel>], iteration_bounds = array<i64: 1>, scalar_prefetch = 0 : i64, scratch_operands = 0 : i64, tpu.core_type = #tpu.core_type<tc>, window_params = [{transform_indices = @transform_0, window_bounds = array<i64: 8, 8, 16>}, {transform_indices = @transform_1, window_bounds = array<i64: 8, 8, 1>}, {pipeline_mode = #tpu.pipeline_mode<synchronous>, transform_indices = @transform_2, window_bounds = array<i64: 16, 32>}, {pipeline_mode = #tpu.pipeline_mode<synchronous>, transform_indices = @transform_3, window_bounds = array<i64: 1, 32>}, {pipeline_mode = #tpu.pipeline_mode<synchronous>, transform_indices = @transform_4, window_bounds = array<i64: 3, 32, 32>}, {pipeline_mode = #tpu.pipeline_mode<synchronous>, transform_indices = @transform_5, window_bounds = array<i64: 3, 1, 32>}, {pipeline_mode = #tpu.pipeline_mode<synchronous>, transform_indices = @transform_6, window_bounds = array<i64: 3, 32, 32>}, {pipeline_mode = #tpu.pipeline_mode<synchronous>, transform_indices = @transform_7, window_bounds = array<i64: 3, 1, 32>}, {pipeline_mode = #tpu.pipeline_mode<synchronous>, transform_indices = @transform_8, window_bounds = array<i64: 1, 32>}, {pipeline_mode = #tpu.pipeline_mode<synchronous>, transform_indices = @transform_9, window_bounds = array<i64: 1, 1>}, {pipeline_mode = #tpu.pipeline_mode<synchronous>, transform_indices = @transform_10, window_bounds = array<i64: 32, 4>}, {pipeline_mode = #tpu.pipeline_mode<synchronous>, transform_indices = @transform_11, window_bounds = array<i64: 1, 4>}, {transform_indices = @transform_12, window_bounds = array<i64: 8, 4>}]} {
    %c0 = arith.constant 0 : index
    %c0_0 = arith.constant 0 : index
    %0 = vector.load %arg3[%c0, %c0_0] : memref<16x32xf32, #tpu.memory_space<vmem>>, vector<16x32xf32>
    %c0_1 = arith.constant 0 : index
    %c0_2 = arith.constant 0 : index
    %1 = vector.load %arg4[%c0_1, %c0_2] : memref<1x32xf32, #tpu.memory_space<vmem>>, vector<1x32xf32>
    %c0_3 = arith.constant 0 : index
    %c0_4 = arith.constant 0 : index
    %c0_5 = arith.constant 0 : index
    %2 = vector.load %arg5[%c0_3, %c0_4, %c0_5] : memref<3x32x32xf32, #tpu.memory_space<vmem>>, vector<1x32x32xf32>
    %3 = vector.shape_cast %2 : vector<1x32x32xf32> to vector<32x32xf32>
    %c1 = arith.constant 1 : index
    %c0_6 = arith.constant 0 : index
    %c0_7 = arith.constant 0 : index
    %4 = vector.load %arg5[%c1, %c0_6, %c0_7] : memref<3x32x32xf32, #tpu.memory_space<vmem>>, vector<1x32x32xf32>
    %5 = vector.shape_cast %4 : vector<1x32x32xf32> to vector<32x32xf32>
    %c2 = arith.constant 2 : index
    %c0_8 = arith.constant 0 : index
    %c0_9 = arith.constant 0 : index
    %6 = vector.load %arg5[%c2, %c0_8, %c0_9] : memref<3x32x32xf32, #tpu.memory_space<vmem>>, vector<1x32x32xf32>
    %7 = vector.shape_cast %6 : vector<1x32x32xf32> to vector<32x32xf32>
    %c0_10 = arith.constant 0 : index
    %c0_11 = arith.constant 0 : index
    %c0_12 = arith.constant 0 : index
    %8 = vector.load %arg6[%c0_10, %c0_11, %c0_12] : memref<3x1x32xf32, #tpu.memory_space<vmem>>, vector<1x1x32xf32>
    %9 = vector.shape_cast %8 : vector<1x1x32xf32> to vector<1x32xf32>
    %c1_13 = arith.constant 1 : index
    %c0_14 = arith.constant 0 : index
    %c0_15 = arith.constant 0 : index
    %10 = vector.load %arg6[%c1_13, %c0_14, %c0_15] : memref<3x1x32xf32, #tpu.memory_space<vmem>>, vector<1x1x32xf32>
    %11 = vector.shape_cast %10 : vector<1x1x32xf32> to vector<1x32xf32>
    %c2_16 = arith.constant 2 : index
    %c0_17 = arith.constant 0 : index
    %c0_18 = arith.constant 0 : index
    %12 = vector.load %arg6[%c2_16, %c0_17, %c0_18] : memref<3x1x32xf32, #tpu.memory_space<vmem>>, vector<1x1x32xf32>
    %13 = vector.shape_cast %12 : vector<1x1x32xf32> to vector<1x32xf32>
    %c0_19 = arith.constant 0 : index
    %c0_20 = arith.constant 0 : index
    %c0_21 = arith.constant 0 : index
    %14 = vector.load %arg7[%c0_19, %c0_20, %c0_21] : memref<3x32x32xf32, #tpu.memory_space<vmem>>, vector<1x32x32xf32>
    %15 = vector.shape_cast %14 : vector<1x32x32xf32> to vector<32x32xf32>
    %c1_22 = arith.constant 1 : index
    %c0_23 = arith.constant 0 : index
    %c0_24 = arith.constant 0 : index
    %16 = vector.load %arg7[%c1_22, %c0_23, %c0_24] : memref<3x32x32xf32, #tpu.memory_space<vmem>>, vector<1x32x32xf32>
    %17 = vector.shape_cast %16 : vector<1x32x32xf32> to vector<32x32xf32>
    %c2_25 = arith.constant 2 : index
    %c0_26 = arith.constant 0 : index
    %c0_27 = arith.constant 0 : index
    %18 = vector.load %arg7[%c2_25, %c0_26, %c0_27] : memref<3x32x32xf32, #tpu.memory_space<vmem>>, vector<1x32x32xf32>
    %19 = vector.shape_cast %18 : vector<1x32x32xf32> to vector<32x32xf32>
    %c0_28 = arith.constant 0 : index
    %c0_29 = arith.constant 0 : index
    %c0_30 = arith.constant 0 : index
    %20 = vector.load %arg8[%c0_28, %c0_29, %c0_30] : memref<3x1x32xf32, #tpu.memory_space<vmem>>, vector<1x1x32xf32>
    %21 = vector.shape_cast %20 : vector<1x1x32xf32> to vector<1x32xf32>
    %c1_31 = arith.constant 1 : index
    %c0_32 = arith.constant 0 : index
    %c0_33 = arith.constant 0 : index
    %22 = vector.load %arg8[%c1_31, %c0_32, %c0_33] : memref<3x1x32xf32, #tpu.memory_space<vmem>>, vector<1x1x32xf32>
    %23 = vector.shape_cast %22 : vector<1x1x32xf32> to vector<1x32xf32>
    %c2_34 = arith.constant 2 : index
    %c0_35 = arith.constant 0 : index
    %c0_36 = arith.constant 0 : index
    %24 = vector.load %arg8[%c2_34, %c0_35, %c0_36] : memref<3x1x32xf32, #tpu.memory_space<vmem>>, vector<1x1x32xf32>
    %25 = vector.shape_cast %24 : vector<1x1x32xf32> to vector<1x32xf32>
    %c0_37 = arith.constant 0 : index
    %c0_38 = arith.constant 0 : index
    %26 = vector.load %arg9[%c0_37, %c0_38] : memref<1x32xf32, #tpu.memory_space<vmem>>, vector<1x32xf32>
    %c0_39 = arith.constant 0 : index
    %c0_40 = arith.constant 0 : index
    %27 = vector.load %arg10[%c0_39, %c0_40] : memref<1x1xf32, #tpu.memory_space<vmem>>, vector<1x1xf32>
    %cst = arith.constant 0.000000e+00 : f32
    %28 = vector.broadcast %cst : f32 to vector<8x32xf32>
    %c0_41 = arith.constant 0 : index
    %c0_42 = arith.constant 0 : index
    %c0_43 = arith.constant 0 : index
    %29 = vector.load %arg1[%c0_41, %c0_42, %c0_43] : memref<8x8x16xf32, #tpu.memory_space<vmem>>, vector<1x8x16xf32>
    %30 = vector.shape_cast %29 : vector<1x8x16xf32> to vector<8x16xf32>
    %cst_44 = arith.constant dense<0.000000e+00> : vector<8x32xf32>
    %31 = tpu.matmul %30, %0, %cst_44 {dimension_numbers = #tpu.dot_dimension_numbers<[1], [0], [0], [1], [0, 0, 1, 1], [], []>} : vector<8x16xf32>, vector<16x32xf32>, vector<8x32xf32> -> vector<8x32xf32>
    %32 = vector.broadcast %1 : vector<1x32xf32> to vector<8x32xf32>
    %33 = arith.addf %31, %32 : vector<8x32xf32>
    %cst_45 = arith.constant 0.000000e+00 : f32
    %34 = vector.broadcast %cst_45 : f32 to vector<8x32xf32>
    %35 = arith.maximumf %33, %34 : vector<8x32xf32>
    %cst_46 = arith.constant dense<0.000000e+00> : vector<8x32xf32>
    %36 = tpu.matmul %35, %3, %cst_46 {dimension_numbers = #tpu.dot_dimension_numbers<[1], [0], [0], [1], [0, 0, 1, 1], [], []>} : vector<8x32xf32>, vector<32x32xf32>, vector<8x32xf32> -> vector<8x32xf32>
    %37 = vector.broadcast %9 : vector<1x32xf32> to vector<8x32xf32>
    %38 = arith.addf %36, %37 : vector<8x32xf32>
    %cst_47 = arith.constant dense<0.000000e+00> : vector<8x32xf32>
    %39 = tpu.matmul %35, %5, %cst_47 {dimension_numbers = #tpu.dot_dimension_numbers<[1], [0], [0], [1], [0, 0, 1, 1], [], []>} : vector<8x32xf32>, vector<32x32xf32>, vector<8x32xf32> -> vector<8x32xf32>
    %40 = vector.broadcast %11 : vector<1x32xf32> to vector<8x32xf32>
    %41 = arith.addf %39, %40 : vector<8x32xf32>
    %cst_48 = arith.constant dense<0.000000e+00> : vector<8x32xf32>
    %42 = tpu.matmul %35, %7, %cst_48 {dimension_numbers = #tpu.dot_dimension_numbers<[1], [0], [0], [1], [0, 0, 1, 1], [], []>} : vector<8x32xf32>, vector<32x32xf32>, vector<8x32xf32> -> vector<8x32xf32>
    %43 = vector.broadcast %13 : vector<1x32xf32> to vector<8x32xf32>
    %44 = arith.addf %42, %43 : vector<8x32xf32>
    %cst_49 = arith.constant dense<0.000000e+00> : vector<8x32xf32>
    %45 = tpu.matmul %28, %15, %cst_49 {dimension_numbers = #tpu.dot_dimension_numbers<[1], [0], [0], [1], [0, 0, 1, 1], [], []>} : vector<8x32xf32>, vector<32x32xf32>, vector<8x32xf32> -> vector<8x32xf32>
    %46 = vector.broadcast %21 : vector<1x32xf32> to vector<8x32xf32>
    %47 = arith.addf %45, %46 : vector<8x32xf32>
    %cst_50 = arith.constant dense<0.000000e+00> : vector<8x32xf32>
    %48 = tpu.matmul %28, %17, %cst_50 {dimension_numbers = #tpu.dot_dimension_numbers<[1], [0], [0], [1], [0, 0, 1, 1], [], []>} : vector<8x32xf32>, vector<32x32xf32>, vector<8x32xf32> -> vector<8x32xf32>
    %49 = vector.broadcast %23 : vector<1x32xf32> to vector<8x32xf32>
    %50 = arith.addf %48, %49 : vector<8x32xf32>
    %cst_51 = arith.constant dense<0.000000e+00> : vector<8x32xf32>
    %51 = tpu.matmul %28, %19, %cst_51 {dimension_numbers = #tpu.dot_dimension_numbers<[1], [0], [0], [1], [0, 0, 1, 1], [], []>} : vector<8x32xf32>, vector<32x32xf32>, vector<8x32xf32> -> vector<8x32xf32>
    %52 = vector.broadcast %25 : vector<1x32xf32> to vector<8x32xf32>
    %53 = arith.addf %51, %52 : vector<8x32xf32>
    %54 = arith.addf %38, %47 : vector<8x32xf32>
    %55 = arith.negf %54 : vector<8x32xf32>
    %56 = math.exp %55 : vector<8x32xf32>
    %cst_52 = arith.constant 1.000000e+00 : f32
    %57 = vector.broadcast %cst_52 : f32 to vector<8x32xf32>
    %58 = arith.addf %57, %56 : vector<8x32xf32>
    %59 = arith.divf %57, %58 : vector<8x32xf32>
    %60 = arith.addf %41, %50 : vector<8x32xf32>
    %61 = arith.negf %60 : vector<8x32xf32>
    %62 = math.exp %61 : vector<8x32xf32>
    %cst_53 = arith.constant 1.000000e+00 : f32
    %63 = vector.broadcast %cst_53 : f32 to vector<8x32xf32>
    %64 = arith.addf %63, %62 : vector<8x32xf32>
    %65 = arith.divf %63, %64 : vector<8x32xf32>
    %66 = arith.mulf %59, %53 : vector<8x32xf32>
    %67 = arith.addf %44, %66 : vector<8x32xf32>
    %68 = math.tanh %67 : vector<8x32xf32>
    %cst_54 = arith.constant 1.000000e+00 : f32
    %69 = vector.broadcast %cst_54 : f32 to vector<8x32xf32>
    %70 = arith.subf %69, %65 : vector<8x32xf32>
    %71 = arith.mulf %70, %68 : vector<8x32xf32>
    %72 = arith.mulf %65, %28 : vector<8x32xf32>
    %73 = arith.addf %71, %72 : vector<8x32xf32>
    %74 = vector.broadcast %26 : vector<1x32xf32> to vector<8x32xf32>
    %75 = arith.mulf %73, %74 : vector<8x32xf32>
    %cst_55 = arith.constant dense<0.000000e+00> : vector<8xf32>
    %76 = vector.multi_reduction <add>, %75, %cst_55 [1] : vector<8x32xf32> to vector<8xf32>
    %77 = vector.shape_cast %76 : vector<8xf32> to vector<8x1xf32>
    %78 = vector.broadcast %27 : vector<1x1xf32> to vector<8x1xf32>
    %79 = arith.addf %77, %78 : vector<8x1xf32>
    %c1_56 = arith.constant 1 : index
    %c0_57 = arith.constant 0 : index
    %c0_58 = arith.constant 0 : index
    %80 = vector.load %arg1[%c1_56, %c0_57, %c0_58] : memref<8x8x16xf32, #tpu.memory_space<vmem>>, vector<1x8x16xf32>
    %81 = vector.shape_cast %80 : vector<1x8x16xf32> to vector<8x16xf32>
    %cst_59 = arith.constant dense<0.000000e+00> : vector<8x32xf32>
    %82 = tpu.matmul %81, %0, %cst_59 {dimension_numbers = #tpu.dot_dimension_numbers<[1], [0], [0], [1], [0, 0, 1, 1], [], []>} : vector<8x16xf32>, vector<16x32xf32>, vector<8x32xf32> -> vector<8x32xf32>
    %83 = vector.broadcast %1 : vector<1x32xf32> to vector<8x32xf32>
    %84 = arith.addf %82, %83 : vector<8x32xf32>
    %cst_60 = arith.constant 0.000000e+00 : f32
    %85 = vector.broadcast %cst_60 : f32 to vector<8x32xf32>
    %86 = arith.maximumf %84, %85 : vector<8x32xf32>
    %cst_61 = arith.constant dense<0.000000e+00> : vector<8x32xf32>
    %87 = tpu.matmul %86, %3, %cst_61 {dimension_numbers = #tpu.dot_dimension_numbers<[1], [0], [0], [1], [0, 0, 1, 1], [], []>} : vector<8x32xf32>, vector<32x32xf32>, vector<8x32xf32> -> vector<8x32xf32>
    %88 = vector.broadcast %9 : vector<1x32xf32> to vector<8x32xf32>
    %89 = arith.addf %87, %88 : vector<8x32xf32>
    %cst_62 = arith.constant dense<0.000000e+00> : vector<8x32xf32>
    %90 = tpu.matmul %86, %5, %cst_62 {dimension_numbers = #tpu.dot_dimension_numbers<[1], [0], [0], [1], [0, 0, 1, 1], [], []>} : vector<8x32xf32>, vector<32x32xf32>, vector<8x32xf32> -> vector<8x32xf32>
    %91 = vector.broadcast %11 : vector<1x32xf32> to vector<8x32xf32>
    %92 = arith.addf %90, %91 : vector<8x32xf32>
    %cst_63 = arith.constant dense<0.000000e+00> : vector<8x32xf32>
    %93 = tpu.matmul %86, %7, %cst_63 {dimension_numbers = #tpu.dot_dimension_numbers<[1], [0], [0], [1], [0, 0, 1, 1], [], []>} : vector<8x32xf32>, vector<32x32xf32>, vector<8x32xf32> -> vector<8x32xf32>
    %94 = vector.broadcast %13 : vector<1x32xf32> to vector<8x32xf32>
    %95 = arith.addf %93, %94 : vector<8x32xf32>
    %cst_64 = arith.constant dense<0.000000e+00> : vector<8x32xf32>
    %96 = tpu.matmul %73, %15, %cst_64 {dimension_numbers = #tpu.dot_dimension_numbers<[1], [0], [0], [1], [0, 0, 1, 1], [], []>} : vector<8x32xf32>, vector<32x32xf32>, vector<8x32xf32> -> vector<8x32xf32>
    %97 = vector.broadcast %21 : vector<1x32xf32> to vector<8x32xf32>
    %98 = arith.addf %96, %97 : vector<8x32xf32>
    %cst_65 = arith.constant dense<0.000000e+00> : vector<8x32xf32>
    %99 = tpu.matmul %73, %17, %cst_65 {dimension_numbers = #tpu.dot_dimension_numbers<[1], [0], [0], [1], [0, 0, 1, 1], [], []>} : vector<8x32xf32>, vector<32x32xf32>, vector<8x32xf32> -> vector<8x32xf32>
    %100 = vector.broadcast %23 : vector<1x32xf32> to vector<8x32xf32>
    %101 = arith.addf %99, %100 : vector<8x32xf32>
    %cst_66 = arith.constant dense<0.000000e+00> : vector<8x32xf32>
    %102 = tpu.matmul %73, %19, %cst_66 {dimension_numbers = #tpu.dot_dimension_numbers<[1], [0], [0], [1], [0, 0, 1, 1], [], []>} : vector<8x32xf32>, vector<32x32xf32>, vector<8x32xf32> -> vector<8x32xf32>
    %103 = vector.broadcast %25 : vector<1x32xf32> to vector<8x32xf32>
    %104 = arith.addf %102, %103 : vector<8x32xf32>
    %105 = arith.addf %89, %98 : vector<8x32xf32>
    %106 = arith.negf %105 : vector<8x32xf32>
    %107 = math.exp %106 : vector<8x32xf32>
    %cst_67 = arith.constant 1.000000e+00 : f32
    %108 = vector.broadcast %cst_67 : f32 to vector<8x32xf32>
    %109 = arith.addf %108, %107 : vector<8x32xf32>
    %110 = arith.divf %108, %109 : vector<8x32xf32>
    %111 = arith.addf %92, %101 : vector<8x32xf32>
    %112 = arith.negf %111 : vector<8x32xf32>
    %113 = math.exp %112 : vector<8x32xf32>
    %cst_68 = arith.constant 1.000000e+00 : f32
    %114 = vector.broadcast %cst_68 : f32 to vector<8x32xf32>
    %115 = arith.addf %114, %113 : vector<8x32xf32>
    %116 = arith.divf %114, %115 : vector<8x32xf32>
    %117 = arith.mulf %110, %104 : vector<8x32xf32>
    %118 = arith.addf %95, %117 : vector<8x32xf32>
    %119 = math.tanh %118 : vector<8x32xf32>
    %cst_69 = arith.constant 1.000000e+00 : f32
    %120 = vector.broadcast %cst_69 : f32 to vector<8x32xf32>
    %121 = arith.subf %120, %116 : vector<8x32xf32>
    %122 = arith.mulf %121, %119 : vector<8x32xf32>
    %123 = arith.mulf %116, %73 : vector<8x32xf32>
    %124 = arith.addf %122, %123 : vector<8x32xf32>
    %125 = vector.broadcast %26 : vector<1x32xf32> to vector<8x32xf32>
    %126 = arith.mulf %124, %125 : vector<8x32xf32>
    %cst_70 = arith.constant dense<0.000000e+00> : vector<8xf32>
    %127 = vector.multi_reduction <add>, %126, %cst_70 [1] : vector<8x32xf32> to vector<8xf32>
    %128 = vector.shape_cast %127 : vector<8xf32> to vector<8x1xf32>
    %129 = vector.broadcast %27 : vector<1x1xf32> to vector<8x1xf32>
    %130 = arith.addf %128, %129 : vector<8x1xf32>
    %c2_71 = arith.constant 2 : index
    %c0_72 = arith.constant 0 : index
    %c0_73 = arith.constant 0 : index
    %131 = vector.load %arg1[%c2_71, %c0_72, %c0_73] : memref<8x8x16xf32, #tpu.memory_space<vmem>>, vector<1x8x16xf32>
    %132 = vector.shape_cast %131 : vector<1x8x16xf32> to vector<8x16xf32>
    %cst_74 = arith.constant dense<0.000000e+00> : vector<8x32xf32>
    %133 = tpu.matmul %132, %0, %cst_74 {dimension_numbers = #tpu.dot_dimension_numbers<[1], [0], [0], [1], [0, 0, 1, 1], [], []>} : vector<8x16xf32>, vector<16x32xf32>, vector<8x32xf32> -> vector<8x32xf32>
    %134 = vector.broadcast %1 : vector<1x32xf32> to vector<8x32xf32>
    %135 = arith.addf %133, %134 : vector<8x32xf32>
    %cst_75 = arith.constant 0.000000e+00 : f32
    %136 = vector.broadcast %cst_75 : f32 to vector<8x32xf32>
    %137 = arith.maximumf %135, %136 : vector<8x32xf32>
    %cst_76 = arith.constant dense<0.000000e+00> : vector<8x32xf32>
    %138 = tpu.matmul %137, %3, %cst_76 {dimension_numbers = #tpu.dot_dimension_numbers<[1], [0], [0], [1], [0, 0, 1, 1], [], []>} : vector<8x32xf32>, vector<32x32xf32>, vector<8x32xf32> -> vector<8x32xf32>
    %139 = vector.broadcast %9 : vector<1x32xf32> to vector<8x32xf32>
    %140 = arith.addf %138, %139 : vector<8x32xf32>
    %cst_77 = arith.constant dense<0.000000e+00> : vector<8x32xf32>
    %141 = tpu.matmul %137, %5, %cst_77 {dimension_numbers = #tpu.dot_dimension_numbers<[1], [0], [0], [1], [0, 0, 1, 1], [], []>} : vector<8x32xf32>, vector<32x32xf32>, vector<8x32xf32> -> vector<8x32xf32>
    %142 = vector.broadcast %11 : vector<1x32xf32> to vector<8x32xf32>
    %143 = arith.addf %141, %142 : vector<8x32xf32>
    %cst_78 = arith.constant dense<0.000000e+00> : vector<8x32xf32>
    %144 = tpu.matmul %137, %7, %cst_78 {dimension_numbers = #tpu.dot_dimension_numbers<[1], [0], [0], [1], [0, 0, 1, 1], [], []>} : vector<8x32xf32>, vector<32x32xf32>, vector<8x32xf32> -> vector<8x32xf32>
    %145 = vector.broadcast %13 : vector<1x32xf32> to vector<8x32xf32>
    %146 = arith.addf %144, %145 : vector<8x32xf32>
    %cst_79 = arith.constant dense<0.000000e+00> : vector<8x32xf32>
    %147 = tpu.matmul %124, %15, %cst_79 {dimension_numbers = #tpu.dot_dimension_numbers<[1], [0], [0], [1], [0, 0, 1, 1], [], []>} : vector<8x32xf32>, vector<32x32xf32>, vector<8x32xf32> -> vector<8x32xf32>
    %148 = vector.broadcast %21 : vector<1x32xf32> to vector<8x32xf32>
    %149 = arith.addf %147, %148 : vector<8x32xf32>
    %cst_80 = arith.constant dense<0.000000e+00> : vector<8x32xf32>
    %150 = tpu.matmul %124, %17, %cst_80 {dimension_numbers = #tpu.dot_dimension_numbers<[1], [0], [0], [1], [0, 0, 1, 1], [], []>} : vector<8x32xf32>, vector<32x32xf32>, vector<8x32xf32> -> vector<8x32xf32>
    %151 = vector.broadcast %23 : vector<1x32xf32> to vector<8x32xf32>
    %152 = arith.addf %150, %151 : vector<8x32xf32>
    %cst_81 = arith.constant dense<0.000000e+00> : vector<8x32xf32>
    %153 = tpu.matmul %124, %19, %cst_81 {dimension_numbers = #tpu.dot_dimension_numbers<[1], [0], [0], [1], [0, 0, 1, 1], [], []>} : vector<8x32xf32>, vector<32x32xf32>, vector<8x32xf32> -> vector<8x32xf32>
    %154 = vector.broadcast %25 : vector<1x32xf32> to vector<8x32xf32>
    %155 = arith.addf %153, %154 : vector<8x32xf32>
    %156 = arith.addf %140, %149 : vector<8x32xf32>
    %157 = arith.negf %156 : vector<8x32xf32>
    %158 = math.exp %157 : vector<8x32xf32>
    %cst_82 = arith.constant 1.000000e+00 : f32
    %159 = vector.broadcast %cst_82 : f32 to vector<8x32xf32>
    %160 = arith.addf %159, %158 : vector<8x32xf32>
    %161 = arith.divf %159, %160 : vector<8x32xf32>
    %162 = arith.addf %143, %152 : vector<8x32xf32>
    %163 = arith.negf %162 : vector<8x32xf32>
    %164 = math.exp %163 : vector<8x32xf32>
    %cst_83 = arith.constant 1.000000e+00 : f32
    %165 = vector.broadcast %cst_83 : f32 to vector<8x32xf32>
    %166 = arith.addf %165, %164 : vector<8x32xf32>
    %167 = arith.divf %165, %166 : vector<8x32xf32>
    %168 = arith.mulf %161, %155 : vector<8x32xf32>
    %169 = arith.addf %146, %168 : vector<8x32xf32>
    %170 = math.tanh %169 : vector<8x32xf32>
    %cst_84 = arith.constant 1.000000e+00 : f32
    %171 = vector.broadcast %cst_84 : f32 to vector<8x32xf32>
    %172 = arith.subf %171, %167 : vector<8x32xf32>
    %173 = arith.mulf %172, %170 : vector<8x32xf32>
    %174 = arith.mulf %167, %124 : vector<8x32xf32>
    %175 = arith.addf %173, %174 : vector<8x32xf32>
    %176 = vector.broadcast %26 : vector<1x32xf32> to vector<8x32xf32>
    %177 = arith.mulf %175, %176 : vector<8x32xf32>
    %cst_85 = arith.constant dense<0.000000e+00> : vector<8xf32>
    %178 = vector.multi_reduction <add>, %177, %cst_85 [1] : vector<8x32xf32> to vector<8xf32>
    %179 = vector.shape_cast %178 : vector<8xf32> to vector<8x1xf32>
    %180 = vector.broadcast %27 : vector<1x1xf32> to vector<8x1xf32>
    %181 = arith.addf %179, %180 : vector<8x1xf32>
    %c3 = arith.constant 3 : index
    %c0_86 = arith.constant 0 : index
    %c0_87 = arith.constant 0 : index
    %182 = vector.load %arg1[%c3, %c0_86, %c0_87] : memref<8x8x16xf32, #tpu.memory_space<vmem>>, vector<1x8x16xf32>
    %183 = vector.shape_cast %182 : vector<1x8x16xf32> to vector<8x16xf32>
    %cst_88 = arith.constant dense<0.000000e+00> : vector<8x32xf32>
    %184 = tpu.matmul %183, %0, %cst_88 {dimension_numbers = #tpu.dot_dimension_numbers<[1], [0], [0], [1], [0, 0, 1, 1], [], []>} : vector<8x16xf32>, vector<16x32xf32>, vector<8x32xf32> -> vector<8x32xf32>
    %185 = vector.broadcast %1 : vector<1x32xf32> to vector<8x32xf32>
    %186 = arith.addf %184, %185 : vector<8x32xf32>
    %cst_89 = arith.constant 0.000000e+00 : f32
    %187 = vector.broadcast %cst_89 : f32 to vector<8x32xf32>
    %188 = arith.maximumf %186, %187 : vector<8x32xf32>
    %cst_90 = arith.constant dense<0.000000e+00> : vector<8x32xf32>
    %189 = tpu.matmul %188, %3, %cst_90 {dimension_numbers = #tpu.dot_dimension_numbers<[1], [0], [0], [1], [0, 0, 1, 1], [], []>} : vector<8x32xf32>, vector<32x32xf32>, vector<8x32xf32> -> vector<8x32xf32>
    %190 = vector.broadcast %9 : vector<1x32xf32> to vector<8x32xf32>
    %191 = arith.addf %189, %190 : vector<8x32xf32>
    %cst_91 = arith.constant dense<0.000000e+00> : vector<8x32xf32>
    %192 = tpu.matmul %188, %5, %cst_91 {dimension_numbers = #tpu.dot_dimension_numbers<[1], [0], [0], [1], [0, 0, 1, 1], [], []>} : vector<8x32xf32>, vector<32x32xf32>, vector<8x32xf32> -> vector<8x32xf32>
    %193 = vector.broadcast %11 : vector<1x32xf32> to vector<8x32xf32>
    %194 = arith.addf %192, %193 : vector<8x32xf32>
    %cst_92 = arith.constant dense<0.000000e+00> : vector<8x32xf32>
    %195 = tpu.matmul %188, %7, %cst_92 {dimension_numbers = #tpu.dot_dimension_numbers<[1], [0], [0], [1], [0, 0, 1, 1], [], []>} : vector<8x32xf32>, vector<32x32xf32>, vector<8x32xf32> -> vector<8x32xf32>
    %196 = vector.broadcast %13 : vector<1x32xf32> to vector<8x32xf32>
    %197 = arith.addf %195, %196 : vector<8x32xf32>
    %cst_93 = arith.constant dense<0.000000e+00> : vector<8x32xf32>
    %198 = tpu.matmul %175, %15, %cst_93 {dimension_numbers = #tpu.dot_dimension_numbers<[1], [0], [0], [1], [0, 0, 1, 1], [], []>} : vector<8x32xf32>, vector<32x32xf32>, vector<8x32xf32> -> vector<8x32xf32>
    %199 = vector.broadcast %21 : vector<1x32xf32> to vector<8x32xf32>
    %200 = arith.addf %198, %199 : vector<8x32xf32>
    %cst_94 = arith.constant dense<0.000000e+00> : vector<8x32xf32>
    %201 = tpu.matmul %175, %17, %cst_94 {dimension_numbers = #tpu.dot_dimension_numbers<[1], [0], [0], [1], [0, 0, 1, 1], [], []>} : vector<8x32xf32>, vector<32x32xf32>, vector<8x32xf32> -> vector<8x32xf32>
    %202 = vector.broadcast %23 : vector<1x32xf32> to vector<8x32xf32>
    %203 = arith.addf %201, %202 : vector<8x32xf32>
    %cst_95 = arith.constant dense<0.000000e+00> : vector<8x32xf32>
    %204 = tpu.matmul %175, %19, %cst_95 {dimension_numbers = #tpu.dot_dimension_numbers<[1], [0], [0], [1], [0, 0, 1, 1], [], []>} : vector<8x32xf32>, vector<32x32xf32>, vector<8x32xf32> -> vector<8x32xf32>
    %205 = vector.broadcast %25 : vector<1x32xf32> to vector<8x32xf32>
    %206 = arith.addf %204, %205 : vector<8x32xf32>
    %207 = arith.addf %191, %200 : vector<8x32xf32>
    %208 = arith.negf %207 : vector<8x32xf32>
    %209 = math.exp %208 : vector<8x32xf32>
    %cst_96 = arith.constant 1.000000e+00 : f32
    %210 = vector.broadcast %cst_96 : f32 to vector<8x32xf32>
    %211 = arith.addf %210, %209 : vector<8x32xf32>
    %212 = arith.divf %210, %211 : vector<8x32xf32>
    %213 = arith.addf %194, %203 : vector<8x32xf32>
    %214 = arith.negf %213 : vector<8x32xf32>
    %215 = math.exp %214 : vector<8x32xf32>
    %cst_97 = arith.constant 1.000000e+00 : f32
    %216 = vector.broadcast %cst_97 : f32 to vector<8x32xf32>
    %217 = arith.addf %216, %215 : vector<8x32xf32>
    %218 = arith.divf %216, %217 : vector<8x32xf32>
    %219 = arith.mulf %212, %206 : vector<8x32xf32>
    %220 = arith.addf %197, %219 : vector<8x32xf32>
    %221 = math.tanh %220 : vector<8x32xf32>
    %cst_98 = arith.constant 1.000000e+00 : f32
    %222 = vector.broadcast %cst_98 : f32 to vector<8x32xf32>
    %223 = arith.subf %222, %218 : vector<8x32xf32>
    %224 = arith.mulf %223, %221 : vector<8x32xf32>
    %225 = arith.mulf %218, %175 : vector<8x32xf32>
    %226 = arith.addf %224, %225 : vector<8x32xf32>
    %227 = vector.broadcast %26 : vector<1x32xf32> to vector<8x32xf32>
    %228 = arith.mulf %226, %227 : vector<8x32xf32>
    %cst_99 = arith.constant dense<0.000000e+00> : vector<8xf32>
    %229 = vector.multi_reduction <add>, %228, %cst_99 [1] : vector<8x32xf32> to vector<8xf32>
    %230 = vector.shape_cast %229 : vector<8xf32> to vector<8x1xf32>
    %231 = vector.broadcast %27 : vector<1x1xf32> to vector<8x1xf32>
    %232 = arith.addf %230, %231 : vector<8x1xf32>
    %c4 = arith.constant 4 : index
    %c0_100 = arith.constant 0 : index
    %c0_101 = arith.constant 0 : index
    %233 = vector.load %arg1[%c4, %c0_100, %c0_101] : memref<8x8x16xf32, #tpu.memory_space<vmem>>, vector<1x8x16xf32>
    %234 = vector.shape_cast %233 : vector<1x8x16xf32> to vector<8x16xf32>
    %cst_102 = arith.constant dense<0.000000e+00> : vector<8x32xf32>
    %235 = tpu.matmul %234, %0, %cst_102 {dimension_numbers = #tpu.dot_dimension_numbers<[1], [0], [0], [1], [0, 0, 1, 1], [], []>} : vector<8x16xf32>, vector<16x32xf32>, vector<8x32xf32> -> vector<8x32xf32>
    %236 = vector.broadcast %1 : vector<1x32xf32> to vector<8x32xf32>
    %237 = arith.addf %235, %236 : vector<8x32xf32>
    %cst_103 = arith.constant 0.000000e+00 : f32
    %238 = vector.broadcast %cst_103 : f32 to vector<8x32xf32>
    %239 = arith.maximumf %237, %238 : vector<8x32xf32>
    %cst_104 = arith.constant dense<0.000000e+00> : vector<8x32xf32>
    %240 = tpu.matmul %239, %3, %cst_104 {dimension_numbers = #tpu.dot_dimension_numbers<[1], [0], [0], [1], [0, 0, 1, 1], [], []>} : vector<8x32xf32>, vector<32x32xf32>, vector<8x32xf32> -> vector<8x32xf32>
    %241 = vector.broadcast %9 : vector<1x32xf32> to vector<8x32xf32>
    %242 = arith.addf %240, %241 : vector<8x32xf32>
    %cst_105 = arith.constant dense<0.000000e+00> : vector<8x32xf32>
    %243 = tpu.matmul %239, %5, %cst_105 {dimension_numbers = #tpu.dot_dimension_numbers<[1], [0], [0], [1], [0, 0, 1, 1], [], []>} : vector<8x32xf32>, vector<32x32xf32>, vector<8x32xf32> -> vector<8x32xf32>
    %244 = vector.broadcast %11 : vector<1x32xf32> to vector<8x32xf32>
    %245 = arith.addf %243, %244 : vector<8x32xf32>
    %cst_106 = arith.constant dense<0.000000e+00> : vector<8x32xf32>
    %246 = tpu.matmul %239, %7, %cst_106 {dimension_numbers = #tpu.dot_dimension_numbers<[1], [0], [0], [1], [0, 0, 1, 1], [], []>} : vector<8x32xf32>, vector<32x32xf32>, vector<8x32xf32> -> vector<8x32xf32>
    %247 = vector.broadcast %13 : vector<1x32xf32> to vector<8x32xf32>
    %248 = arith.addf %246, %247 : vector<8x32xf32>
    %cst_107 = arith.constant dense<0.000000e+00> : vector<8x32xf32>
    %249 = tpu.matmul %226, %15, %cst_107 {dimension_numbers = #tpu.dot_dimension_numbers<[1], [0], [0], [1], [0, 0, 1, 1], [], []>} : vector<8x32xf32>, vector<32x32xf32>, vector<8x32xf32> -> vector<8x32xf32>
    %250 = vector.broadcast %21 : vector<1x32xf32> to vector<8x32xf32>
    %251 = arith.addf %249, %250 : vector<8x32xf32>
    %cst_108 = arith.constant dense<0.000000e+00> : vector<8x32xf32>
    %252 = tpu.matmul %226, %17, %cst_108 {dimension_numbers = #tpu.dot_dimension_numbers<[1], [0], [0], [1], [0, 0, 1, 1], [], []>} : vector<8x32xf32>, vector<32x32xf32>, vector<8x32xf32> -> vector<8x32xf32>
    %253 = vector.broadcast %23 : vector<1x32xf32> to vector<8x32xf32>
    %254 = arith.addf %252, %253 : vector<8x32xf32>
    %cst_109 = arith.constant dense<0.000000e+00> : vector<8x32xf32>
    %255 = tpu.matmul %226, %19, %cst_109 {dimension_numbers = #tpu.dot_dimension_numbers<[1], [0], [0], [1], [0, 0, 1, 1], [], []>} : vector<8x32xf32>, vector<32x32xf32>, vector<8x32xf32> -> vector<8x32xf32>
    %256 = vector.broadcast %25 : vector<1x32xf32> to vector<8x32xf32>
    %257 = arith.addf %255, %256 : vector<8x32xf32>
    %258 = arith.addf %242, %251 : vector<8x32xf32>
    %259 = arith.negf %258 : vector<8x32xf32>
    %260 = math.exp %259 : vector<8x32xf32>
    %cst_110 = arith.constant 1.000000e+00 : f32
    %261 = vector.broadcast %cst_110 : f32 to vector<8x32xf32>
    %262 = arith.addf %261, %260 : vector<8x32xf32>
    %263 = arith.divf %261, %262 : vector<8x32xf32>
    %264 = arith.addf %245, %254 : vector<8x32xf32>
    %265 = arith.negf %264 : vector<8x32xf32>
    %266 = math.exp %265 : vector<8x32xf32>
    %cst_111 = arith.constant 1.000000e+00 : f32
    %267 = vector.broadcast %cst_111 : f32 to vector<8x32xf32>
    %268 = arith.addf %267, %266 : vector<8x32xf32>
    %269 = arith.divf %267, %268 : vector<8x32xf32>
    %270 = arith.mulf %263, %257 : vector<8x32xf32>
    %271 = arith.addf %248, %270 : vector<8x32xf32>
    %272 = math.tanh %271 : vector<8x32xf32>
    %cst_112 = arith.constant 1.000000e+00 : f32
    %273 = vector.broadcast %cst_112 : f32 to vector<8x32xf32>
    %274 = arith.subf %273, %269 : vector<8x32xf32>
    %275 = arith.mulf %274, %272 : vector<8x32xf32>
    %276 = arith.mulf %269, %226 : vector<8x32xf32>
    %277 = arith.addf %275, %276 : vector<8x32xf32>
    %278 = vector.broadcast %26 : vector<1x32xf32> to vector<8x32xf32>
    %279 = arith.mulf %277, %278 : vector<8x32xf32>
    %cst_113 = arith.constant dense<0.000000e+00> : vector<8xf32>
    %280 = vector.multi_reduction <add>, %279, %cst_113 [1] : vector<8x32xf32> to vector<8xf32>
    %281 = vector.shape_cast %280 : vector<8xf32> to vector<8x1xf32>
    %282 = vector.broadcast %27 : vector<1x1xf32> to vector<8x1xf32>
    %283 = arith.addf %281, %282 : vector<8x1xf32>
    %c5 = arith.constant 5 : index
    %c0_114 = arith.constant 0 : index
    %c0_115 = arith.constant 0 : index
    %284 = vector.load %arg1[%c5, %c0_114, %c0_115] : memref<8x8x16xf32, #tpu.memory_space<vmem>>, vector<1x8x16xf32>
    %285 = vector.shape_cast %284 : vector<1x8x16xf32> to vector<8x16xf32>
    %cst_116 = arith.constant dense<0.000000e+00> : vector<8x32xf32>
    %286 = tpu.matmul %285, %0, %cst_116 {dimension_numbers = #tpu.dot_dimension_numbers<[1], [0], [0], [1], [0, 0, 1, 1], [], []>} : vector<8x16xf32>, vector<16x32xf32>, vector<8x32xf32> -> vector<8x32xf32>
    %287 = vector.broadcast %1 : vector<1x32xf32> to vector<8x32xf32>
    %288 = arith.addf %286, %287 : vector<8x32xf32>
    %cst_117 = arith.constant 0.000000e+00 : f32
    %289 = vector.broadcast %cst_117 : f32 to vector<8x32xf32>
    %290 = arith.maximumf %288, %289 : vector<8x32xf32>
    %cst_118 = arith.constant dense<0.000000e+00> : vector<8x32xf32>
    %291 = tpu.matmul %290, %3, %cst_118 {dimension_numbers = #tpu.dot_dimension_numbers<[1], [0], [0], [1], [0, 0, 1, 1], [], []>} : vector<8x32xf32>, vector<32x32xf32>, vector<8x32xf32> -> vector<8x32xf32>
    %292 = vector.broadcast %9 : vector<1x32xf32> to vector<8x32xf32>
    %293 = arith.addf %291, %292 : vector<8x32xf32>
    %cst_119 = arith.constant dense<0.000000e+00> : vector<8x32xf32>
    %294 = tpu.matmul %290, %5, %cst_119 {dimension_numbers = #tpu.dot_dimension_numbers<[1], [0], [0], [1], [0, 0, 1, 1], [], []>} : vector<8x32xf32>, vector<32x32xf32>, vector<8x32xf32> -> vector<8x32xf32>
    %295 = vector.broadcast %11 : vector<1x32xf32> to vector<8x32xf32>
    %296 = arith.addf %294, %295 : vector<8x32xf32>
    %cst_120 = arith.constant dense<0.000000e+00> : vector<8x32xf32>
    %297 = tpu.matmul %290, %7, %cst_120 {dimension_numbers = #tpu.dot_dimension_numbers<[1], [0], [0], [1], [0, 0, 1, 1], [], []>} : vector<8x32xf32>, vector<32x32xf32>, vector<8x32xf32> -> vector<8x32xf32>
    %298 = vector.broadcast %13 : vector<1x32xf32> to vector<8x32xf32>
    %299 = arith.addf %297, %298 : vector<8x32xf32>
    %cst_121 = arith.constant dense<0.000000e+00> : vector<8x32xf32>
    %300 = tpu.matmul %277, %15, %cst_121 {dimension_numbers = #tpu.dot_dimension_numbers<[1], [0], [0], [1], [0, 0, 1, 1], [], []>} : vector<8x32xf32>, vector<32x32xf32>, vector<8x32xf32> -> vector<8x32xf32>
    %301 = vector.broadcast %21 : vector<1x32xf32> to vector<8x32xf32>
    %302 = arith.addf %300, %301 : vector<8x32xf32>
    %cst_122 = arith.constant dense<0.000000e+00> : vector<8x32xf32>
    %303 = tpu.matmul %277, %17, %cst_122 {dimension_numbers = #tpu.dot_dimension_numbers<[1], [0], [0], [1], [0, 0, 1, 1], [], []>} : vector<8x32xf32>, vector<32x32xf32>, vector<8x32xf32> -> vector<8x32xf32>
    %304 = vector.broadcast %23 : vector<1x32xf32> to vector<8x32xf32>
    %305 = arith.addf %303, %304 : vector<8x32xf32>
    %cst_123 = arith.constant dense<0.000000e+00> : vector<8x32xf32>
    %306 = tpu.matmul %277, %19, %cst_123 {dimension_numbers = #tpu.dot_dimension_numbers<[1], [0], [0], [1], [0, 0, 1, 1], [], []>} : vector<8x32xf32>, vector<32x32xf32>, vector<8x32xf32> -> vector<8x32xf32>
    %307 = vector.broadcast %25 : vector<1x32xf32> to vector<8x32xf32>
    %308 = arith.addf %306, %307 : vector<8x32xf32>
    %309 = arith.addf %293, %302 : vector<8x32xf32>
    %310 = arith.negf %309 : vector<8x32xf32>
    %311 = math.exp %310 : vector<8x32xf32>
    %cst_124 = arith.constant 1.000000e+00 : f32
    %312 = vector.broadcast %cst_124 : f32 to vector<8x32xf32>
    %313 = arith.addf %312, %311 : vector<8x32xf32>
    %314 = arith.divf %312, %313 : vector<8x32xf32>
    %315 = arith.addf %296, %305 : vector<8x32xf32>
    %316 = arith.negf %315 : vector<8x32xf32>
    %317 = math.exp %316 : vector<8x32xf32>
    %cst_125 = arith.constant 1.000000e+00 : f32
    %318 = vector.broadcast %cst_125 : f32 to vector<8x32xf32>
    %319 = arith.addf %318, %317 : vector<8x32xf32>
    %320 = arith.divf %318, %319 : vector<8x32xf32>
    %321 = arith.mulf %314, %308 : vector<8x32xf32>
    %322 = arith.addf %299, %321 : vector<8x32xf32>
    %323 = math.tanh %322 : vector<8x32xf32>
    %cst_126 = arith.constant 1.000000e+00 : f32
    %324 = vector.broadcast %cst_126 : f32 to vector<8x32xf32>
    %325 = arith.subf %324, %320 : vector<8x32xf32>
    %326 = arith.mulf %325, %323 : vector<8x32xf32>
    %327 = arith.mulf %320, %277 : vector<8x32xf32>
    %328 = arith.addf %326, %327 : vector<8x32xf32>
    %329 = vector.broadcast %26 : vector<1x32xf32> to vector<8x32xf32>
    %330 = arith.mulf %328, %329 : vector<8x32xf32>
    %cst_127 = arith.constant dense<0.000000e+00> : vector<8xf32>
    %331 = vector.multi_reduction <add>, %330, %cst_127 [1] : vector<8x32xf32> to vector<8xf32>
    %332 = vector.shape_cast %331 : vector<8xf32> to vector<8x1xf32>
    %333 = vector.broadcast %27 : vector<1x1xf32> to vector<8x1xf32>
    %334 = arith.addf %332, %333 : vector<8x1xf32>
    %c6 = arith.constant 6 : index
    %c0_128 = arith.constant 0 : index
    %c0_129 = arith.constant 0 : index
    %335 = vector.load %arg1[%c6, %c0_128, %c0_129] : memref<8x8x16xf32, #tpu.memory_space<vmem>>, vector<1x8x16xf32>
    %336 = vector.shape_cast %335 : vector<1x8x16xf32> to vector<8x16xf32>
    %cst_130 = arith.constant dense<0.000000e+00> : vector<8x32xf32>
    %337 = tpu.matmul %336, %0, %cst_130 {dimension_numbers = #tpu.dot_dimension_numbers<[1], [0], [0], [1], [0, 0, 1, 1], [], []>} : vector<8x16xf32>, vector<16x32xf32>, vector<8x32xf32> -> vector<8x32xf32>
    %338 = vector.broadcast %1 : vector<1x32xf32> to vector<8x32xf32>
    %339 = arith.addf %337, %338 : vector<8x32xf32>
    %cst_131 = arith.constant 0.000000e+00 : f32
    %340 = vector.broadcast %cst_131 : f32 to vector<8x32xf32>
    %341 = arith.maximumf %339, %340 : vector<8x32xf32>
    %cst_132 = arith.constant dense<0.000000e+00> : vector<8x32xf32>
    %342 = tpu.matmul %341, %3, %cst_132 {dimension_numbers = #tpu.dot_dimension_numbers<[1], [0], [0], [1], [0, 0, 1, 1], [], []>} : vector<8x32xf32>, vector<32x32xf32>, vector<8x32xf32> -> vector<8x32xf32>
    %343 = vector.broadcast %9 : vector<1x32xf32> to vector<8x32xf32>
    %344 = arith.addf %342, %343 : vector<8x32xf32>
    %cst_133 = arith.constant dense<0.000000e+00> : vector<8x32xf32>
    %345 = tpu.matmul %341, %5, %cst_133 {dimension_numbers = #tpu.dot_dimension_numbers<[1], [0], [0], [1], [0, 0, 1, 1], [], []>} : vector<8x32xf32>, vector<32x32xf32>, vector<8x32xf32> -> vector<8x32xf32>
    %346 = vector.broadcast %11 : vector<1x32xf32> to vector<8x32xf32>
    %347 = arith.addf %345, %346 : vector<8x32xf32>
    %cst_134 = arith.constant dense<0.000000e+00> : vector<8x32xf32>
    %348 = tpu.matmul %341, %7, %cst_134 {dimension_numbers = #tpu.dot_dimension_numbers<[1], [0], [0], [1], [0, 0, 1, 1], [], []>} : vector<8x32xf32>, vector<32x32xf32>, vector<8x32xf32> -> vector<8x32xf32>
    %349 = vector.broadcast %13 : vector<1x32xf32> to vector<8x32xf32>
    %350 = arith.addf %348, %349 : vector<8x32xf32>
    %cst_135 = arith.constant dense<0.000000e+00> : vector<8x32xf32>
    %351 = tpu.matmul %328, %15, %cst_135 {dimension_numbers = #tpu.dot_dimension_numbers<[1], [0], [0], [1], [0, 0, 1, 1], [], []>} : vector<8x32xf32>, vector<32x32xf32>, vector<8x32xf32> -> vector<8x32xf32>
    %352 = vector.broadcast %21 : vector<1x32xf32> to vector<8x32xf32>
    %353 = arith.addf %351, %352 : vector<8x32xf32>
    %cst_136 = arith.constant dense<0.000000e+00> : vector<8x32xf32>
    %354 = tpu.matmul %328, %17, %cst_136 {dimension_numbers = #tpu.dot_dimension_numbers<[1], [0], [0], [1], [0, 0, 1, 1], [], []>} : vector<8x32xf32>, vector<32x32xf32>, vector<8x32xf32> -> vector<8x32xf32>
    %355 = vector.broadcast %23 : vector<1x32xf32> to vector<8x32xf32>
    %356 = arith.addf %354, %355 : vector<8x32xf32>
    %cst_137 = arith.constant dense<0.000000e+00> : vector<8x32xf32>
    %357 = tpu.matmul %328, %19, %cst_137 {dimension_numbers = #tpu.dot_dimension_numbers<[1], [0], [0], [1], [0, 0, 1, 1], [], []>} : vector<8x32xf32>, vector<32x32xf32>, vector<8x32xf32> -> vector<8x32xf32>
    %358 = vector.broadcast %25 : vector<1x32xf32> to vector<8x32xf32>
    %359 = arith.addf %357, %358 : vector<8x32xf32>
    %360 = arith.addf %344, %353 : vector<8x32xf32>
    %361 = arith.negf %360 : vector<8x32xf32>
    %362 = math.exp %361 : vector<8x32xf32>
    %cst_138 = arith.constant 1.000000e+00 : f32
    %363 = vector.broadcast %cst_138 : f32 to vector<8x32xf32>
    %364 = arith.addf %363, %362 : vector<8x32xf32>
    %365 = arith.divf %363, %364 : vector<8x32xf32>
    %366 = arith.addf %347, %356 : vector<8x32xf32>
    %367 = arith.negf %366 : vector<8x32xf32>
    %368 = math.exp %367 : vector<8x32xf32>
    %cst_139 = arith.constant 1.000000e+00 : f32
    %369 = vector.broadcast %cst_139 : f32 to vector<8x32xf32>
    %370 = arith.addf %369, %368 : vector<8x32xf32>
    %371 = arith.divf %369, %370 : vector<8x32xf32>
    %372 = arith.mulf %365, %359 : vector<8x32xf32>
    %373 = arith.addf %350, %372 : vector<8x32xf32>
    %374 = math.tanh %373 : vector<8x32xf32>
    %cst_140 = arith.constant 1.000000e+00 : f32
    %375 = vector.broadcast %cst_140 : f32 to vector<8x32xf32>
    %376 = arith.subf %375, %371 : vector<8x32xf32>
    %377 = arith.mulf %376, %374 : vector<8x32xf32>
    %378 = arith.mulf %371, %328 : vector<8x32xf32>
    %379 = arith.addf %377, %378 : vector<8x32xf32>
    %380 = vector.broadcast %26 : vector<1x32xf32> to vector<8x32xf32>
    %381 = arith.mulf %379, %380 : vector<8x32xf32>
    %cst_141 = arith.constant dense<0.000000e+00> : vector<8xf32>
    %382 = vector.multi_reduction <add>, %381, %cst_141 [1] : vector<8x32xf32> to vector<8xf32>
    %383 = vector.shape_cast %382 : vector<8xf32> to vector<8x1xf32>
    %384 = vector.broadcast %27 : vector<1x1xf32> to vector<8x1xf32>
    %385 = arith.addf %383, %384 : vector<8x1xf32>
    %c7 = arith.constant 7 : index
    %c0_142 = arith.constant 0 : index
    %c0_143 = arith.constant 0 : index
    %386 = vector.load %arg1[%c7, %c0_142, %c0_143] : memref<8x8x16xf32, #tpu.memory_space<vmem>>, vector<1x8x16xf32>
    %387 = vector.shape_cast %386 : vector<1x8x16xf32> to vector<8x16xf32>
    %cst_144 = arith.constant dense<0.000000e+00> : vector<8x32xf32>
    %388 = tpu.matmul %387, %0, %cst_144 {dimension_numbers = #tpu.dot_dimension_numbers<[1], [0], [0], [1], [0, 0, 1, 1], [], []>} : vector<8x16xf32>, vector<16x32xf32>, vector<8x32xf32> -> vector<8x32xf32>
    %389 = vector.broadcast %1 : vector<1x32xf32> to vector<8x32xf32>
    %390 = arith.addf %388, %389 : vector<8x32xf32>
    %cst_145 = arith.constant 0.000000e+00 : f32
    %391 = vector.broadcast %cst_145 : f32 to vector<8x32xf32>
    %392 = arith.maximumf %390, %391 : vector<8x32xf32>
    %cst_146 = arith.constant dense<0.000000e+00> : vector<8x32xf32>
    %393 = tpu.matmul %392, %3, %cst_146 {dimension_numbers = #tpu.dot_dimension_numbers<[1], [0], [0], [1], [0, 0, 1, 1], [], []>} : vector<8x32xf32>, vector<32x32xf32>, vector<8x32xf32> -> vector<8x32xf32>
    %394 = vector.broadcast %9 : vector<1x32xf32> to vector<8x32xf32>
    %395 = arith.addf %393, %394 : vector<8x32xf32>
    %cst_147 = arith.constant dense<0.000000e+00> : vector<8x32xf32>
    %396 = tpu.matmul %392, %5, %cst_147 {dimension_numbers = #tpu.dot_dimension_numbers<[1], [0], [0], [1], [0, 0, 1, 1], [], []>} : vector<8x32xf32>, vector<32x32xf32>, vector<8x32xf32> -> vector<8x32xf32>
    %397 = vector.broadcast %11 : vector<1x32xf32> to vector<8x32xf32>
    %398 = arith.addf %396, %397 : vector<8x32xf32>
    %cst_148 = arith.constant dense<0.000000e+00> : vector<8x32xf32>
    %399 = tpu.matmul %392, %7, %cst_148 {dimension_numbers = #tpu.dot_dimension_numbers<[1], [0], [0], [1], [0, 0, 1, 1], [], []>} : vector<8x32xf32>, vector<32x32xf32>, vector<8x32xf32> -> vector<8x32xf32>
    %400 = vector.broadcast %13 : vector<1x32xf32> to vector<8x32xf32>
    %401 = arith.addf %399, %400 : vector<8x32xf32>
    %cst_149 = arith.constant dense<0.000000e+00> : vector<8x32xf32>
    %402 = tpu.matmul %379, %15, %cst_149 {dimension_numbers = #tpu.dot_dimension_numbers<[1], [0], [0], [1], [0, 0, 1, 1], [], []>} : vector<8x32xf32>, vector<32x32xf32>, vector<8x32xf32> -> vector<8x32xf32>
    %403 = vector.broadcast %21 : vector<1x32xf32> to vector<8x32xf32>
    %404 = arith.addf %402, %403 : vector<8x32xf32>
    %cst_150 = arith.constant dense<0.000000e+00> : vector<8x32xf32>
    %405 = tpu.matmul %379, %17, %cst_150 {dimension_numbers = #tpu.dot_dimension_numbers<[1], [0], [0], [1], [0, 0, 1, 1], [], []>} : vector<8x32xf32>, vector<32x32xf32>, vector<8x32xf32> -> vector<8x32xf32>
    %406 = vector.broadcast %23 : vector<1x32xf32> to vector<8x32xf32>
    %407 = arith.addf %405, %406 : vector<8x32xf32>
    %cst_151 = arith.constant dense<0.000000e+00> : vector<8x32xf32>
    %408 = tpu.matmul %379, %19, %cst_151 {dimension_numbers = #tpu.dot_dimension_numbers<[1], [0], [0], [1], [0, 0, 1, 1], [], []>} : vector<8x32xf32>, vector<32x32xf32>, vector<8x32xf32> -> vector<8x32xf32>
    %409 = vector.broadcast %25 : vector<1x32xf32> to vector<8x32xf32>
    %410 = arith.addf %408, %409 : vector<8x32xf32>
    %411 = arith.addf %395, %404 : vector<8x32xf32>
    %412 = arith.negf %411 : vector<8x32xf32>
    %413 = math.exp %412 : vector<8x32xf32>
    %cst_152 = arith.constant 1.000000e+00 : f32
    %414 = vector.broadcast %cst_152 : f32 to vector<8x32xf32>
    %415 = arith.addf %414, %413 : vector<8x32xf32>
    %416 = arith.divf %414, %415 : vector<8x32xf32>
    %417 = arith.addf %398, %407 : vector<8x32xf32>
    %418 = arith.negf %417 : vector<8x32xf32>
    %419 = math.exp %418 : vector<8x32xf32>
    %cst_153 = arith.constant 1.000000e+00 : f32
    %420 = vector.broadcast %cst_153 : f32 to vector<8x32xf32>
    %421 = arith.addf %420, %419 : vector<8x32xf32>
    %422 = arith.divf %420, %421 : vector<8x32xf32>
    %423 = arith.mulf %416, %410 : vector<8x32xf32>
    %424 = arith.addf %401, %423 : vector<8x32xf32>
    %425 = math.tanh %424 : vector<8x32xf32>
    %cst_154 = arith.constant 1.000000e+00 : f32
    %426 = vector.broadcast %cst_154 : f32 to vector<8x32xf32>
    %427 = arith.subf %426, %422 : vector<8x32xf32>
    %428 = arith.mulf %427, %425 : vector<8x32xf32>
    %429 = arith.mulf %422, %379 : vector<8x32xf32>
    %430 = arith.addf %428, %429 : vector<8x32xf32>
    %431 = vector.broadcast %26 : vector<1x32xf32> to vector<8x32xf32>
    %432 = arith.mulf %430, %431 : vector<8x32xf32>
    %cst_155 = arith.constant dense<0.000000e+00> : vector<8xf32>
    %433 = vector.multi_reduction <add>, %432, %cst_155 [1] : vector<8x32xf32> to vector<8xf32>
    %434 = vector.shape_cast %433 : vector<8xf32> to vector<8x1xf32>
    %435 = vector.broadcast %27 : vector<1x1xf32> to vector<8x1xf32>
    %436 = arith.addf %434, %435 : vector<8x1xf32>
    %437 = arith.maximumf %79, %130 : vector<8x1xf32>
    %438 = arith.maximumf %437, %181 : vector<8x1xf32>
    %439 = arith.maximumf %438, %232 : vector<8x1xf32>
    %440 = arith.maximumf %439, %283 : vector<8x1xf32>
    %441 = arith.maximumf %440, %334 : vector<8x1xf32>
    %442 = arith.maximumf %441, %385 : vector<8x1xf32>
    %443 = arith.maximumf %442, %436 : vector<8x1xf32>
    %444 = arith.subf %79, %443 : vector<8x1xf32>
    %445 = math.exp %444 : vector<8x1xf32>
    %446 = arith.subf %130, %443 : vector<8x1xf32>
    %447 = math.exp %446 : vector<8x1xf32>
    %448 = arith.subf %181, %443 : vector<8x1xf32>
    %449 = math.exp %448 : vector<8x1xf32>
    %450 = arith.subf %232, %443 : vector<8x1xf32>
    %451 = math.exp %450 : vector<8x1xf32>
    %452 = arith.subf %283, %443 : vector<8x1xf32>
    %453 = math.exp %452 : vector<8x1xf32>
    %454 = arith.subf %334, %443 : vector<8x1xf32>
    %455 = math.exp %454 : vector<8x1xf32>
    %456 = arith.subf %385, %443 : vector<8x1xf32>
    %457 = math.exp %456 : vector<8x1xf32>
    %458 = arith.subf %436, %443 : vector<8x1xf32>
    %459 = math.exp %458 : vector<8x1xf32>
    %460 = arith.addf %445, %447 : vector<8x1xf32>
    %461 = arith.addf %460, %449 : vector<8x1xf32>
    %462 = arith.addf %461, %451 : vector<8x1xf32>
    %463 = arith.addf %462, %453 : vector<8x1xf32>
    %464 = arith.addf %463, %455 : vector<8x1xf32>
    %465 = arith.addf %464, %457 : vector<8x1xf32>
    %466 = arith.addf %465, %459 : vector<8x1xf32>
    %cst_156 = arith.constant 0.000000e+00 : f32
    %467 = vector.broadcast %cst_156 : f32 to vector<8x32xf32>
    %c0_157 = arith.constant 0 : index
    %c0_158 = arith.constant 0 : index
    %c0_159 = arith.constant 0 : index
    %468 = vector.load %arg2[%c0_157, %c0_158, %c0_159] : memref<8x8x1xf32, #tpu.memory_space<vmem>>, vector<1x8x1xf32>
    %469 = vector.shape_cast %468 : vector<1x8x1xf32> to vector<8x1xf32>
    %470 = arith.mulf %445, %469 : vector<8x1xf32>
    %471 = vector.broadcast %470 : vector<8x1xf32> to vector<8x32xf32>
    %472 = arith.mulf %73, %471 : vector<8x32xf32>
    %473 = arith.addf %467, %472 : vector<8x32xf32>
    %c1_160 = arith.constant 1 : index
    %c0_161 = arith.constant 0 : index
    %c0_162 = arith.constant 0 : index
    %474 = vector.load %arg2[%c1_160, %c0_161, %c0_162] : memref<8x8x1xf32, #tpu.memory_space<vmem>>, vector<1x8x1xf32>
    %475 = vector.shape_cast %474 : vector<1x8x1xf32> to vector<8x1xf32>
    %476 = arith.mulf %447, %475 : vector<8x1xf32>
    %477 = vector.broadcast %476 : vector<8x1xf32> to vector<8x32xf32>
    %478 = arith.mulf %124, %477 : vector<8x32xf32>
    %479 = arith.addf %473, %478 : vector<8x32xf32>
    %c2_163 = arith.constant 2 : index
    %c0_164 = arith.constant 0 : index
    %c0_165 = arith.constant 0 : index
    %480 = vector.load %arg2[%c2_163, %c0_164, %c0_165] : memref<8x8x1xf32, #tpu.memory_space<vmem>>, vector<1x8x1xf32>
    %481 = vector.shape_cast %480 : vector<1x8x1xf32> to vector<8x1xf32>
    %482 = arith.mulf %449, %481 : vector<8x1xf32>
    %483 = vector.broadcast %482 : vector<8x1xf32> to vector<8x32xf32>
    %484 = arith.mulf %175, %483 : vector<8x32xf32>
    %485 = arith.addf %479, %484 : vector<8x32xf32>
    %c3_166 = arith.constant 3 : index
    %c0_167 = arith.constant 0 : index
    %c0_168 = arith.constant 0 : index
    %486 = vector.load %arg2[%c3_166, %c0_167, %c0_168] : memref<8x8x1xf32, #tpu.memory_space<vmem>>, vector<1x8x1xf32>
    %487 = vector.shape_cast %486 : vector<1x8x1xf32> to vector<8x1xf32>
    %488 = arith.mulf %451, %487 : vector<8x1xf32>
    %489 = vector.broadcast %488 : vector<8x1xf32> to vector<8x32xf32>
    %490 = arith.mulf %226, %489 : vector<8x32xf32>
    %491 = arith.addf %485, %490 : vector<8x32xf32>
    %c4_169 = arith.constant 4 : index
    %c0_170 = arith.constant 0 : index
    %c0_171 = arith.constant 0 : index
    %492 = vector.load %arg2[%c4_169, %c0_170, %c0_171] : memref<8x8x1xf32, #tpu.memory_space<vmem>>, vector<1x8x1xf32>
    %493 = vector.shape_cast %492 : vector<1x8x1xf32> to vector<8x1xf32>
    %494 = arith.mulf %453, %493 : vector<8x1xf32>
    %495 = vector.broadcast %494 : vector<8x1xf32> to vector<8x32xf32>
    %496 = arith.mulf %277, %495 : vector<8x32xf32>
    %497 = arith.addf %491, %496 : vector<8x32xf32>
    %c5_172 = arith.constant 5 : index
    %c0_173 = arith.constant 0 : index
    %c0_174 = arith.constant 0 : index
    %498 = vector.load %arg2[%c5_172, %c0_173, %c0_174] : memref<8x8x1xf32, #tpu.memory_space<vmem>>, vector<1x8x1xf32>
    %499 = vector.shape_cast %498 : vector<1x8x1xf32> to vector<8x1xf32>
    %500 = arith.mulf %455, %499 : vector<8x1xf32>
    %501 = vector.broadcast %500 : vector<8x1xf32> to vector<8x32xf32>
    %502 = arith.mulf %328, %501 : vector<8x32xf32>
    %503 = arith.addf %497, %502 : vector<8x32xf32>
    %c6_175 = arith.constant 6 : index
    %c0_176 = arith.constant 0 : index
    %c0_177 = arith.constant 0 : index
    %504 = vector.load %arg2[%c6_175, %c0_176, %c0_177] : memref<8x8x1xf32, #tpu.memory_space<vmem>>, vector<1x8x1xf32>
    %505 = vector.shape_cast %504 : vector<1x8x1xf32> to vector<8x1xf32>
    %506 = arith.mulf %457, %505 : vector<8x1xf32>
    %507 = vector.broadcast %506 : vector<8x1xf32> to vector<8x32xf32>
    %508 = arith.mulf %379, %507 : vector<8x32xf32>
    %509 = arith.addf %503, %508 : vector<8x32xf32>
    %c7_178 = arith.constant 7 : index
    %c0_179 = arith.constant 0 : index
    %c0_180 = arith.constant 0 : index
    %510 = vector.load %arg2[%c7_178, %c0_179, %c0_180] : memref<8x8x1xf32, #tpu.memory_space<vmem>>, vector<1x8x1xf32>
    %511 = vector.shape_cast %510 : vector<1x8x1xf32> to vector<8x1xf32>
    %512 = arith.mulf %459, %511 : vector<8x1xf32>
    %513 = vector.broadcast %512 : vector<8x1xf32> to vector<8x32xf32>
    %514 = arith.mulf %430, %513 : vector<8x32xf32>
    %515 = arith.addf %509, %514 : vector<8x32xf32>
    %516 = vector.broadcast %466 : vector<8x1xf32> to vector<8x32xf32>
    %517 = arith.divf %515, %516 : vector<8x32xf32>
    %c0_181 = arith.constant 0 : index
    %c0_182 = arith.constant 0 : index
    %518 = vector.load %arg11[%c0_181, %c0_182] : memref<32x4xf32, #tpu.memory_space<vmem>>, vector<32x4xf32>
    %cst_183 = arith.constant dense<0.000000e+00> : vector<8x4xf32>
    %519 = tpu.matmul %517, %518, %cst_183 {dimension_numbers = #tpu.dot_dimension_numbers<[1], [0], [0], [1], [0, 0, 1, 1], [], []>} : vector<8x32xf32>, vector<32x4xf32>, vector<8x4xf32> -> vector<8x4xf32>
    %c0_184 = arith.constant 0 : index
    %c0_185 = arith.constant 0 : index
    %520 = vector.load %arg12[%c0_184, %c0_185] : memref<1x4xf32, #tpu.memory_space<vmem>>, vector<1x4xf32>
    %521 = vector.broadcast %520 : vector<1x4xf32> to vector<8x4xf32>
    %522 = arith.addf %519, %521 : vector<8x4xf32>
    %c0_186 = arith.constant 0 : index
    %c0_187 = arith.constant 0 : index
    %523 = vector.load %arg13[%c0_186, %c0_187] : memref<8x4xf32, #tpu.memory_space<vmem>>, vector<8x4xf32>
    tpu.vector_store %arg13[%c0_186, %c0_187], %522 {strides = array<i32>} : memref<8x4xf32, #tpu.memory_space<vmem>>, vector<8x4xf32>,
    return
  }
  func.func @transform_0(%arg0: i32) -> (i32, i32, i32) {
    %c0_i32 = arith.constant 0 : i32
    %c0_i32_0 = arith.constant 0 : i32
    %c0_i32_1 = arith.constant 0 : i32
    return %c0_i32, %arg0, %c0_i32_0 : i32, i32, i32
  }
  func.func @transform_1(%arg0: i32) -> (i32, i32, i32) {
    %c0_i32 = arith.constant 0 : i32
    %c0_i32_0 = arith.constant 0 : i32
    %c0_i32_1 = arith.constant 0 : i32
    return %c0_i32, %arg0, %c0_i32_0 : i32, i32, i32
  }
  func.func @transform_2(%arg0: i32) -> (i32, i32) {
    %c0_i32 = arith.constant 0 : i32
    %c0_i32_0 = arith.constant 0 : i32
    %c0_i32_1 = arith.constant 0 : i32
    return %c0_i32, %c0_i32_0 : i32, i32
  }
  func.func @transform_3(%arg0: i32) -> (i32, i32) {
    %c0_i32 = arith.constant 0 : i32
    %c0_i32_0 = arith.constant 0 : i32
    %c0_i32_1 = arith.constant 0 : i32
    return %c0_i32, %c0_i32_0 : i32, i32
  }
  func.func @transform_4(%arg0: i32) -> (i32, i32, i32) {
    %c0_i32 = arith.constant 0 : i32
    %c0_i32_0 = arith.constant 0 : i32
    %c0_i32_1 = arith.constant 0 : i32
    %c0_i32_2 = arith.constant 0 : i32
    return %c0_i32, %c0_i32_0, %c0_i32_1 : i32, i32, i32
  }
  func.func @transform_5(%arg0: i32) -> (i32, i32, i32) {
    %c0_i32 = arith.constant 0 : i32
    %c0_i32_0 = arith.constant 0 : i32
    %c0_i32_1 = arith.constant 0 : i32
    %c0_i32_2 = arith.constant 0 : i32
    return %c0_i32, %c0_i32_0, %c0_i32_1 : i32, i32, i32
  }
  func.func @transform_6(%arg0: i32) -> (i32, i32, i32) {
    %c0_i32 = arith.constant 0 : i32
    %c0_i32_0 = arith.constant 0 : i32
    %c0_i32_1 = arith.constant 0 : i32
    %c0_i32_2 = arith.constant 0 : i32
    return %c0_i32, %c0_i32_0, %c0_i32_1 : i32, i32, i32
  }
  func.func @transform_7(%arg0: i32) -> (i32, i32, i32) {
    %c0_i32 = arith.constant 0 : i32
    %c0_i32_0 = arith.constant 0 : i32
    %c0_i32_1 = arith.constant 0 : i32
    %c0_i32_2 = arith.constant 0 : i32
    return %c0_i32, %c0_i32_0, %c0_i32_1 : i32, i32, i32
  }
  func.func @transform_8(%arg0: i32) -> (i32, i32) {
    %c0_i32 = arith.constant 0 : i32
    %c0_i32_0 = arith.constant 0 : i32
    %c0_i32_1 = arith.constant 0 : i32
    return %c0_i32, %c0_i32_0 : i32, i32
  }
  func.func @transform_9(%arg0: i32) -> (i32, i32) {
    %c0_i32 = arith.constant 0 : i32
    %c0_i32_0 = arith.constant 0 : i32
    %c0_i32_1 = arith.constant 0 : i32
    return %c0_i32, %c0_i32_0 : i32, i32
  }
  func.func @transform_10(%arg0: i32) -> (i32, i32) {
    %c0_i32 = arith.constant 0 : i32
    %c0_i32_0 = arith.constant 0 : i32
    %c0_i32_1 = arith.constant 0 : i32
    return %c0_i32, %c0_i32_0 : i32, i32
  }
  func.func @transform_11(%arg0: i32) -> (i32, i32) {
    %c0_i32 = arith.constant 0 : i32
    %c0_i32_0 = arith.constant 0 : i32
    %c0_i32_1 = arith.constant 0 : i32
    return %c0_i32, %c0_i32_0 : i32, i32
  }
  func.func @transform_12(%arg0: i32) -> (i32, i32) {
    %c0_i32 = arith.constant 0 : i32
    %c0_i32_0 = arith.constant 0 : i32
    return %arg0, %c0_i32 : i32, i32
  }
}

</mosaic_0001>

<llo_original>
// kernel: tpu_custom_call.1
$region0: #{tpu_custom_call.1}
  #allocation0 [shape = 'u32[]', space=smem, size = 0x4, offset = 0x4, fixed_abs, tag = 'smem constant byte address 0x4 - core index']
  #allocation1 [shape = 'u32[144,128]{1,0:T(1,128)}', space=vmem, size = 0x12000, scoped, tag = 'internal scratch']
  #allocation2 [shape = 'f32[1,1]{1,0:T(1,128)S(1)}', space=vmem, size = 0x200, scoped, tag = 'scoped memory for tpu_custom_call.1']
  %s0 = inlined_call_operand.hbm [shape: f32[8,8,16], index: 0, kind: input, shape index: {}]
  %s1 = inlined_call_operand.vmem [shape: f32[8,8,1], index: 1, kind: input, shape index: {}]
  %s2 = inlined_call_operand.vmem [shape: f32[16,32], index: 2, kind: input, shape index: {}]
  %s3 = inlined_call_operand.hbm [shape: f32[1,32], index: 3, kind: input, shape index: {}]
  %s4 = inlined_call_operand.vmem [shape: f32[3,32,32], index: 4, kind: input, shape index: {}]
  %s5 = inlined_call_operand.vmem [shape: f32[3,1,32], index: 5, kind: input, shape index: {}]
  %s6 = inlined_call_operand.hbm [shape: f32[3,32,32], index: 6, kind: input, shape index: {}]
  %s7 = inlined_call_operand.vmem [shape: f32[3,1,32], index: 7, kind: input, shape index: {}]
  %s8 = inlined_call_operand.vmem [shape: f32[1,32], index: 8, kind: input, shape index: {}]
  %s9 = inlined_call_operand.<no memory space> [shape: f32[1,1], index: 9, kind: input, shape index: {}]
  %s10 = inlined_call_operand.vmem [shape: f32[32,4], index: 10, kind: input, shape index: {}]
  %s11 = inlined_call_operand.vmem [shape: f32[1,4], index: 11, kind: input, shape index: {}]
  %s12 = inlined_call_operand.vmem [shape: f32[8,4], index: 12, kind: output, shape index: {}]
  %s13 = sld [smem:[#allocation0]]
  $region70: #{tpu_custom_call.1} parent=0
    _
  %s15 = ssub.s32 1, %s13
  %s16 = scalar_select 0, %s15, %s13
  %v17 = vstv %s9
  %18 = vst [vmem:[#allocation2] sm:$0x1] %v17
  $region1: #{tpu_custom_call.1} parent=0
    #allocation3 [shape = 'u8[32768]{0}', space=vmem, size = 0x8000, scoped, tag = 'input window, operand 0, single buffered']
    #allocation4 [shape = 's32[1]{0}', space=sflag, size = 0x4, scoped, tag = 'scoped memory for tpu_custom_call.1']
    #allocation5 [shape = 'u8[512]{0}', space=vmem, size = 0x400, scoped, tag = 'input window, operand 3, single buffered']
    #allocation6 [shape = 's32[1]{0}', space=sflag, size = 0x4, scoped, tag = 'scoped memory for tpu_custom_call.1']
    #allocation7 [shape = 'u8[49152]{0}', space=vmem, size = 0xc000, scoped, tag = 'input window, operand 6, single buffered']
    %19 = vsyncpa [#allocation4], 0
    %20 = vsyncpa [#allocation6], 0
    // Predicated region
    $region2: #{tpu_custom_call.1} parent=1 // pred_check
      _
    $region3: #{tpu_custom_call.1} parent=1 // pred_check_branch
      %22 = sbr.rel (0) target = $region5
    $region4: #{tpu_custom_call.1} parent=1 // pred_region
      %s24 = ssub.s32 1024, 1024
      %25 = vsyncadd [#allocation4], %s24
      %s26 = sshll.u32 [#allocation3], 4
      %s27 = int_to_ptr.vmem [resolvable:$true] %s26
      %32 = dma.hbm_to_vmem [thread:$0]  %s0, 1024, %s27, [#allocation4], 128, 128, 8
    $region5: #{tpu_custom_call.1} parent=1 // pred_fallthru
      _
    // Predicated region
    $region6: #{tpu_custom_call.1} parent=1 // pred_check
      _
    $region7: #{tpu_custom_call.1} parent=1 // pred_check_branch
      %34 = sbr.rel (0) target = $region9
    $region8: #{tpu_custom_call.1} parent=1 // pred_region
      _
    $region9: #{tpu_custom_call.1} parent=1 // pred_fallthru
      _
    // Predicated region
    $region10: #{tpu_custom_call.1} parent=1 // pred_check
      _
    $region11: #{tpu_custom_call.1} parent=1 // pred_check_branch
      %36 = sbr.rel (0) target = $region13
    $region12: #{tpu_custom_call.1} parent=1 // pred_region
      _
    $region13: #{tpu_custom_call.1} parent=1 // pred_fallthru
      _
    // Predicated region
    $region14: #{tpu_custom_call.1} parent=1 // pred_check
      _
    $region15: #{tpu_custom_call.1} parent=1 // pred_check_branch
      %38 = sbr.rel (0) target = $region17
    $region16: #{tpu_custom_call.1} parent=1 // pred_region
      %s40 = ssub.s32 16, 16
      %41 = vsyncadd [#allocation6], %s40
      %s43 = sshll.u32 [#allocation5], 4
      %s44 = int_to_ptr.vmem [resolvable:$true] %s43
      %46 = dma.hbm_to_vmem [thread:$0]  %s3, 16, %s44, [#allocation6]
    $region17: #{tpu_custom_call.1} parent=1 // pred_fallthru
      _
    // Predicated region
    $region18: #{tpu_custom_call.1} parent=1 // pred_check
      _
    $region19: #{tpu_custom_call.1} parent=1 // pred_check_branch
      %48 = sbr.rel (0) target = $region21
    $region20: #{tpu_custom_call.1} parent=1 // pred_region
      _
    $region21: #{tpu_custom_call.1} parent=1 // pred_fallthru
      _
    // Predicated region
    $region22: #{tpu_custom_call.1} parent=1 // pred_check
      _
    $region23: #{tpu_custom_call.1} parent=1 // pred_check_branch
      %50 = sbr.rel (0) target = $region25
    $region24: #{tpu_custom_call.1} parent=1 // pred_region
      _
    $region25: #{tpu_custom_call.1} parent=1 // pred_fallthru
      _
    // Predicated region
    $region26: #{tpu_custom_call.1} parent=1 // pred_check
      _
    $region27: #{tpu_custom_call.1} parent=1 // pred_check_branch
      %52 = sbr.rel (0) target = $region29
    $region28: #{tpu_custom_call.1} parent=1 // pred_region
      %s54 = ssub.s32 1536, 1536
      %55 = vsyncadd [#allocation6], %s54
      %s56 = sshll.u32 [#allocation7], 4
      %s57 = int_to_ptr.vmem [resolvable:$true] %s56
      %62 = dma.hbm_to_vmem [thread:$0]  %s6, 1536, %s57, [#allocation6], 128, 128, 8
    $region29: #{tpu_custom_call.1} parent=1 // pred_fallthru
      _
    // Predicated region
    $region30: #{tpu_custom_call.1} parent=1 // pred_check
      _
    $region31: #{tpu_custom_call.1} parent=1 // pred_check_branch
      %64 = sbr.rel (0) target = $region33
    $region32: #{tpu_custom_call.1} parent=1 // pred_region
      _
    $region33: #{tpu_custom_call.1} parent=1 // pred_fallthru
      _
    // Predicated region
    $region34: #{tpu_custom_call.1} parent=1 // pred_check
      _
    $region35: #{tpu_custom_call.1} parent=1 // pred_check_branch
      %66 = sbr.rel (0) target = $region37
    $region36: #{tpu_custom_call.1} parent=1 // pred_region
      _
    $region37: #{tpu_custom_call.1} parent=1 // pred_fallthru
      _
    // Predicated region
    $region38: #{tpu_custom_call.1} parent=1 // pred_check
      _
    $region39: #{tpu_custom_call.1} parent=1 // pred_check_branch
      %68 = sbr.rel (0) target = $region41
    $region40: #{tpu_custom_call.1} parent=1 // pred_region
      _
    $region41: #{tpu_custom_call.1} parent=1 // pred_fallthru
      _
    // Predicated region
    $region42: #{tpu_custom_call.1} parent=1 // pred_check
      _
    $region43: #{tpu_custom_call.1} parent=1 // pred_check_branch
      %70 = sbr.rel (0) target = $region45
    $region44: #{tpu_custom_call.1} parent=1 // pred_region
      _
    $region45: #{tpu_custom_call.1} parent=1 // pred_fallthru
      _
    // Predicated region
    $region46: #{tpu_custom_call.1} parent=1 // pred_check
      _
    $region47: #{tpu_custom_call.1} parent=1 // pred_check_branch
      %72 = sbr.rel (0) target = $region49
    $region48: #{tpu_custom_call.1} parent=1 // pred_region
      _
    $region49: #{tpu_custom_call.1} parent=1 // pred_fallthru
      _
    // Predicated region
    $region50: #{tpu_custom_call.1} parent=1 // pred_check
      _
    $region51: #{tpu_custom_call.1} parent=1 // pred_check_branch
      %74 = sbr.rel (0) target = $region53
    $region52: #{tpu_custom_call.1} parent=1 // pred_region
      %75 = dma.done [#allocation4], 1024
    $region53: #{tpu_custom_call.1} parent=1 // pred_fallthru
      _
    // Predicated region
    $region54: #{tpu_custom_call.1} parent=1 // pred_check
      _
    $region55: #{tpu_custom_call.1} parent=1 // pred_check_branch
      %77 = sbr.rel (0) target = $region57
    $region56: #{tpu_custom_call.1} parent=1 // pred_region
      %78 = dma.done [#allocation6], 16
    $region57: #{tpu_custom_call.1} parent=1 // pred_fallthru
      _
    // Predicated region
    $region58: #{tpu_custom_call.1} parent=1 // pred_check
      _
    $region59: #{tpu_custom_call.1} parent=1 // pred_check_branch
      %80 = sbr.rel (0) target = $region61
    $region60: #{tpu_custom_call.1} parent=1 // pred_region
      %81 = dma.done [#allocation6], 1536
    $region61: #{tpu_custom_call.1} parent=1 // pred_fallthru
      _
    %v82 = vld [vmem:[%s2] sm:$0xff]
    %v83 = vld [vmem:[%s2 + $0x8] sm:$0xff]
    %v84 = vld [vmem:[#allocation5] sm:$0x1]
    %v85 = vld [vmem:[%s4] sm:$0xff]
    %v86 = vld [vmem:[%s4 + $0x8] sm:$0xff]
    %v87 = vld [vmem:[%s4 + $0x10] sm:$0xff]
    %v88 = vld [vmem:[%s4 + $0x18] sm:$0xff]
    %s89 = scalar_lea.vmem %s4, 32
    %v90 = vld [vmem:[%s89] sm:$0xff]
    %v91 = vld [vmem:[%s89 + $0x8] sm:$0xff]
    %v92 = vld [vmem:[%s89 + $0x10] sm:$0xff]
    %v93 = vld [vmem:[%s89 + $0x18] sm:$0xff]
    %s94 = scalar_lea.vmem %s4, 64
    %v95 = vld [vmem:[%s94] sm:$0xff]
    %v96 = vld [vmem:[%s94 + $0x8] sm:$0xff]
    %v97 = vld [vmem:[%s94 + $0x10] sm:$0xff]
    %v98 = vld [vmem:[%s94 + $0x18] sm:$0xff]
    %v99 = vld [vmem:[%s5] sm:$0x1]
    %s100 = scalar_lea.vmem %s5, 1
    %v101 = vld [vmem:[%s100] sm:$0x1]
    %s102 = scalar_lea.vmem %s5, 2
    %v103 = vld [vmem:[%s102] sm:$0x1]
    %v104 = vld [vmem:[#allocation7] sm:$0xff]
    %v105 = vld [vmem:[#allocation7 + $0x8] sm:$0xff]
    %v106 = vld [vmem:[#allocation7 + $0x10] sm:$0xff]
    %v107 = vld [vmem:[#allocation7 + $0x18] sm:$0xff]
    %s108 = scalar_lea.vmem [#allocation7], 32
    %v109 = vld [vmem:[%s108] sm:$0xff]
    %v110 = vld [vmem:[%s108 + $0x8] sm:$0xff]
    %v111 = vld [vmem:[%s108 + $0x10] sm:$0xff]
    %v112 = vld [vmem:[%s108 + $0x18] sm:$0xff]
    %s113 = scalar_lea.vmem [#allocation7], 64
    %v114 = vld [vmem:[%s113] sm:$0xff]
    %v115 = vld [vmem:[%s113 + $0x8] sm:$0xff]
    %v116 = vld [vmem:[%s113 + $0x10] sm:$0xff]
    %v117 = vld [vmem:[%s113 + $0x18] sm:$0xff]
    %v118 = vld [vmem:[%s7] sm:$0x1]
    %s119 = scalar_lea.vmem %s7, 1
    %v120 = vld [vmem:[%s119] sm:$0x1]
    %s121 = scalar_lea.vmem %s7, 2
    %v122 = vld [vmem:[%s121] sm:$0x1]
    %v123 = vld [vmem:[%s8] sm:$0x1]
    %v124 = vld [vmem:[#allocation2] sm:$0x1]
    %v125 = vld [vmem:[#allocation3] sm:$0xff]
    %v127 = vlaneseq
    %v128 = vshrl.u32 %v127, 7
    %v129 = vsub.s32 0, %v128
    %v130 = vrot.slane %v84, %v129
    %vm132 = vcmask 130048
    %v134 = vsel %vm132, %v125, 0
    %136 = vmatprep.subr.mxu0 0.0
    %137 = vmatpush1.msra.mxu0 0.0
    %138 = vmatprep.subr.mxu0 0.0
    %139 = vmatpush1.msra.mxu0 0.0
    %140 = vmatprep.subr.mxu0 0.0
    %141 = vmatpush1.msra.mxu0 0.0
    %142 = vmatprep.subr.mxu0 0.0
    %143 = vmatpush1.msra.mxu0 0.0
    %144 = vmatprep.subr.mxu0 0.0
    %145 = vmatpush1.msra.mxu0 0.0
    %146 = vmatprep.subr.mxu0 0.0
    %147 = vmatpush1.msra.mxu0 0.0
    %148 = vmatprep.subr.mxu0 0.0
    %149 = vmatpush1.msra.mxu0 0.0
    %150 = vmatprep.subr.mxu0 0.0
    %151 = vmatpush1.msra.mxu0 0.0
    %152 = vmatprep.subr.mxu0 0.0
    %153 = vmatpush1.msra.mxu0 0.0
    %154 = vmatprep.subr.mxu0 0.0
    %155 = vmatpush1.msra.mxu0 0.0
    %156 = vmatprep.subr.mxu0 0.0
    %157 = vmatpush1.msra.mxu0 0.0
    %158 = vmatprep.subr.mxu0 0.0
    %159 = vmatpush1.msra.mxu0 0.0
    %160 = vmatprep.subr.mxu0 0.0
    %161 = vmatpush1.msra.mxu0 0.0
    %162 = vmatprep.subr.mxu0 0.0
    %163 = vmatpush1.msra.mxu0 0.0
    %164 = vmatprep.subr.mxu0 0.0
    %165 = vmatpush1.msra.mxu0 %v83
    %166 = vmatprep.subr.mxu0 0.0
    %167 = vmatpush1.msra.mxu0 %v82
    %168 = vmatprep.subr.mxu0 0.0
    %169 = vmatpush2.msra.mxu0 0.0
    %170 = vmatprep.subr.mxu0 0.0
    %171 = vmatpush2.msra.mxu0 0.0
    %172 = vmatprep.subr.mxu0 0.0
    %173 = vmatpush2.msra.mxu0 0.0
    %174 = vmatprep.subr.mxu0 0.0
    %175 = vmatpush2.msra.mxu0 0.0
    %176 = vmatprep.subr.mxu0 0.0
    %177 = vmatpush2.msra.mxu0 0.0
    %178 = vmatprep.subr.mxu0 0.0
    %179 = vmatpush2.msra.mxu0 0.0
    %180 = vmatprep.subr.mxu0 0.0
    %181 = vmatpush2.msra.mxu0 0.0
    %182 = vmatprep.subr.mxu0 0.0
    %183 = vmatpush2.msra.mxu0 0.0
    %184 = vmatprep.subr.mxu0 0.0
    %185 = vmatpush2.msra.mxu0 0.0
    %186 = vmatprep.subr.mxu0 0.0
    %187 = vmatpush2.msra.mxu0 0.0
    %188 = vmatprep.subr.mxu0 0.0
    %189 = vmatpush2.msra.mxu0 0.0
    %190 = vmatprep.subr.mxu0 0.0
    %191 = vmatpush2.msra.mxu0 0.0
    %192 = vmatprep.subr.mxu0 0.0
    %193 = vmatpush2.msra.mxu0 0.0
    %194 = vmatprep.subr.mxu0 0.0
    %195 = vmatpush2.msra.mxu0 0.0
    %196 = vmatprep.subr.mxu0 0.0
    %197 = vmatpush2.msra.mxu0 0.0
    %198 = vmatprep.subr.mxu0 0.0
    %199 = vmatpush2.msra.mxu0 0.0
    %200 = vmatprep.mubr.f32.mxu0 0.0
    %201 = vmatmul.mubr.f32.gmra.mxu0 %v134
    %v202 = vpop.f32.mrf.mxu0
    %v203 = vadd.f32 %v130, %v202
    %v204 = vpop.f32.mrf.mxu0
    %205 = vdwg.mxu0
    %v206 = vmax.f32 %v203, 0.0
    %v208 = vlaneseq
    %v209 = vshrl.u32 %v208, 7
    %v210 = vsub.s32 0, %v209
    %v211 = vrot.slane %v99, %v210
    %vm213 = vcmask 261120
    %v215 = vsel %vm213, %v206, 0
    %217 = vmatprep.subr.mxu0 0.0
    %218 = vmatpush1.msra.mxu0 0.0
    %219 = vmatprep.subr.mxu0 0.0
    %220 = vmatpush1.msra.mxu0 0.0
    %221 = vmatprep.subr.mxu0 0.0
    %222 = vmatpush1.msra.mxu0 0.0
    %223 = vmatprep.subr.mxu0 0.0
    %224 = vmatpush1.msra.mxu0 0.0
    %225 = vmatprep.subr.mxu0 0.0
    %226 = vmatpush1.msra.mxu0 0.0
    %227 = vmatprep.subr.mxu0 0.0
    %228 = vmatpush1.msra.mxu0 0.0
    %229 = vmatprep.subr.mxu0 0.0
    %230 = vmatpush1.msra.mxu0 0.0
    %231 = vmatprep.subr.mxu0 0.0
    %232 = vmatpush1.msra.mxu0 0.0
    %233 = vmatprep.subr.mxu0 0.0
    %234 = vmatpush1.msra.mxu0 0.0
    %235 = vmatprep.subr.mxu0 0.0
    %236 = vmatpush1.msra.mxu0 0.0
    %237 = vmatprep.subr.mxu0 0.0
    %238 = vmatpush1.msra.mxu0 0.0
    %239 = vmatprep.subr.mxu0 0.0
    %240 = vmatpush1.msra.mxu0 0.0
    %241 = vmatprep.subr.mxu0 0.0
    %242 = vmatpush1.msra.mxu0 %v88
    %243 = vmatprep.subr.mxu0 0.0
    %244 = vmatpush1.msra.mxu0 %v87
    %245 = vmatprep.subr.mxu0 0.0
    %246 = vmatpush1.msra.mxu0 %v86
    %247 = vmatprep.subr.mxu0 0.0
    %248 = vmatpush1.msra.mxu0 %v85
    %249 = vmatprep.subr.mxu0 0.0
    %250 = vmatpush2.msra.mxu0 0.0
    %251 = vmatprep.subr.mxu0 0.0
    %252 = vmatpush2.msra.mxu0 0.0
    %253 = vmatprep.subr.mxu0 0.0
    %254 = vmatpush2.msra.mxu0 0.0
    %255 = vmatprep.subr.mxu0 0.0
    %256 = vmatpush2.msra.mxu0 0.0
    %257 = vmatprep.subr.mxu0 0.0
    %258 = vmatpush2.msra.mxu0 0.0
    %259 = vmatprep.subr.mxu0 0.0
    %260 = vmatpush2.msra.mxu0 0.0
    %261 = vmatprep.subr.mxu0 0.0
    %262 = vmatpush2.msra.mxu0 0.0
    %263 = vmatprep.subr.mxu0 0.0
    %264 = vmatpush2.msra.mxu0 0.0
    %265 = vmatprep.subr.mxu0 0.0
    %266 = vmatpush2.msra.mxu0 0.0
    %267 = vmatprep.subr.mxu0 0.0
    %268 = vmatpush2.msra.mxu0 0.0
    %269 = vmatprep.subr.mxu0 0.0
    %270 = vmatpush2.msra.mxu0 0.0
    %271 = vmatprep.subr.mxu0 0.0
    %272 = vmatpush2.msra.mxu0 0.0
    %273 = vmatprep.subr.mxu0 0.0
    %274 = vmatpush2.msra.mxu0 0.0
    %275 = vmatprep.subr.mxu0 0.0
    %276 = vmatpush2.msra.mxu0 0.0
    %277 = vmatprep.subr.mxu0 0.0
    %278 = vmatpush2.msra.mxu0 0.0
    %279 = vmatprep.subr.mxu0 0.0
    %280 = vmatpush2.msra.mxu0 0.0
    %281 = vmatprep.mubr.f32.mxu0 0.0
    %282 = vmatmul.mubr.f32.gmra.mxu0 %v215
    %v283 = vpop.f32.mrf.mxu0
    %v284 = vadd.f32 %v211, %v283
    %v285 = vpop.f32.mrf.mxu0
    %286 = vdwg.mxu0
    %v288 = vlaneseq
    %v289 = vshrl.u32 %v288, 7
    %v290 = vsub.s32 0, %v289
    %v291 = vrot.slane %v101, %v290
    %293 = vmatprep.subr.mxu0 0.0
    %294 = vmatpush1.msra.mxu0 0.0
    %295 = vmatprep.subr.mxu0 0.0
    %296 = vmatpush1.msra.mxu0 0.0
    %297 = vmatprep.subr.mxu0 0.0
    %298 = vmatpush1.msra.mxu0 0.0
    %299 = vmatprep.subr.mxu0 0.0
    %300 = vmatpush1.msra.mxu0 0.0
    %301 = vmatprep.subr.mxu0 0.0
    %302 = vmatpush1.msra.mxu0 0.0
    %303 = vmatprep.subr.mxu0 0.0
    %304 = vmatpush1.msra.mxu0 0.0
    %305 = vmatprep.subr.mxu0 0.0
    %306 = vmatpush1.msra.mxu0 0.0
    %307 = vmatprep.subr.mxu0 0.0
    %308 = vmatpush1.msra.mxu0 0.0
    %309 = vmatprep.subr.mxu0 0.0
    %310 = vmatpush1.msra.mxu0 0.0
    %311 = vmatprep.subr.mxu0 0.0
    %312 = vmatpush1.msra.mxu0 0.0
    %313 = vmatprep.subr.mxu0 0.0
    %314 = vmatpush1.msra.mxu0 0.0
    %315 = vmatprep.subr.mxu0 0.0
    %316 = vmatpush1.msra.mxu0 0.0
    %317 = vmatprep.subr.mxu0 0.0
    %318 = vmatpush1.msra.mxu0 %v93
    %319 = vmatprep.subr.mxu0 0.0
    %320 = vmatpush1.msra.mxu0 %v92
    %321 = vmatprep.subr.mxu0 0.0
    %322 = vmatpush1.msra.mxu0 %v91
    %323 = vmatprep.subr.mxu0 0.0
    %324 = vmatpush1.msra.mxu0 %v90
    %325 = vmatprep.subr.mxu0 0.0
    %326 = vmatpush2.msra.mxu0 0.0
    %327 = vmatprep.subr.mxu0 0.0
    %328 = vmatpush2.msra.mxu0 0.0
    %329 = vmatprep.subr.mxu0 0.0
    %330 = vmatpush2.msra.mxu0 0.0
    %331 = vmatprep.subr.mxu0 0.0
    %332 = vmatpush2.msra.mxu0 0.0
    %333 = vmatprep.subr.mxu0 0.0
    %334 = vmatpush2.msra.mxu0 0.0
    %335 = vmatprep.subr.mxu0 0.0
    %336 = vmatpush2.msra.mxu0 0.0
    %337 = vmatprep.subr.mxu0 0.0
    %338 = vmatpush2.msra.mxu0 0.0
    %339 = vmatprep.subr.mxu0 0.0
    %340 = vmatpush2.msra.mxu0 0.0
    %341 = vmatprep.subr.mxu0 0.0
    %342 = vmatpush2.msra.mxu0 0.0
    %343 = vmatprep.subr.mxu0 0.0
    %344 = vmatpush2.msra.mxu0 0.0
    %345 = vmatprep.subr.mxu0 0.0
    %346 = vmatpush2.msra.mxu0 0.0
    %347 = vmatprep.subr.mxu0 0.0
    %348 = vmatpush2.msra.mxu0 0.0
    %349 = vmatprep.subr.mxu0 0.0
    %350 = vmatpush2.msra.mxu0 0.0
    %351 = vmatprep.subr.mxu0 0.0
    %352 = vmatpush2.msra.mxu0 0.0
    %353 = vmatprep.subr.mxu0 0.0
    %354 = vmatpush2.msra.mxu0 0.0
    %355 = vmatprep.subr.mxu0 0.0
    %356 = vmatpush2.msra.mxu0 0.0
    %357 = vmatprep.mubr.f32.mxu0 0.0
    %358 = vmatmul.mubr.f32.gmra.mxu0 %v215
    %v359 = vpop.f32.mrf.mxu0
    %v360 = vadd.f32 %v291, %v359
    %v361 = vpop.f32.mrf.mxu0
    %362 = vdwg.mxu0
    %v364 = vlaneseq
    %v365 = vshrl.u32 %v364, 7
    %v366 = vsub.s32 0, %v365
    %v367 = vrot.slane %v103, %v366
    %369 = vmatprep.subr.mxu0 0.0
    %370 = vmatpush1.msra.mxu0 0.0
    %371 = vmatprep.subr.mxu0 0.0
    %372 = vmatpush1.msra.mxu0 0.0
    %373 = vmatprep.subr.mxu0 0.0
    %374 = vmatpush1.msra.mxu0 0.0
    %375 = vmatprep.subr.mxu0 0.0
    %376 = vmatpush1.msra.mxu0 0.0
    %377 = vmatprep.subr.mxu0 0.0
    %378 = vmatpush1.msra.mxu0 0.0
    %379 = vmatprep.subr.mxu0 0.0
    %380 = vmatpush1.msra.mxu0 0.0
    %381 = vmatprep.subr.mxu0 0.0
    %382 = vmatpush1.msra.mxu0 0.0
    %383 = vmatprep.subr.mxu0 0.0
    %384 = vmatpush1.msra.mxu0 0.0
    %385 = vmatprep.subr.mxu0 0.0
    %386 = vmatpush1.msra.mxu0 0.0
    %387 = vmatprep.subr.mxu0 0.0
    %388 = vmatpush1.msra.mxu0 0.0
    %389 = vmatprep.subr.mxu0 0.0
    %390 = vmatpush1.msra.mxu0 0.0
    %391 = vmatprep.subr.mxu0 0.0
    %392 = vmatpush1.msra.mxu0 0.0
    %393 = vmatprep.subr.mxu0 0.0
    %394 = vmatpush1.msra.mxu0 %v98
    %395 = vmatprep.subr.mxu0 0.0
    %396 = vmatpush1.msra.mxu0 %v97
    %397 = vmatprep.subr.mxu0 0.0
    %398 = vmatpush1.msra.mxu0 %v96
    %399 = vmatprep.subr.mxu0 0.0
    %400 = vmatpush1.msra.mxu0 %v95
    %401 = vmatprep.subr.mxu0 0.0
    %402 = vmatpush2.msra.mxu0 0.0
    %403 = vmatprep.subr.mxu0 0.0
    %404 = vmatpush2.msra.mxu0 0.0
    %405 = vmatprep.subr.mxu0 0.0
    %406 = vmatpush2.msra.mxu0 0.0
    %407 = vmatprep.subr.mxu0 0.0
    %408 = vmatpush2.msra.mxu0 0.0
    %409 = vmatprep.subr.mxu0 0.0
    %410 = vmatpush2.msra.mxu0 0.0
    %411 = vmatprep.subr.mxu0 0.0
    %412 = vmatpush2.msra.mxu0 0.0
    %413 = vmatprep.subr.mxu0 0.0
    %414 = vmatpush2.msra.mxu0 0.0
    %415 = vmatprep.subr.mxu0 0.0
    %416 = vmatpush2.msra.mxu0 0.0
    %417 = vmatprep.subr.mxu0 0.0
    %418 = vmatpush2.msra.mxu0 0.0
    %419 = vmatprep.subr.mxu0 0.0
    %420 = vmatpush2.msra.mxu0 0.0
    %421 = vmatprep.subr.mxu0 0.0
    %422 = vmatpush2.msra.mxu0 0.0
    %423 = vmatprep.subr.mxu0 0.0
    %424 = vmatpush2.msra.mxu0 0.0
    %425 = vmatprep.subr.mxu0 0.0
    %426 = vmatpush2.msra.mxu0 0.0
    %427 = vmatprep.subr.mxu0 0.0
    %428 = vmatpush2.msra.mxu0 0.0
    %429 = vmatprep.subr.mxu0 0.0
    %430 = vmatpush2.msra.mxu0 0.0
    %431 = vmatprep.subr.mxu0 0.0
    %432 = vmatpush2.msra.mxu0 0.0
    %433 = vmatprep.mubr.f32.mxu0 0.0
    %434 = vmatmul.mubr.f32.gmra.mxu0 %v215
    %v435 = vpop.f32.mrf.mxu0
    %v436 = vadd.f32 %v367, %v435
    %v437 = vpop.f32.mrf.mxu0
    %438 = vdwg.mxu0
    %v440 = vlaneseq
    %v441 = vshrl.u32 %v440, 7
    %v442 = vsub.s32 0, %v441
    %v443 = vrot.slane %v118, %v442
    %v446 = vsel %vm213, 0.0, 0
    %448 = vmatprep.subr.mxu0 0.0
    %449 = vmatpush1.msra.mxu0 0.0
    %450 = vmatprep.subr.mxu0 0.0
    %451 = vmatpush1.msra.mxu0 0.0
    %452 = vmatprep.subr.mxu0 0.0
    %453 = vmatpush1.msra.mxu0 0.0
    %454 = vmatprep.subr.mxu0 0.0
    %455 = vmatpush1.msra.mxu0 0.0
    %456 = vmatprep.subr.mxu0 0.0
    %457 = vmatpush1.msra.mxu0 0.0
    %458 = vmatprep.subr.mxu0 0.0
    %459 = vmatpush1.msra.mxu0 0.0
    %460 = vmatprep.subr.mxu0 0.0
    %461 = vmatpush1.msra.mxu0 0.0
    %462 = vmatprep.subr.mxu0 0.0
    %463 = vmatpush1.msra.mxu0 0.0
    %464 = vmatprep.subr.mxu0 0.0
    %465 = vmatpush1.msra.mxu0 0.0
    %466 = vmatprep.subr.mxu0 0.0
    %467 = vmatpush1.msra.mxu0 0.0
    %468 = vmatprep.subr.mxu0 0.0
    %469 = vmatpush1.msra.mxu0 0.0
    %470 = vmatprep.subr.mxu0 0.0
    %471 = vmatpush1.msra.mxu0 0.0
    %472 = vmatprep.subr.mxu0 0.0
    %473 = vmatpush1.msra.mxu0 %v107
    %474 = vmatprep.subr.mxu0 0.0
    %475 = vmatpush1.msra.mxu0 %v106
    %476 = vmatprep.subr.mxu0 0.0
    %477 = vmatpush1.msra.mxu0 %v105
    %478 = vmatprep.subr.mxu0 0.0
    %479 = vmatpush1.msra.mxu0 %v104
    %480 = vmatprep.subr.mxu0 0.0
    %481 = vmatpush2.msra.mxu0 0.0
    %482 = vmatprep.subr.mxu0 0.0
    %483 = vmatpush2.msra.mxu0 0.0
    %484 = vmatprep.subr.mxu0 0.0
    %485 = vmatpush2.msra.mxu0 0.0
    %486 = vmatprep.subr.mxu0 0.0
    %487 = vmatpush2.msra.mxu0 0.0
    %488 = vmatprep.subr.mxu0 0.0
    %489 = vmatpush2.msra.mxu0 0.0
    %490 = vmatprep.subr.mxu0 0.0
    %491 = vmatpush2.msra.mxu0 0.0
    %492 = vmatprep.subr.mxu0 0.0
    %493 = vmatpush2.msra.mxu0 0.0
    %494 = vmatprep.subr.mxu0 0.0
    %495 = vmatpush2.msra.mxu0 0.0
    %496 = vmatprep.subr.mxu0 0.0
    %497 = vmatpush2.msra.mxu0 0.0
    %498 = vmatprep.subr.mxu0 0.0
    %499 = vmatpush2.msra.mxu0 0.0
    %500 = vmatprep.subr.mxu0 0.0
    %501 = vmatpush2.msra.mxu0 0.0
    %502 = vmatprep.subr.mxu0 0.0
    %503 = vmatpush2.msra.mxu0 0.0
    %504 = vmatprep.subr.mxu0 0.0
    %505 = vmatpush2.msra.mxu0 0.0
    %506 = vmatprep.subr.mxu0 0.0
    %507 = vmatpush2.msra.mxu0 0.0
    %508 = vmatprep.subr.mxu0 0.0
    %509 = vmatpush2.msra.mxu0 0.0
    %510 = vmatprep.subr.mxu0 0.0
    %511 = vmatpush2.msra.mxu0 0.0
    %512 = vmatprep.mubr.f32.mxu0 0.0
    %513 = vmatmul.mubr.f32.gmra.mxu0 %v446
    %v514 = vpop.f32.mrf.mxu0
    %v515 = vadd.f32 %v443, %v514
    %v516 = vpop.f32.mrf.mxu0
    %517 = vdwg.mxu0
    %v519 = vlaneseq
    %v520 = vshrl.u32 %v519, 7
    %v521 = vsub.s32 0, %v520
    %v522 = vrot.slane %v120, %v521
    %524 = vmatprep.subr.mxu0 0.0
    %525 = vmatpush1.msra.mxu0 0.0
    %526 = vmatprep.subr.mxu0 0.0
    %527 = vmatpush1.msra.mxu0 0.0
    %528 = vmatprep.subr.mxu0 0.0
    %529 = vmatpush1.msra.mxu0 0.0
    %530 = vmatprep.subr.mxu0 0.0
    %531 = vmatpush1.msra.mxu0 0.0
    %532 = vmatprep.subr.mxu0 0.0
    %533 = vmatpush1.msra.mxu0 0.0
    %534 = vmatprep.subr.mxu0 0.0
    %535 = vmatpush1.msra.mxu0 0.0
    %536 = vmatprep.subr.mxu0 0.0
    %537 = vmatpush1.msra.mxu0 0.0
    %538 = vmatprep.subr.mxu0 0.0
    %539 = vmatpush1.msra.mxu0 0.0
    %540 = vmatprep.subr.mxu0 0.0
    %541 = vmatpush1.msra.mxu0 0.0
    %542 = vmatprep.subr.mxu0 0.0
    %543 = vmatpush1.msra.mxu0 0.0
    %544 = vmatprep.subr.mxu0 0.0
    %545 = vmatpush1.msra.mxu0 0.0
    %546 = vmatprep.subr.mxu0 0.0
    %547 = vmatpush1.msra.mxu0 0.0
    %548 = vmatprep.subr.mxu0 0.0
    %549 = vmatpush1.msra.mxu0 %v112
    %550 = vmatprep.subr.mxu0 0.0
    %551 = vmatpush1.msra.mxu0 %v111
    %552 = vmatprep.subr.mxu0 0.0
    %553 = vmatpush1.msra.mxu0 %v110
    %554 = vmatprep.subr.mxu0 0.0
    %555 = vmatpush1.msra.mxu0 %v109
    %556 = vmatprep.subr.mxu0 0.0
    %557 = vmatpush2.msra.mxu0 0.0
    %558 = vmatprep.subr.mxu0 0.0
    %559 = vmatpush2.msra.mxu0 0.0
    %560 = vmatprep.subr.mxu0 0.0
    %561 = vmatpush2.msra.mxu0 0.0
    %562 = vmatprep.subr.mxu0 0.0
    %563 = vmatpush2.msra.mxu0 0.0
    %564 = vmatprep.subr.mxu0 0.0
    %565 = vmatpush2.msra.mxu0 0.0
    %566 = vmatprep.subr.mxu0 0.0
    %567 = vmatpush2.msra.mxu0 0.0
    %568 = vmatprep.subr.mxu0 0.0
    %569 = vmatpush2.msra.mxu0 0.0
    %570 = vmatprep.subr.mxu0 0.0
    %571 = vmatpush2.msra.mxu0 0.0
    %572 = vmatprep.subr.mxu0 0.0
    %573 = vmatpush2.msra.mxu0 0.0
    %574 = vmatprep.subr.mxu0 0.0
    %575 = vmatpush2.msra.mxu0 0.0
    %576 = vmatprep.subr.mxu0 0.0
    %577 = vmatpush2.msra.mxu0 0.0
    %578 = vmatprep.subr.mxu0 0.0
    %579 = vmatpush2.msra.mxu0 0.0
    %580 = vmatprep.subr.mxu0 0.0
    %581 = vmatpush2.msra.mxu0 0.0
    %582 = vmatprep.subr.mxu0 0.0
    %583 = vmatpush2.msra.mxu0 0.0
    %584 = vmatprep.subr.mxu0 0.0
    %585 = vmatpush2.msra.mxu0 0.0
    %586 = vmatprep.subr.mxu0 0.0
    %587 = vmatpush2.msra.mxu0 0.0
    %588 = vmatprep.mubr.f32.mxu0 0.0
    %589 = vmatmul.mubr.f32.gmra.mxu0 %v446
    %v590 = vpop.f32.mrf.mxu0
    %v591 = vadd.f32 %v522, %v590
    %v592 = vpop.f32.mrf.mxu0
    %593 = vdwg.mxu0
    %v595 = vlaneseq
    %v596 = vshrl.u32 %v595, 7
    %v597 = vsub.s32 0, %v596
    %v598 = vrot.slane %v122, %v597
    %600 = vmatprep.subr.mxu0 0.0
    %601 = vmatpush1.msra.mxu0 0.0
    %602 = vmatprep.subr.mxu0 0.0
    %603 = vmatpush1.msra.mxu0 0.0
    %604 = vmatprep.subr.mxu0 0.0
    %605 = vmatpush1.msra.mxu0 0.0
    %606 = vmatprep.subr.mxu0 0.0
    %607 = vmatpush1.msra.mxu0 0.0
    %608 = vmatprep.subr.mxu0 0.0
    %609 = vmatpush1.msra.mxu0 0.0
    %610 = vmatprep.subr.mxu0 0.0
    %611 = vmatpush1.msra.mxu0 0.0
    %612 = vmatprep.subr.mxu0 0.0
    %613 = vmatpush1.msra.mxu0 0.0
    %614 = vmatprep.subr.mxu0 0.0
    %615 = vmatpush1.msra.mxu0 0.0
    %616 = vmatprep.subr.mxu0 0.0
    %617 = vmatpush1.msra.mxu0 0.0
    %618 = vmatprep.subr.mxu0 0.0
    %619 = vmatpush1.msra.mxu0 0.0
    %620 = vmatprep.subr.mxu0 0.0
    %621 = vmatpush1.msra.mxu0 0.0
    %622 = vmatprep.subr.mxu0 0.0
    %623 = vmatpush1.msra.mxu0 0.0
    %624 = vmatprep.subr.mxu0 0.0
    %625 = vmatpush1.msra.mxu0 %v117
    %626 = vmatprep.subr.mxu0 0.0
    %627 = vmatpush1.msra.mxu0 %v116
    %628 = vmatprep.subr.mxu0 0.0
    %629 = vmatpush1.msra.mxu0 %v115
    %630 = vmatprep.subr.mxu0 0.0
    %631 = vmatpush1.msra.mxu0 %v114
    %632 = vmatprep.subr.mxu0 0.0
    %633 = vmatpush2.msra.mxu0 0.0
    %634 = vmatprep.subr.mxu0 0.0
    %635 = vmatpush2.msra.mxu0 0.0
    %636 = vmatprep.subr.mxu0 0.0
    %637 = vmatpush2.msra.mxu0 0.0
    %638 = vmatprep.subr.mxu0 0.0
    %639 = vmatpush2.msra.mxu0 0.0
    %640 = vmatprep.subr.mxu0 0.0
    %641 = vmatpush2.msra.mxu0 0.0
    %642 = vmatprep.subr.mxu0 0.0
    %643 = vmatpush2.msra.mxu0 0.0
    %644 = vmatprep.subr.mxu0 0.0
    %645 = vmatpush2.msra.mxu0 0.0
    %646 = vmatprep.subr.mxu0 0.0
    %647 = vmatpush2.msra.mxu0 0.0
    %648 = vmatprep.subr.mxu0 0.0
    %649 = vmatpush2.msra.mxu0 0.0
    %650 = vmatprep.subr.mxu0 0.0
    %651 = vmatpush2.msra.mxu0 0.0
    %652 = vmatprep.subr.mxu0 0.0
    %653 = vmatpush2.msra.mxu0 0.0
    %654 = vmatprep.subr.mxu0 0.0
    %655 = vmatpush2.msra.mxu0 0.0
    %656 = vmatprep.subr.mxu0 0.0
    %657 = vmatpush2.msra.mxu0 0.0
    %658 = vmatprep.subr.mxu0 0.0
    %659 = vmatpush2.msra.mxu0 0.0
    %660 = vmatprep.subr.mxu0 0.0
    %661 = vmatpush2.msra.mxu0 0.0
    %662 = vmatprep.subr.mxu0 0.0
    %663 = vmatpush2.msra.mxu0 0.0
    %664 = vmatprep.mubr.f32.mxu0 0.0
    %665 = vmatmul.mubr.f32.gmra.mxu0 %v446
    %v666 = vpop.f32.mrf.mxu0
    %v667 = vadd.f32 %v598, %v666
    %v668 = vpop.f32.mrf.mxu0
    %669 = vdwg.mxu0
    %v670 = vadd.f32 %v284, %v515
    %v671 = vxor.u32 %v670, 2147483648
    %v672 = vmul.f32 %v671, 1.442695
    %v673 = vpow.pop %v672
    %v674 = vadd.f32 %v673, 1.0
    %v675 = vrcp.pop %v674
    %v676 = vmul.f32 1.0, %v675
    %v677 = vadd.f32 %v360, %v591
    %v678 = vxor.u32 %v677, 2147483648
    %v679 = vmul.f32 %v678, 1.442695
    %v680 = vpow.pop %v679
    %v681 = vadd.f32 %v680, 1.0
    %v682 = vrcp.pop %v681
    %v683 = vmul.f32 1.0, %v682
    %v684 = vmul.f32 %v676, %v667
    %v685 = vadd.f32 %v436, %v684
    %v686 = vtanh.pop %v685
    %v687 = vsub.f32 1.0, %v683
    %v688 = vmul.f32 %v687, %v686
    %v689 = vmul.f32 %v683, 0.0
    %v690 = vadd.f32 %v688, %v689
    %v692 = vlaneseq
    %v693 = vshrl.u32 %v692, 7
    %v694 = vsub.s32 0, %v693
    %v695 = vrot.slane %v123, %v694
    %v697 = vmul.f32 %v690, %v695
    %v698 = vsel %vm213, %v697, 0.0
    %699 = vadd.xlane.f32.xlu0 %v698
    %v700 = vpop.xlane.xlu0 %699
    %v702 = vlaneseq
    %v703 = vshrl.u32 %v702, 7
    %v704 = vsub.s32 0, %v703
    %v705 = vrot.slane %v124, %v704
    %v707 = vadd.f32 %v700, %v705
    %s708 = scalar_lea.vmem [#allocation3], 8
    %v709 = vld [vmem:[%s708] sm:$0xff]
    %v711 = vsel %vm132, %v709, 0
    %713 = vmatprep.subr.mxu0 0.0
    %714 = vmatpush1.msra.mxu0 0.0
    %715 = vmatprep.subr.mxu0 0.0
    %716 = vmatpush1.msra.mxu0 0.0
    %717 = vmatprep.subr.mxu0 0.0
    %718 = vmatpush1.msra.mxu0 0.0
    %719 = vmatprep.subr.mxu0 0.0
    %720 = vmatpush1.msra.mxu0 0.0
    %721 = vmatprep.subr.mxu0 0.0
    %722 = vmatpush1.msra.mxu0 0.0
    %723 = vmatprep.subr.mxu0 0.0
    %724 = vmatpush1.msra.mxu0 0.0
    %725 = vmatprep.subr.mxu0 0.0
    %726 = vmatpush1.msra.mxu0 0.0
    %727 = vmatprep.subr.mxu0 0.0
    %728 = vmatpush1.msra.mxu0 0.0
    %729 = vmatprep.subr.mxu0 0.0
    %730 = vmatpush1.msra.mxu0 0.0
    %731 = vmatprep.subr.mxu0 0.0
    %732 = vmatpush1.msra.mxu0 0.0
    %733 = vmatprep.subr.mxu0 0.0
    %734 = vmatpush1.msra.mxu0 0.0
    %735 = vmatprep.subr.mxu0 0.0
    %736 = vmatpush1.msra.mxu0 0.0
    %737 = vmatprep.subr.mxu0 0.0
    %738 = vmatpush1.msra.mxu0 0.0
    %739 = vmatprep.subr.mxu0 0.0
    %740 = vmatpush1.msra.mxu0 0.0
    %741 = vmatprep.subr.mxu0 0.0
    %742 = vmatpush1.msra.mxu0 %v83
    %743 = vmatprep.subr.mxu0 0.0
    %744 = vmatpush1.msra.mxu0 %v82
    %745 = vmatprep.subr.mxu0 0.0
    %746 = vmatpush2.msra.mxu0 0.0
    %747 = vmatprep.subr.mxu0 0.0
    %748 = vmatpush2.msra.mxu0 0.0
    %749 = vmatprep.subr.mxu0 0.0
    %750 = vmatpush2.msra.mxu0 0.0
    %751 = vmatprep.subr.mxu0 0.0
    %752 = vmatpush2.msra.mxu0 0.0
    %753 = vmatprep.subr.mxu0 0.0
    %754 = vmatpush2.msra.mxu0 0.0
    %755 = vmatprep.subr.mxu0 0.0
    %756 = vmatpush2.msra.mxu0 0.0
    %757 = vmatprep.subr.mxu0 0.0
    %758 = vmatpush2.msra.mxu0 0.0
    %759 = vmatprep.subr.mxu0 0.0
    %760 = vmatpush2.msra.mxu0 0.0
    %761 = vmatprep.subr.mxu0 0.0
    %762 = vmatpush2.msra.mxu0 0.0
    %763 = vmatprep.subr.mxu0 0.0
    %764 = vmatpush2.msra.mxu0 0.0
    %765 = vmatprep.subr.mxu0 0.0
    %766 = vmatpush2.msra.mxu0 0.0
    %767 = vmatprep.subr.mxu0 0.0
    %768 = vmatpush2.msra.mxu0 0.0
    %769 = vmatprep.subr.mxu0 0.0
    %770 = vmatpush2.msra.mxu0 0.0
    %771 = vmatprep.subr.mxu0 0.0
    %772 = vmatpush2.msra.mxu0 0.0
    %773 = vmatprep.subr.mxu0 0.0
    %774 = vmatpush2.msra.mxu0 0.0
    %775 = vmatprep.subr.mxu0 0.0
    %776 = vmatpush2.msra.mxu0 0.0
    %777 = vmatprep.mubr.f32.mxu0 0.0
    %778 = vmatmul.mubr.f32.gmra.mxu0 %v711
    %v779 = vpop.f32.mrf.mxu0
    %v780 = vadd.f32 %v130, %v779
    %v781 = vpop.f32.mrf.mxu0
    %782 = vdwg.mxu0
    %v783 = vmax.f32 %v780, 0.0
    %v785 = vsel %vm213, %v783, 0
    %787 = vmatprep.subr.mxu0 0.0
    %788 = vmatpush1.msra.mxu0 0.0
    %789 = vmatprep.subr.mxu0 0.0
    %790 = vmatpush1.msra.mxu0 0.0
    %791 = vmatprep.subr.mxu0 0.0
    %792 = vmatpush1.msra.mxu0 0.0
    %793 = vmatprep.subr.mxu0 0.0
    %794 = vmatpush1.msra.mxu0 0.0
    %795 = vmatprep.subr.mxu0 0.0
    %796 = vmatpush1.msra.mxu0 0.0
    %797 = vmatprep.subr.mxu0 0.0
    %798 = vmatpush1.msra.mxu0 0.0
    %799 = vmatprep.subr.mxu0 0.0
    %800 = vmatpush1.msra.mxu0 0.0
    %801 = vmatprep.subr.mxu0 0.0
    %802 = vmatpush1.msra.mxu0 0.0
    %803 = vmatprep.subr.mxu0 0.0
    %804 = vmatpush1.msra.mxu0 0.0
    %805 = vmatprep.subr.mxu0 0.0
    %806 = vmatpush1.msra.mxu0 0.0
    %807 = vmatprep.subr.mxu0 0.0
    %808 = vmatpush1.msra.mxu0 0.0
    %809 = vmatprep.subr.mxu0 0.0
    %810 = vmatpush1.msra.mxu0 0.0
    %811 = vmatprep.subr.mxu0 0.0
    %812 = vmatpush1.msra.mxu0 %v88
    %813 = vmatprep.subr.mxu0 0.0
    %814 = vmatpush1.msra.mxu0 %v87
    %815 = vmatprep.subr.mxu0 0.0
    %816 = vmatpush1.msra.mxu0 %v86
    %817 = vmatprep.subr.mxu0 0.0
    %818 = vmatpush1.msra.mxu0 %v85
    %819 = vmatprep.subr.mxu0 0.0
    %820 = vmatpush2.msra.mxu0 0.0
    %821 = vmatprep.subr.mxu0 0.0
    %822 = vmatpush2.msra.mxu0 0.0
    %823 = vmatprep.subr.mxu0 0.0
    %824 = vmatpush2.msra.mxu0 0.0
    %825 = vmatprep.subr.mxu0 0.0
    %826 = vmatpush2.msra.mxu0 0.0
    %827 = vmatprep.subr.mxu0 0.0
    %828 = vmatpush2.msra.mxu0 0.0
    %829 = vmatprep.subr.mxu0 0.0
    %830 = vmatpush2.msra.mxu0 0.0
    %831 = vmatprep.subr.mxu0 0.0
    %832 = vmatpush2.msra.mxu0 0.0
    %833 = vmatprep.subr.mxu0 0.0
    %834 = vmatpush2.msra.mxu0 0.0
    %835 = vmatprep.subr.mxu0 0.0
    %836 = vmatpush2.msra.mxu0 0.0
    %837 = vmatprep.subr.mxu0 0.0
    %838 = vmatpush2.msra.mxu0 0.0
    %839 = vmatprep.subr.mxu0 0.0
    %840 = vmatpush2.msra.mxu0 0.0
    %841 = vmatprep.subr.mxu0 0.0
    %842 = vmatpush2.msra.mxu0 0.0
    %843 = vmatprep.subr.mxu0 0.0
    %844 = vmatpush2.msra.mxu0 0.0
    %845 = vmatprep.subr.mxu0 0.0
    %846 = vmatpush2.msra.mxu0 0.0
    %847 = vmatprep.subr.mxu0 0.0
    %848 = vmatpush2.msra.mxu0 0.0
    %849 = vmatprep.subr.mxu0 0.0
    %850 = vmatpush2.msra.mxu0 0.0
    %851 = vmatprep.mubr.f32.mxu0 0.0
    %852 = vmatmul.mubr.f32.gmra.mxu0 %v785
    %v853 = vpop.f32.mrf.mxu0
    %v854 = vadd.f32 %v211, %v853
    %v855 = vpop.f32.mrf.mxu0
    %856 = vdwg.mxu0
    %857 = vmatprep.subr.mxu0 0.0
    %858 = vmatpush1.msra.mxu0 0.0
    %859 = vmatprep.subr.mxu0 0.0
    %860 = vmatpush1.msra.mxu0 0.0
    %861 = vmatprep.subr.mxu0 0.0
    %862 = vmatpush1.msra.mxu0 0.0
    %863 = vmatprep.subr.mxu0 0.0
    %864 = vmatpush1.msra.mxu0 0.0
    %865 = vmatprep.subr.mxu0 0.0
    %866 = vmatpush1.msra.mxu0 0.0
    %867 = vmatprep.subr.mxu0 0.0
    %868 = vmatpush1.msra.mxu0 0.0
    %869 = vmatprep.subr.mxu0 0.0
    %870 = vmatpush1.msra.mxu0 0.0
    %871 = vmatprep.subr.mxu0 0.0
    %872 = vmatpush1.msra.mxu0 0.0
    %873 = vmatprep.subr.mxu0 0.0
    %874 = vmatpush1.msra.mxu0 0.0
    %875 = vmatprep.subr.mxu0 0.0
    %876 = vmatpush1.msra.mxu0 0.0
    %877 = vmatprep.subr.mxu0 0.0
    %878 = vmatpush1.msra.mxu0 0.0
    %879 = vmatprep.subr.mxu0 0.0
    %880 = vmatpush1.msra.mxu0 0.0
    %881 = vmatprep.subr.mxu0 0.0
    %882 = vmatpush1.msra.mxu0 %v93
    %883 = vmatprep.subr.mxu0 0.0
    %884 = vmatpush1.msra.mxu0 %v92
    %885 = vmatprep.subr.mxu0 0.0
    %886 = vmatpush1.msra.mxu0 %v91
    %887 = vmatprep.subr.mxu0 0.0
    %888 = vmatpush1.msra.mxu0 %v90
    %889 = vmatprep.subr.mxu0 0.0
    %890 = vmatpush2.msra.mxu0 0.0
    %891 = vmatprep.subr.mxu0 0.0
    %892 = vmatpush2.msra.mxu0 0.0
    %893 = vmatprep.subr.mxu0 0.0
    %894 = vmatpush2.msra.mxu0 0.0
    %895 = vmatprep.subr.mxu0 0.0
    %896 = vmatpush2.msra.mxu0 0.0
    %897 = vmatprep.subr.mxu0 0.0
    %898 = vmatpush2.msra.mxu0 0.0
    %899 = vmatprep.subr.mxu0 0.0
    %900 = vmatpush2.msra.mxu0 0.0
    %901 = vmatprep.subr.mxu0 0.0
    %902 = vmatpush2.msra.mxu0 0.0
    %903 = vmatprep.subr.mxu0 0.0
    %904 = vmatpush2.msra.mxu0 0.0
    %905 = vmatprep.subr.mxu0 0.0
    %906 = vmatpush2.msra.mxu0 0.0
    %907 = vmatprep.subr.mxu0 0.0
    %908 = vmatpush2.msra.mxu0 0.0
    %909 = vmatprep.subr.mxu0 0.0
    %910 = vmatpush2.msra.mxu0 0.0
    %911 = vmatprep.subr.mxu0 0.0
    %912 = vmatpush2.msra.mxu0 0.0
    %913 = vmatprep.subr.mxu0 0.0
    %914 = vmatpush2.msra.mxu0 0.0
    %915 = vmatprep.subr.mxu0 0.0
    %916 = vmatpush2.msra.mxu0 0.0
    %917 = vmatprep.subr.mxu0 0.0
    %918 = vmatpush2.msra.mxu0 0.0
    %919 = vmatprep.subr.mxu0 0.0
    %920 = vmatpush2.msra.mxu0 0.0
    %921 = vmatprep.mubr.f32.mxu0 0.0
    %922 = vmatmul.mubr.f32.gmra.mxu0 %v785
    %v923 = vpop.f32.mrf.mxu0
    %v924 = vadd.f32 %v291, %v923
    %v925 = vpop.f32.mrf.mxu0
    %926 = vdwg.mxu0
    %927 = vmatprep.subr.mxu0 0.0
    %928 = vmatpush1.msra.mxu0 0.0
    %929 = vmatprep.subr.mxu0 0.0
    %930 = vmatpush1.msra.mxu0 0.0
    %931 = vmatprep.subr.mxu0 0.0
    %932 = vmatpush1.msra.mxu0 0.0
    %933 = vmatprep.subr.mxu0 0.0
    %934 = vmatpush1.msra.mxu0 0.0
    %935 = vmatprep.subr.mxu0 0.0
    %936 = vmatpush1.msra.mxu0 0.0
    %937 = vmatprep.subr.mxu0 0.0
    %938 = vmatpush1.msra.mxu0 0.0
    %939 = vmatprep.subr.mxu0 0.0
    %940 = vmatpush1.msra.mxu0 0.0
    %941 = vmatprep.subr.mxu0 0.0
    %942 = vmatpush1.msra.mxu0 0.0
    %943 = vmatprep.subr.mxu0 0.0
    %944 = vmatpush1.msra.mxu0 0.0
    %945 = vmatprep.subr.mxu0 0.0
    %946 = vmatpush1.msra.mxu0 0.0
    %947 = vmatprep.subr.mxu0 0.0
    %948 = vmatpush1.msra.mxu0 0.0
    %949 = vmatprep.subr.mxu0 0.0
    %950 = vmatpush1.msra.mxu0 0.0
    %951 = vmatprep.subr.mxu0 0.0
    %952 = vmatpush1.msra.mxu0 %v98
    %953 = vmatprep.subr.mxu0 0.0
    %954 = vmatpush1.msra.mxu0 %v97
    %955 = vmatprep.subr.mxu0 0.0
    %956 = vmatpush1.msra.mxu0 %v96
    %957 = vmatprep.subr.mxu0 0.0
    %958 = vmatpush1.msra.mxu0 %v95
    %959 = vmatprep.subr.mxu0 0.0
    %960 = vmatpush2.msra.mxu0 0.0
    %961 = vmatprep.subr.mxu0 0.0
    %962 = vmatpush2.msra.mxu0 0.0
    %963 = vmatprep.subr.mxu0 0.0
    %964 = vmatpush2.msra.mxu0 0.0
    %965 = vmatprep.subr.mxu0 0.0
    %966 = vmatpush2.msra.mxu0 0.0
    %967 = vmatprep.subr.mxu0 0.0
    %968 = vmatpush2.msra.mxu0 0.0
    %969 = vmatprep.subr.mxu0 0.0
    %970 = vmatpush2.msra.mxu0 0.0
    %971 = vmatprep.subr.mxu0 0.0
    %972 = vmatpush2.msra.mxu0 0.0
    %973 = vmatprep.subr.mxu0 0.0
    %974 = vmatpush2.msra.mxu0 0.0
    %975 = vmatprep.subr.mxu0 0.0
    %976 = vmatpush2.msra.mxu0 0.0
    %977 = vmatprep.subr.mxu0 0.0
    %978 = vmatpush2.msra.mxu0 0.0
    %979 = vmatprep.subr.mxu0 0.0
    %980 = vmatpush2.msra.mxu0 0.0
    %981 = vmatprep.subr.mxu0 0.0
    %982 = vmatpush2.msra.mxu0 0.0
    %983 = vmatprep.subr.mxu0 0.0
    %984 = vmatpush2.msra.mxu0 0.0
    %985 = vmatprep.subr.mxu0 0.0
    %986 = vmatpush2.msra.mxu0 0.0
    %987 = vmatprep.subr.mxu0 0.0
    %988 = vmatpush2.msra.mxu0 0.0
    %989 = vmatprep.subr.mxu0 0.0
    %990 = vmatpush2.msra.mxu0 0.0
    %991 = vmatprep.mubr.f32.mxu0 0.0
    %992 = vmatmul.mubr.f32.gmra.mxu0 %v785
    %v993 = vpop.f32.mrf.mxu0
    %v994 = vadd.f32 %v367, %v993
    %v995 = vpop.f32.mrf.mxu0
    %996 = vdwg.mxu0
    %v998 = vsel %vm213, %v690, 0
    %1000 = vmatprep.subr.mxu0 0.0
    %1001 = vmatpush1.msra.mxu0 0.0
    %1002 = vmatprep.subr.mxu0 0.0
    %1003 = vmatpush1.msra.mxu0 0.0
    %1004 = vmatprep.subr.mxu0 0.0
    %1005 = vmatpush1.msra.mxu0 0.0
    %1006 = vmatprep.subr.mxu0 0.0
    %1007 = vmatpush1.msra.mxu0 0.0
    %1008 = vmatprep.subr.mxu0 0.0
    %1009 = vmatpush1.msra.mxu0 0.0
    %1010 = vmatprep.subr.mxu0 0.0
    %1011 = vmatpush1.msra.mxu0 0.0
    %1012 = vmatprep.subr.mxu0 0.0
    %1013 = vmatpush1.msra.mxu0 0.0
    %1014 = vmatprep.subr.mxu0 0.0
    %1015 = vmatpush1.msra.mxu0 0.0
    %1016 = vmatprep.subr.mxu0 0.0
    %1017 = vmatpush1.msra.mxu0 0.0
    %1018 = vmatprep.subr.mxu0 0.0
    %1019 = vmatpush1.msra.mxu0 0.0
    %1020 = vmatprep.subr.mxu0 0.0
    %1021 = vmatpush1.msra.mxu0 0.0
    %1022 = vmatprep.subr.mxu0 0.0
    %1023 = vmatpush1.msra.mxu0 0.0
    %1024 = vmatprep.subr.mxu0 0.0
    %1025 = vmatpush1.msra.mxu0 %v107
    %1026 = vmatprep.subr.mxu0 0.0
    %1027 = vmatpush1.msra.mxu0 %v106
    %1028 = vmatprep.subr.mxu0 0.0
    %1029 = vmatpush1.msra.mxu0 %v105
    %1030 = vmatprep.subr.mxu0 0.0
    %1031 = vmatpush1.msra.mxu0 %v104
    %1032 = vmatprep.subr.mxu0 0.0
    %1033 = vmatpush2.msra.mxu0 0.0
    %1034 = vmatprep.subr.mxu0 0.0
    %1035 = vmatpush2.msra.mxu0 0.0
    %1036 = vmatprep.subr.mxu0 0.0
    %1037 = vmatpush2.msra.mxu0 0.0
    %1038 = vmatprep.subr.mxu0 0.0
    %1039 = vmatpush2.msra.mxu0 0.0
    %1040 = vmatprep.subr.mxu0 0.0
    %1041 = vmatpush2.msra.mxu0 0.0
    %1042 = vmatprep.subr.mxu0 0.0
    %1043 = vmatpush2.msra.mxu0 0.0
    %1044 = vmatprep.subr.mxu0 0.0
    %1045 = vmatpush2.msra.mxu0 0.0
    %1046 = vmatprep.subr.mxu0 0.0
    %1047 = vmatpush2.msra.mxu0 0.0
    %1048 = vmatprep.subr.mxu0 0.0
    %1049 = vmatpush2.msra.mxu0 0.0
    %1050 = vmatprep.subr.mxu0 0.0
    %1051 = vmatpush2.msra.mxu0 0.0
    %1052 = vmatprep.subr.mxu0 0.0
    %1053 = vmatpush2.msra.mxu0 0.0
    %1054 = vmatprep.subr.mxu0 0.0
    %1055 = vmatpush2.msra.mxu0 0.0
    %1056 = vmatprep.subr.mxu0 0.0
    %1057 = vmatpush2.msra.mxu0 0.0
    %1058 = vmatprep.subr.mxu0 0.0
    %1059 = vmatpush2.msra.mxu0 0.0
    %1060 = vmatprep.subr.mxu0 0.0
    %1061 = vmatpush2.msra.mxu0 0.0
    %1062 = vmatprep.subr.mxu0 0.0
    %1063 = vmatpush2.msra.mxu0 0.0
    %1064 = vmatprep.mubr.f32.mxu0 0.0
    %1065 = vmatmul.mubr.f32.gmra.mxu0 %v998
    %v1066 = vpop.f32.mrf.mxu0
    %v1067 = vadd.f32 %v443, %v1066
    %v1068 = vpop.f32.mrf.mxu0
    %1069 = vdwg.mxu0
    %1070 = vmatprep.subr.mxu0 0.0
    %1071 = vmatpush1.msra.mxu0 0.0
    %1072 = vmatprep.subr.mxu0 0.0
    %1073 = vmatpush1.msra.mxu0 0.0
    %1074 = vmatprep.subr.mxu0 0.0
    %1075 = vmatpush1.msra.mxu0 0.0
    %1076 = vmatprep.subr.mxu0 0.0
    %1077 = vmatpush1.msra.mxu0 0.0
    %1078 = vmatprep.subr.mxu0 0.0
    %1079 = vmatpush1.msra.mxu0 0.0
    %1080 = vmatprep.subr.mxu0 0.0
    %1081 = vmatpush1.msra.mxu0 0.0
    %1082 = vmatprep.subr.mxu0 0.0
    %1083 = vmatpush1.msra.mxu0 0.0
    %1084 = vmatprep.subr.mxu0 0.0
    %1085 = vmatpush1.msra.mxu0 0.0
    %1086 = vmatprep.subr.mxu0 0.0
    %1087 = vmatpush1.msra.mxu0 0.0
    %1088 = vmatprep.subr.mxu0 0.0
    %1089 = vmatpush1.msra.mxu0 0.0
    %1090 = vmatprep.subr.mxu0 0.0
    %1091 = vmatpush1.msra.mxu0 0.0
    %1092 = vmatprep.subr.mxu0 0.0
    %1093 = vmatpush1.msra.mxu0 0.0
    %1094 = vmatprep.subr.mxu0 0.0
    %1095 = vmatpush1.msra.mxu0 %v112
    %1096 = vmatprep.subr.mxu0 0.0
    %1097 = vmatpush1.msra.mxu0 %v111
    %1098 = vmatprep.subr.mxu0 0.0
    %1099 = vmatpush1.msra.mxu0 %v110
    %1100 = vmatprep.subr.mxu0 0.0
    %1101 = vmatpush1.msra.mxu0 %v109
    %1102 = vmatprep.subr.mxu0 0.0
    %1103 = vmatpush2.msra.mxu0 0.0
    %1104 = vmatprep.subr.mxu0 0.0
    %1105 = vmatpush2.msra.mxu0 0.0
    %1106 = vmatprep.subr.mxu0 0.0
    %1107 = vmatpush2.msra.mxu0 0.0
    %1108 = vmatprep.subr.mxu0 0.0
    %1109 = vmatpush2.msra.mxu0 0.0
    %1110 = vmatprep.subr.mxu0 0.0
    %1111 = vmatpush2.msra.mxu0 0.0
    %1112 = vmatprep.subr.mxu0 0.0
    %1113 = vmatpush2.msra.mxu0 0.0
    %1114 = vmatprep.subr.mxu0 0.0
    %1115 = vmatpush2.msra.mxu0 0.0
    %1116 = vmatprep.subr.mxu0 0.0
    %1117 = vmatpush2.msra.mxu0 0.0
    %1118 = vmatprep.subr.mxu0 0.0
    %1119 = vmatpush2.msra.mxu0 0.0
    %1120 = vmatprep.subr.mxu0 0.0
    %1121 = vmatpush2.msra.mxu0 0.0
    %1122 = vmatprep.subr.mxu0 0.0
    %1123 = vmatpush2.msra.mxu0 0.0
    %1124 = vmatprep.subr.mxu0 0.0
    %1125 = vmatpush2.msra.mxu0 0.0
    %1126 = vmatprep.subr.mxu0 0.0
    %1127 = vmatpush2.msra.mxu0 0.0
    %1128 = vmatprep.subr.mxu0 0.0
    %1129 = vmatpush2.msra.mxu0 0.0
    %1130 = vmatprep.subr.mxu0 0.0
    %1131 = vmatpush2.msra.mxu0 0.0
    %1132 = vmatprep.subr.mxu0 0.0
    %1133 = vmatpush2.msra.mxu0 0.0
    %1134 = vmatprep.mubr.f32.mxu0 0.0
    %1135 = vmatmul.mubr.f32.gmra.mxu0 %v998
    %v1136 = vpop.f32.mrf.mxu0
    %v1137 = vadd.f32 %v522, %v1136
    %v1138 = vpop.f32.mrf.mxu0
    %1139 = vdwg.mxu0
    %1140 = vmatprep.subr.mxu0 0.0
    %1141 = vmatpush1.msra.mxu0 0.0
    %1142 = vmatprep.subr.mxu0 0.0
    %1143 = vmatpush1.msra.mxu0 0.0
    %1144 = vmatprep.subr.mxu0 0.0
    %1145 = vmatpush1.msra.mxu0 0.0
    %1146 = vmatprep.subr.mxu0 0.0
    %1147 = vmatpush1.msra.mxu0 0.0
    %1148 = vmatprep.subr.mxu0 0.0
    %1149 = vmatpush1.msra.mxu0 0.0
    %1150 = vmatprep.subr.mxu0 0.0
    %1151 = vmatpush1.msra.mxu0 0.0
    %1152 = vmatprep.subr.mxu0 0.0
    %1153 = vmatpush1.msra.mxu0 0.0
    %1154 = vmatprep.subr.mxu0 0.0
    %1155 = vmatpush1.msra.mxu0 0.0
    %1156 = vmatprep.subr.mxu0 0.0
    %1157 = vmatpush1.msra.mxu0 0.0
    %1158 = vmatprep.subr.mxu0 0.0
    %1159 = vmatpush1.msra.mxu0 0.0
    %1160 = vmatprep.subr.mxu0 0.0
    %1161 = vmatpush1.msra.mxu0 0.0
    %1162 = vmatprep.subr.mxu0 0.0
    %1163 = vmatpush1.msra.mxu0 0.0
    %1164 = vmatprep.subr.mxu0 0.0
    %1165 = vmatpush1.msra.mxu0 %v117
    %1166 = vmatprep.subr.mxu0 0.0
    %1167 = vmatpush1.msra.mxu0 %v116
    %1168 = vmatprep.subr.mxu0 0.0
    %1169 = vmatpush1.msra.mxu0 %v115
    %1170 = vmatprep.subr.mxu0 0.0
    %1171 = vmatpush1.msra.mxu0 %v114
    %1172 = vmatprep.subr.mxu0 0.0
    %1173 = vmatpush2.msra.mxu0 0.0
    %1174 = vmatprep.subr.mxu0 0.0
    %1175 = vmatpush2.msra.mxu0 0.0
    %1176 = vmatprep.subr.mxu0 0.0
    %1177 = vmatpush2.msra.mxu0 0.0
    %1178 = vmatprep.subr.mxu0 0.0
    %1179 = vmatpush2.msra.mxu0 0.0
    %1180 = vmatprep.subr.mxu0 0.0
    %1181 = vmatpush2.msra.mxu0 0.0
    %1182 = vmatprep.subr.mxu0 0.0
    %1183 = vmatpush2.msra.mxu0 0.0
    %1184 = vmatprep.subr.mxu0 0.0
    %1185 = vmatpush2.msra.mxu0 0.0
    %1186 = vmatprep.subr.mxu0 0.0
    %1187 = vmatpush2.msra.mxu0 0.0
    %1188 = vmatprep.subr.mxu0 0.0
    %1189 = vmatpush2.msra.mxu0 0.0
    %1190 = vmatprep.subr.mxu0 0.0
    %1191 = vmatpush2.msra.mxu0 0.0
    %1192 = vmatprep.subr.mxu0 0.0
    %1193 = vmatpush2.msra.mxu0 0.0
    %1194 = vmatprep.subr.mxu0 0.0
    %1195 = vmatpush2.msra.mxu0 0.0
    %1196 = vmatprep.subr.mxu0 0.0
    %1197 = vmatpush2.msra.mxu0 0.0
    %1198 = vmatprep.subr.mxu0 0.0
    %1199 = vmatpush2.msra.mxu0 0.0
    %1200 = vmatprep.subr.mxu0 0.0
    %1201 = vmatpush2.msra.mxu0 0.0
    %1202 = vmatprep.subr.mxu0 0.0
    %1203 = vmatpush2.msra.mxu0 0.0
    %1204 = vmatprep.mubr.f32.mxu0 0.0
    %1205 = vmatmul.mubr.f32.gmra.mxu0 %v998
    %v1206 = vpop.f32.mrf.mxu0
    %v1207 = vadd.f32 %v598, %v1206
    %v1208 = vpop.f32.mrf.mxu0
    %1209 = vdwg.mxu0
    %v1210 = vadd.f32 %v854, %v1067
    %v1211 = vxor.u32 %v1210, 2147483648
    %v1212 = vmul.f32 %v1211, 1.442695
    %v1213 = vpow.pop %v1212
    %v1214 = vadd.f32 %v1213, 1.0
    %v1215 = vrcp.pop %v1214
    %v1216 = vmul.f32 1.0, %v1215
    %v1217 = vadd.f32 %v924, %v1137
    %v1218 = vxor.u32 %v1217, 2147483648
    %v1219 = vmul.f32 %v1218, 1.442695
    %v1220 = vpow.pop %v1219
    %v1221 = vadd.f32 %v1220, 1.0
    %v1222 = vrcp.pop %v1221
    %v1223 = vmul.f32 1.0, %v1222
    %v1224 = vmul.f32 %v1216, %v1207
    %v1225 = vadd.f32 %v994, %v1224
    %v1226 = vtanh.pop %v1225
    %v1227 = vsub.f32 1.0, %v1223
    %v1228 = vmul.f32 %v1227, %v1226
    %v1229 = vmul.f32 %v1223, %v690
    %v1230 = vadd.f32 %v1228, %v1229
    %v1231 = vmul.f32 %v1230, %v695
    %v1232 = vsel %vm213, %v1231, 0.0
    %1233 = vadd.xlane.f32.xlu0 %v1232
    %v1234 = vpop.xlane.xlu0 %1233
    %v1235 = vadd.f32 %v1234, %v705
    %s1236 = scalar_lea.vmem [#allocation3], 16
    %v1237 = vld [vmem:[%s1236] sm:$0xff]
    %v1239 = vsel %vm132, %v1237, 0
    %1241 = vmatprep.subr.mxu0 0.0
    %1242 = vmatpush1.msra.mxu0 0.0
    %1243 = vmatprep.subr.mxu0 0.0
    %1244 = vmatpush1.msra.mxu0 0.0
    %1245 = vmatprep.subr.mxu0 0.0
    %1246 = vmatpush1.msra.mxu0 0.0
    %1247 = vmatprep.subr.mxu0 0.0
    %1248 = vmatpush1.msra.mxu0 0.0
    %1249 = vmatprep.subr.mxu0 0.0
    %1250 = vmatpush1.msra.mxu0 0.0
    %1251 = vmatprep.subr.mxu0 0.0
    %1252 = vmatpush1.msra.mxu0 0.0
    %1253 = vmatprep.subr.mxu0 0.0
    %1254 = vmatpush1.msra.mxu0 0.0
    %1255 = vmatprep.subr.mxu0 0.0
    %1256 = vmatpush1.msra.mxu0 0.0
    %1257 = vmatprep.subr.mxu0 0.0
    %1258 = vmatpush1.msra.mxu0 0.0
    %1259 = vmatprep.subr.mxu0 0.0
    %1260 = vmatpush1.msra.mxu0 0.0
    %1261 = vmatprep.subr.mxu0 0.0
    %1262 = vmatpush1.msra.mxu0 0.0
    %1263 = vmatprep.subr.mxu0 0.0
    %1264 = vmatpush1.msra.mxu0 0.0
    %1265 = vmatprep.subr.mxu0 0.0
    %1266 = vmatpush1.msra.mxu0 0.0
    %1267 = vmatprep.subr.mxu0 0.0
    %1268 = vmatpush1.msra.mxu0 0.0
    %1269 = vmatprep.subr.mxu0 0.0
    %1270 = vmatpush1.msra.mxu0 %v83
    %1271 = vmatprep.subr.mxu0 0.0
    %1272 = vmatpush1.msra.mxu0 %v82
    %1273 = vmatprep.subr.mxu0 0.0
    %1274 = vmatpush2.msra.mxu0 0.0
    %1275 = vmatprep.subr.mxu0 0.0
    %1276 = vmatpush2.msra.mxu0 0.0
    %1277 = vmatprep.subr.mxu0 0.0
    %1278 = vmatpush2.msra.mxu0 0.0
    %1279 = vmatprep.subr.mxu0 0.0
    %1280 = vmatpush2.msra.mxu0 0.0
    %1281 = vmatprep.subr.mxu0 0.0
    %1282 = vmatpush2.msra.mxu0 0.0
    %1283 = vmatprep.subr.mxu0 0.0
    %1284 = vmatpush2.msra.mxu0 0.0
    %1285 = vmatprep.subr.mxu0 0.0
    %1286 = vmatpush2.msra.mxu0 0.0
    %1287 = vmatprep.subr.mxu0 0.0
    %1288 = vmatpush2.msra.mxu0 0.0
    %1289 = vmatprep.subr.mxu0 0.0
    %1290 = vmatpush2.msra.mxu0 0.0
    %1291 = vmatprep.subr.mxu0 0.0
    %1292 = vmatpush2.msra.mxu0 0.0
    %1293 = vmatprep.subr.mxu0 0.0
    %1294 = vmatpush2.msra.mxu0 0.0
    %1295 = vmatprep.subr.mxu0 0.0
    %1296 = vmatpush2.msra.mxu0 0.0
    %1297 = vmatprep.subr.mxu0 0.0
    %1298 = vmatpush2.msra.mxu0 0.0
    %1299 = vmatprep.subr.mxu0 0.0
    %1300 = vmatpush2.msra.mxu0 0.0
    %1301 = vmatprep.subr.mxu0 0.0
    %1302 = vmatpush2.msra.mxu0 0.0
    %1303 = vmatprep.subr.mxu0 0.0
    %1304 = vmatpush2.msra.mxu0 0.0
    %1305 = vmatprep.mubr.f32.mxu0 0.0
    %1306 = vmatmul.mubr.f32.gmra.mxu0 %v1239
    %v1307 = vpop.f32.mrf.mxu0
    %v1308 = vadd.f32 %v130, %v1307
    %v1309 = vpop.f32.mrf.mxu0
    %1310 = vdwg.mxu0
    %v1311 = vmax.f32 %v1308, 0.0
    %v1313 = vsel %vm213, %v1311, 0
    %1315 = vmatprep.subr.mxu0 0.0
    %1316 = vmatpush1.msra.mxu0 0.0
    %1317 = vmatprep.subr.mxu0 0.0
    %1318 = vmatpush1.msra.mxu0 0.0
    %1319 = vmatprep.subr.mxu0 0.0
    %1320 = vmatpush1.msra.mxu0 0.0
    %1321 = vmatprep.subr.mxu0 0.0
    %1322 = vmatpush1.msra.mxu0 0.0
    %1323 = vmatprep.subr.mxu0 0.0
    %1324 = vmatpush1.msra.mxu0 0.0
    %1325 = vmatprep.subr.mxu0 0.0
    %1326 = vmatpush1.msra.mxu0 0.0
    %1327 = vmatprep.subr.mxu0 0.0
    %1328 = vmatpush1.msra.mxu0 0.0
    %1329 = vmatprep.subr.mxu0 0.0
    %1330 = vmatpush1.msra.mxu0 0.0
    %1331 = vmatprep.subr.mxu0 0.0
    %1332 = vmatpush1.msra.mxu0 0.0
    %1333 = vmatprep.subr.mxu0 0.0
    %1334 = vmatpush1.msra.mxu0 0.0
    %1335 = vmatprep.subr.mxu0 0.0
    %1336 = vmatpush1.msra.mxu0 0.0
    %1337 = vmatprep.subr.mxu0 0.0
    %1338 = vmatpush1.msra.mxu0 0.0
    %1339 = vmatprep.subr.mxu0 0.0
    %1340 = vmatpush1.msra.mxu0 %v88
    %1341 = vmatprep.subr.mxu0 0.0
    %1342 = vmatpush1.msra.mxu0 %v87
    %1343 = vmatprep.subr.mxu0 0.0
    %1344 = vmatpush1.msra.mxu0 %v86
    %1345 = vmatprep.subr.mxu0 0.0
    %1346 = vmatpush1.msra.mxu0 %v85
    %1347 = vmatprep.subr.mxu0 0.0
    %1348 = vmatpush2.msra.mxu0 0.0
    %1349 = vmatprep.subr.mxu0 0.0
    %1350 = vmatpush2.msra.mxu0 0.0
    %1351 = vmatprep.subr.mxu0 0.0
    %1352 = vmatpush2.msra.mxu0 0.0
    %1353 = vmatprep.subr.mxu0 0.0
    %1354 = vmatpush2.msra.mxu0 0.0
    %1355 = vmatprep.subr.mxu0 0.0
    %1356 = vmatpush2.msra.mxu0 0.0
    %1357 = vmatprep.subr.mxu0 0.0
    %1358 = vmatpush2.msra.mxu0 0.0
    %1359 = vmatprep.subr.mxu0 0.0
    %1360 = vmatpush2.msra.mxu0 0.0
    %1361 = vmatprep.subr.mxu0 0.0
    %1362 = vmatpush2.msra.mxu0 0.0
    %1363 = vmatprep.subr.mxu0 0.0
    %1364 = vmatpush2.msra.mxu0 0.0
    %1365 = vmatprep.subr.mxu0 0.0
    %1366 = vmatpush2.msra.mxu0 0.0
    %1367 = vmatprep.subr.mxu0 0.0
    %1368 = vmatpush2.msra.mxu0 0.0
    %1369 = vmatprep.subr.mxu0 0.0
    %1370 = vmatpush2.msra.mxu0 0.0
    %1371 = vmatprep.subr.mxu0 0.0
    %1372 = vmatpush2.msra.mxu0 0.0
    %1373 = vmatprep.subr.mxu0 0.0
    %1374 = vmatpush2.msra.mxu0 0.0
    %1375 = vmatprep.subr.mxu0 0.0
    %1376 = vmatpush2.msra.mxu0 0.0
    %1377 = vmatprep.subr.mxu0 0.0
    %1378 = vmatpush2.msra.mxu0 0.0
    %1379 = vmatprep.mubr.f32.mxu0 0.0
    %1380 = vmatmul.mubr.f32.gmra.mxu0 %v1313
    %v1381 = vpop.f32.mrf.mxu0
    %v1382 = vadd.f32 %v211, %v1381
    %v1383 = vpop.f32.mrf.mxu0
    %1384 = vdwg.mxu0
    %1385 = vmatprep.subr.mxu0 0.0
    %1386 = vmatpush1.msra.mxu0 0.0
    %1387 = vmatprep.subr.mxu0 0.0
    %1388 = vmatpush1.msra.mxu0 0.0
    %1389 = vmatprep.subr.mxu0 0.0
    %1390 = vmatpush1.msra.mxu0 0.0
    %1391 = vmatprep.subr.mxu0 0.0
    %1392 = vmatpush1.msra.mxu0 0.0
    %1393 = vmatprep.subr.mxu0 0.0
    %1394 = vmatpush1.msra.mxu0 0.0
    %1395 = vmatprep.subr.mxu0 0.0
    %1396 = vmatpush1.msra.mxu0 0.0
    %1397 = vmatprep.subr.mxu0 0.0
    %1398 = vmatpush1.msra.mxu0 0.0
    %1399 = vmatprep.subr.mxu0 0.0
    %1400 = vmatpush1.msra.mxu0 0.0
    %1401 = vmatprep.subr.mxu0 0.0
    %1402 = vmatpush1.msra.mxu0 0.0
    %1403 = vmatprep.subr.mxu0 0.0
    %1404 = vmatpush1.msra.mxu0 0.0
    %1405 = vmatprep.subr.mxu0 0.0
    %1406 = vmatpush1.msra.mxu0 0.0
    %1407 = vmatprep.subr.mxu0 0.0
    %1408 = vmatpush1.msra.mxu0 0.0
    %1409 = vmatprep.subr.mxu0 0.0
    %1410 = vmatpush1.msra.mxu0 %v93
    %1411 = vmatprep.subr.mxu0 0.0
    %1412 = vmatpush1.msra.mxu0 %v92
    %1413 = vmatprep.subr.mxu0 0.0
    %1414 = vmatpush1.msra.mxu0 %v91
    %1415 = vmatprep.subr.mxu0 0.0
    %1416 = vmatpush1.msra.mxu0 %v90
    %1417 = vmatprep.subr.mxu0 0.0
    %1418 = vmatpush2.msra.mxu0 0.0
    %1419 = vmatprep.subr.mxu0 0.0
    %1420 = vmatpush2.msra.mxu0 0.0
    %1421 = vmatprep.subr.mxu0 0.0
    %1422 = vmatpush2.msra.mxu0 0.0
    %1423 = vmatprep.subr.mxu0 0.0
    %1424 = vmatpush2.msra.mxu0 0.0
    %1425 = vmatprep.subr.mxu0 0.0
    %1426 = vmatpush2.msra.mxu0 0.0
    %1427 = vmatprep.subr.mxu0 0.0
    %1428 = vmatpush2.msra.mxu0 0.0
    %1429 = vmatprep.subr.mxu0 0.0
    %1430 = vmatpush2.msra.mxu0 0.0
    %1431 = vmatprep.subr.mxu0 0.0
    %1432 = vmatpush2.msra.mxu0 0.0
    %1433 = vmatprep.subr.mxu0 0.0
    %1434 = vmatpush2.msra.mxu0 0.0
    %1435 = vmatprep.subr.mxu0 0.0
    %1436 = vmatpush2.msra.mxu0 0.0
    %1437 = vmatprep.subr.mxu0 0.0
    %1438 = vmatpush2.msra.mxu0 0.0
    %1439 = vmatprep.subr.mxu0 0.0
    %1440 = vmatpush2.msra.mxu0 0.0
    %1441 = vmatprep.subr.mxu0 0.0
    %1442 = vmatpush2.msra.mxu0 0.0
    %1443 = vmatprep.subr.mxu0 0.0
    %1444 = vmatpush2.msra.mxu0 0.0
    %1445 = vmatprep.subr.mxu0 0.0
    %1446 = vmatpush2.msra.mxu0 0.0
    %1447 = vmatprep.subr.mxu0 0.0
    %1448 = vmatpush2.msra.mxu0 0.0
    %1449 = vmatprep.mubr.f32.mxu0 0.0
    %1450 = vmatmul.mubr.f32.gmra.mxu0 %v1313
    %v1451 = vpop.f32.mrf.mxu0
    %v1452 = vadd.f32 %v291, %v1451
    %v1453 = vpop.f32.mrf.mxu0
    %1454 = vdwg.mxu0
    %1455 = vmatprep.subr.mxu0 0.0
    %1456 = vmatpush1.msra.mxu0 0.0
    %1457 = vmatprep.subr.mxu0 0.0
    %1458 = vmatpush1.msra.mxu0 0.0
    %1459 = vmatprep.subr.mxu0 0.0
    %1460 = vmatpush1.msra.mxu0 0.0
    %1461 = vmatprep.subr.mxu0 0.0
    %1462 = vmatpush1.msra.mxu0 0.0
    %1463 = vmatprep.subr.mxu0 0.0
    %1464 = vmatpush1.msra.mxu0 0.0
    %1465 = vmatprep.subr.mxu0 0.0
    %1466 = vmatpush1.msra.mxu0 0.0
    %1467 = vmatprep.subr.mxu0 0.0
    %1468 = vmatpush1.msra.mxu0 0.0
    %1469 = vmatprep.subr.mxu0 0.0
    %1470 = vmatpush1.msra.mxu0 0.0
    %1471 = vmatprep.subr.mxu0 0.0
    %1472 = vmatpush1.msra.mxu0 0.0
    %1473 = vmatprep.subr.mxu0 0.0
    %1474 = vmatpush1.msra.mxu0 0.0
    %1475 = vmatprep.subr.mxu0 0.0
    %1476 = vmatpush1.msra.mxu0 0.0
    %1477 = vmatprep.subr.mxu0 0.0
    %1478 = vmatpush1.msra.mxu0 0.0
    %1479 = vmatprep.subr.mxu0 0.0
    %1480 = vmatpush1.msra.mxu0 %v98
    %1481 = vmatprep.subr.mxu0 0.0
    %1482 = vmatpush1.msra.mxu0 %v97
    %1483 = vmatprep.subr.mxu0 0.0
    %1484 = vmatpush1.msra.mxu0 %v96
    %1485 = vmatprep.subr.mxu0 0.0
    %1486 = vmatpush1.msra.mxu0 %v95
    %1487 = vmatprep.subr.mxu0 0.0
    %1488 = vmatpush2.msra.mxu0 0.0
    %1489 = vmatprep.subr.mxu0 0.0
    %1490 = vmatpush2.msra.mxu0 0.0
    %1491 = vmatprep.subr.mxu0 0.0
    %1492 = vmatpush2.msra.mxu0 0.0
    %1493 = vmatprep.subr.mxu0 0.0
    %1494 = vmatpush2.msra.mxu0 0.0
    %1495 = vmatprep.subr.mxu0 0.0
    %1496 = vmatpush2.msra.mxu0 0.0
    %1497 = vmatprep.subr.mxu0 0.0
    %1498 = vmatpush2.msra.mxu0 0.0
    %1499 = vmatprep.subr.mxu0 0.0
    %1500 = vmatpush2.msra.mxu0 0.0
    %1501 = vmatprep.subr.mxu0 0.0
    %1502 = vmatpush2.msra.mxu0 0.0
    %1503 = vmatprep.subr.mxu0 0.0
    %1504 = vmatpush2.msra.mxu0 0.0
    %1505 = vmatprep.subr.mxu0 0.0
    %1506 = vmatpush2.msra.mxu0 0.0
    %1507 = vmatprep.subr.mxu0 0.0
    %1508 = vmatpush2.msra.mxu0 0.0
    %1509 = vmatprep.subr.mxu0 0.0
    %1510 = vmatpush2.msra.mxu0 0.0
    %1511 = vmatprep.subr.mxu0 0.0
    %1512 = vmatpush2.msra.mxu0 0.0
    %1513 = vmatprep.subr.mxu0 0.0
    %1514 = vmatpush2.msra.mxu0 0.0
    %1515 = vmatprep.subr.mxu0 0.0
    %1516 = vmatpush2.msra.mxu0 0.0
    %1517 = vmatprep.subr.mxu0 0.0
    %1518 = vmatpush2.msra.mxu0 0.0
    %1519 = vmatprep.mubr.f32.mxu0 0.0
    %1520 = vmatmul.mubr.f32.gmra.mxu0 %v1313
    %v1521 = vpop.f32.mrf.mxu0
    %v1522 = vadd.f32 %v367, %v1521
    %v1523 = vpop.f32.mrf.mxu0
    %1524 = vdwg.mxu0
    %v1526 = vsel %vm213, %v1230, 0
    %1528 = vmatprep.subr.mxu0 0.0
    %1529 = vmatpush1.msra.mxu0 0.0
    %1530 = vmatprep.subr.mxu0 0.0
    %1531 = vmatpush1.msra.mxu0 0.0
    %1532 = vmatprep.subr.mxu0 0.0
    %1533 = vmatpush1.msra.mxu0 0.0
    %1534 = vmatprep.subr.mxu0 0.0
    %1535 = vmatpush1.msra.mxu0 0.0
    %1536 = vmatprep.subr.mxu0 0.0
    %1537 = vmatpush1.msra.mxu0 0.0
    %1538 = vmatprep.subr.mxu0 0.0
    %1539 = vmatpush1.msra.mxu0 0.0
    %1540 = vmatprep.subr.mxu0 0.0
    %1541 = vmatpush1.msra.mxu0 0.0
    %1542 = vmatprep.subr.mxu0 0.0
    %1543 = vmatpush1.msra.mxu0 0.0
    %1544 = vmatprep.subr.mxu0 0.0
    %1545 = vmatpush1.msra.mxu0 0.0
    %1546 = vmatprep.subr.mxu0 0.0
    %1547 = vmatpush1.msra.mxu0 0.0
    %1548 = vmatprep.subr.mxu0 0.0
    %1549 = vmatpush1.msra.mxu0 0.0
    %1550 = vmatprep.subr.mxu0 0.0
    %1551 = vmatpush1.msra.mxu0 0.0
    %1552 = vmatprep.subr.mxu0 0.0
    %1553 = vmatpush1.msra.mxu0 %v107
    %1554 = vmatprep.subr.mxu0 0.0
    %1555 = vmatpush1.msra.mxu0 %v106
    %1556 = vmatprep.subr.mxu0 0.0
    %1557 = vmatpush1.msra.mxu0 %v105
    %1558 = vmatprep.subr.mxu0 0.0
    %1559 = vmatpush1.msra.mxu0 %v104
    %1560 = vmatprep.subr.mxu0 0.0
    %1561 = vmatpush2.msra.mxu0 0.0
    %1562 = vmatprep.subr.mxu0 0.0
    %1563 = vmatpush2.msra.mxu0 0.0
    %1564 = vmatprep.subr.mxu0 0.0
    %1565 = vmatpush2.msra.mxu0 0.0
    %1566 = vmatprep.subr.mxu0 0.0
    %1567 = vmatpush2.msra.mxu0 0.0
    %1568 = vmatprep.subr.mxu0 0.0
    %1569 = vmatpush2.msra.mxu0 0.0
    %1570 = vmatprep.subr.mxu0 0.0
    %1571 = vmatpush2.msra.mxu0 0.0
    %1572 = vmatprep.subr.mxu0 0.0
    %1573 = vmatpush2.msra.mxu0 0.0
    %1574 = vmatprep.subr.mxu0 0.0
    %1575 = vmatpush2.msra.mxu0 0.0
    %1576 = vmatprep.subr.mxu0 0.0
    %1577 = vmatpush2.msra.mxu0 0.0
    %1578 = vmatprep.subr.mxu0 0.0
    %1579 = vmatpush2.msra.mxu0 0.0
    %1580 = vmatprep.subr.mxu0 0.0
    %1581 = vmatpush2.msra.mxu0 0.0
    %1582 = vmatprep.subr.mxu0 0.0
    %1583 = vmatpush2.msra.mxu0 0.0
    %1584 = vmatprep.subr.mxu0 0.0
    %1585 = vmatpush2.msra.mxu0 0.0
    %1586 = vmatprep.subr.mxu0 0.0
    %1587 = vmatpush2.msra.mxu0 0.0
    %1588 = vmatprep.subr.mxu0 0.0
    %1589 = vmatpush2.msra.mxu0 0.0
    %1590 = vmatprep.subr.mxu0 0.0
    %1591 = vmatpush2.msra.mxu0 0.0
    %1592 = vmatprep.mubr.f32.mxu0 0.0
    %1593 = vmatmul.mubr.f32.gmra.mxu0 %v1526
    %v1594 = vpop.f32.mrf.mxu0
    %v1595 = vadd.f32 %v443, %v1594
    %v1596 = vpop.f32.mrf.mxu0
    %1597 = vdwg.mxu0
    %1598 = vmatprep.subr.mxu0 0.0
    %1599 = vmatpush1.msra.mxu0 0.0
    %1600 = vmatprep.subr.mxu0 0.0
    %1601 = vmatpush1.msra.mxu0 0.0
    %1602 = vmatprep.subr.mxu0 0.0
    %1603 = vmatpush1.msra.mxu0 0.0
    %1604 = vmatprep.subr.mxu0 0.0
    %1605 = vmatpush1.msra.mxu0 0.0
    %1606 = vmatprep.subr.mxu0 0.0
    %1607 = vmatpush1.msra.mxu0 0.0
    %1608 = vmatprep.subr.mxu0 0.0
    %1609 = vmatpush1.msra.mxu0 0.0
    %1610 = vmatprep.subr.mxu0 0.0
    %1611 = vmatpush1.msra.mxu0 0.0
    %1612 = vmatprep.subr.mxu0 0.0
    %1613 = vmatpush1.msra.mxu0 0.0
    %1614 = vmatprep.subr.mxu0 0.0
    %1615 = vmatpush1.msra.mxu0 0.0
    %1616 = vmatprep.subr.mxu0 0.0
    %1617 = vmatpush1.msra.mxu0 0.0
    %1618 = vmatprep.subr.mxu0 0.0
    %1619 = vmatpush1.msra.mxu0 0.0
    %1620 = vmatprep.subr.mxu0 0.0
    %1621 = vmatpush1.msra.mxu0 0.0
    %1622 = vmatprep.subr.mxu0 0.0
    %1623 = vmatpush1.msra.mxu0 %v112
    %1624 = vmatprep.subr.mxu0 0.0
    %1625 = vmatpush1.msra.mxu0 %v111
    %1626 = vmatprep.subr.mxu0 0.0
    %1627 = vmatpush1.msra.mxu0 %v110
    %1628 = vmatprep.subr.mxu0 0.0
    %1629 = vmatpush1.msra.mxu0 %v109
    %1630 = vmatprep.subr.mxu0 0.0
    %1631 = vmatpush2.msra.mxu0 0.0
    %1632 = vmatprep.subr.mxu0 0.0
    %1633 = vmatpush2.msra.mxu0 0.0
    %1634 = vmatprep.subr.mxu0 0.0
    %1635 = vmatpush2.msra.mxu0 0.0
    %1636 = vmatprep.subr.mxu0 0.0
    %1637 = vmatpush2.msra.mxu0 0.0
    %1638 = vmatprep.subr.mxu0 0.0
    %1639 = vmatpush2.msra.mxu0 0.0
    %1640 = vmatprep.subr.mxu0 0.0
    %1641 = vmatpush2.msra.mxu0 0.0
    %1642 = vmatprep.subr.mxu0 0.0
    %1643 = vmatpush2.msra.mxu0 0.0
    %1644 = vmatprep.subr.mxu0 0.0
    %1645 = vmatpush2.msra.mxu0 0.0
    %1646 = vmatprep.subr.mxu0 0.0
    %1647 = vmatpush2.msra.mxu0 0.0
    %1648 = vmatprep.subr.mxu0 0.0
    %1649 = vmatpush2.msra.mxu0 0.0
    %1650 = vmatprep.subr.mxu0 0.0
    %1651 = vmatpush2.msra.mxu0 0.0
    %1652 = vmatprep.subr.mxu0 0.0
    %1653 = vmatpush2.msra.mxu0 0.0
    %1654 = vmatprep.subr.mxu0 0.0
    %1655 = vmatpush2.msra.mxu0 0.0
    %1656 = vmatprep.subr.mxu0 0.0
    %1657 = vmatpush2.msra.mxu0 0.0
    %1658 = vmatprep.subr.mxu0 0.0
    %1659 = vmatpush2.msra.mxu0 0.0
    %1660 = vmatprep.subr.mxu0 0.0
    %1661 = vmatpush2.msra.mxu0 0.0
    %1662 = vmatprep.mubr.f32.mxu0 0.0
    %1663 = vmatmul.mubr.f32.gmra.mxu0 %v1526
    %v1664 = vpop.f32.mrf.mxu0
    %v1665 = vadd.f32 %v522, %v1664
    %v1666 = vpop.f32.mrf.mxu0
    %1667 = vdwg.mxu0
    %1668 = vmatprep.subr.mxu0 0.0
    %1669 = vmatpush1.msra.mxu0 0.0
    %1670 = vmatprep.subr.mxu0 0.0
    %1671 = vmatpush1.msra.mxu0 0.0
    %1672 = vmatprep.subr.mxu0 0.0
    %1673 = vmatpush1.msra.mxu0 0.0
    %1674 = vmatprep.subr.mxu0 0.0
    %1675 = vmatpush1.msra.mxu0 0.0
    %1676 = vmatprep.subr.mxu0 0.0
    %1677 = vmatpush1.msra.mxu0 0.0
    %1678 = vmatprep.subr.mxu0 0.0
    %1679 = vmatpush1.msra.mxu0 0.0
    %1680 = vmatprep.subr.mxu0 0.0
    %1681 = vmatpush1.msra.mxu0 0.0
    %1682 = vmatprep.subr.mxu0 0.0
    %1683 = vmatpush1.msra.mxu0 0.0
    %1684 = vmatprep.subr.mxu0 0.0
    %1685 = vmatpush1.msra.mxu0 0.0
    %1686 = vmatprep.subr.mxu0 0.0
    %1687 = vmatpush1.msra.mxu0 0.0
    %1688 = vmatprep.subr.mxu0 0.0
    %1689 = vmatpush1.msra.mxu0 0.0
    %1690 = vmatprep.subr.mxu0 0.0
    %1691 = vmatpush1.msra.mxu0 0.0
    %1692 = vmatprep.subr.mxu0 0.0
    %1693 = vmatpush1.msra.mxu0 %v117
    %1694 = vmatprep.subr.mxu0 0.0
    %1695 = vmatpush1.msra.mxu0 %v116
    %1696 = vmatprep.subr.mxu0 0.0
    %1697 = vmatpush1.msra.mxu0 %v115
    %1698 = vmatprep.subr.mxu0 0.0
    %1699 = vmatpush1.msra.mxu0 %v114
    %1700 = vmatprep.subr.mxu0 0.0
    %1701 = vmatpush2.msra.mxu0 0.0
    %1702 = vmatprep.subr.mxu0 0.0
    %1703 = vmatpush2.msra.mxu0 0.0
    %1704 = vmatprep.subr.mxu0 0.0
    %1705 = vmatpush2.msra.mxu0 0.0
    %1706 = vmatprep.subr.mxu0 0.0
    %1707 = vmatpush2.msra.mxu0 0.0
    %1708 = vmatprep.subr.mxu0 0.0
    %1709 = vmatpush2.msra.mxu0 0.0
    %1710 = vmatprep.subr.mxu0 0.0
    %1711 = vmatpush2.msra.mxu0 0.0
    %1712 = vmatprep.subr.mxu0 0.0
    %1713 = vmatpush2.msra.mxu0 0.0
    %1714 = vmatprep.subr.mxu0 0.0
    %1715 = vmatpush2.msra.mxu0 0.0
    %1716 = vmatprep.subr.mxu0 0.0
    %1717 = vmatpush2.msra.mxu0 0.0
    %1718 = vmatprep.subr.mxu0 0.0
    %1719 = vmatpush2.msra.mxu0 0.0
    %1720 = vmatprep.subr.mxu0 0.0
    %1721 = vmatpush2.msra.mxu0 0.0
    %1722 = vmatprep.subr.mxu0 0.0
    %1723 = vmatpush2.msra.mxu0 0.0
    %1724 = vmatprep.subr.mxu0 0.0
    %1725 = vmatpush2.msra.mxu0 0.0
    %1726 = vmatprep.subr.mxu0 0.0
    %1727 = vmatpush2.msra.mxu0 0.0
    %1728 = vmatprep.subr.mxu0 0.0
    %1729 = vmatpush2.msra.mxu0 0.0
    %1730 = vmatprep.subr.mxu0 0.0
    %1731 = vmatpush2.msra.mxu0 0.0
    %1732 = vmatprep.mubr.f32.mxu0 0.0
    %1733 = vmatmul.mubr.f32.gmra.mxu0 %v1526
    %v1734 = vpop.f32.mrf.mxu0
    %v1735 = vadd.f32 %v598, %v1734
    %v1736 = vpop.f32.mrf.mxu0
    %1737 = vdwg.mxu0
    %v1738 = vadd.f32 %v1382, %v1595
    %v1739 = vxor.u32 %v1738, 2147483648
    %v1740 = vmul.f32 %v1739, 1.442695
    %v1741 = vpow.pop %v1740
    %v1742 = vadd.f32 %v1741, 1.0
    %v1743 = vrcp.pop %v1742
    %v1744 = vmul.f32 1.0, %v1743
    %v1745 = vadd.f32 %v1452, %v1665
    %v1746 = vxor.u32 %v1745, 2147483648
    %v1747 = vmul.f32 %v1746, 1.442695
    %v1748 = vpow.pop %v1747
    %v1749 = vadd.f32 %v1748, 1.0
    %v1750 = vrcp.pop %v1749
    %v1751 = vmul.f32 1.0, %v1750
    %v1752 = vmul.f32 %v1744, %v1735
    %v1753 = vadd.f32 %v1522, %v1752
    %v1754 = vtanh.pop %v1753
    %v1755 = vsub.f32 1.0, %v1751
    %v1756 = vmul.f32 %v1755, %v1754
    %v1757 = vmul.f32 %v1751, %v1230
    %v1758 = vadd.f32 %v1756, %v1757
    %v1759 = vmul.f32 %v1758, %v695
    %v1760 = vsel %vm213, %v1759, 0.0
    %1761 = vadd.xlane.f32.xlu0 %v1760
    %v1762 = vpop.xlane.xlu0 %1761
    %v1763 = vadd.f32 %v1762, %v705
    %s1764 = scalar_lea.vmem [#allocation3], 24
    %v1765 = vld [vmem:[%s1764] sm:$0xff]
    %v1767 = vsel %vm132, %v1765, 0
    %1769 = vmatprep.subr.mxu0 0.0
    %1770 = vmatpush1.msra.mxu0 0.0
    %1771 = vmatprep.subr.mxu0 0.0
    %1772 = vmatpush1.msra.mxu0 0.0
    %1773 = vmatprep.subr.mxu0 0.0
    %1774 = vmatpush1.msra.mxu0 0.0
    %1775 = vmatprep.subr.mxu0 0.0
    %1776 = vmatpush1.msra.mxu0 0.0
    %1777 = vmatprep.subr.mxu0 0.0
    %1778 = vmatpush1.msra.mxu0 0.0
    %1779 = vmatprep.subr.mxu0 0.0
    %1780 = vmatpush1.msra.mxu0 0.0
    %1781 = vmatprep.subr.mxu0 0.0
    %1782 = vmatpush1.msra.mxu0 0.0
    %1783 = vmatprep.subr.mxu0 0.0
    %1784 = vmatpush1.msra.mxu0 0.0
    %1785 = vmatprep.subr.mxu0 0.0
    %1786 = vmatpush1.msra.mxu0 0.0
    %1787 = vmatprep.subr.mxu0 0.0
    %1788 = vmatpush1.msra.mxu0 0.0
    %1789 = vmatprep.subr.mxu0 0.0
    %1790 = vmatpush1.msra.mxu0 0.0
    %1791 = vmatprep.subr.mxu0 0.0
    %1792 = vmatpush1.msra.mxu0 0.0
    %1793 = vmatprep.subr.mxu0 0.0
    %1794 = vmatpush1.msra.mxu0 0.0
    %1795 = vmatprep.subr.mxu0 0.0
    %1796 = vmatpush1.msra.mxu0 0.0
    %1797 = vmatprep.subr.mxu0 0.0
    %1798 = vmatpush1.msra.mxu0 %v83
    %1799 = vmatprep.subr.mxu0 0.0
    %1800 = vmatpush1.msra.mxu0 %v82
    %1801 = vmatprep.subr.mxu0 0.0
    %1802 = vmatpush2.msra.mxu0 0.0
    %1803 = vmatprep.subr.mxu0 0.0
    %1804 = vmatpush2.msra.mxu0 0.0
    %1805 = vmatprep.subr.mxu0 0.0
    %1806 = vmatpush2.msra.mxu0 0.0
    %1807 = vmatprep.subr.mxu0 0.0
    %1808 = vmatpush2.msra.mxu0 0.0
    %1809 = vmatprep.subr.mxu0 0.0
    %1810 = vmatpush2.msra.mxu0 0.0
    %1811 = vmatprep.subr.mxu0 0.0
    %1812 = vmatpush2.msra.mxu0 0.0
    %1813 = vmatprep.subr.mxu0 0.0
    %1814 = vmatpush2.msra.mxu0 0.0
    %1815 = vmatprep.subr.mxu0 0.0
    %1816 = vmatpush2.msra.mxu0 0.0
    %1817 = vmatprep.subr.mxu0 0.0
    %1818 = vmatpush2.msra.mxu0 0.0
    %1819 = vmatprep.subr.mxu0 0.0
    %1820 = vmatpush2.msra.mxu0 0.0
    %1821 = vmatprep.subr.mxu0 0.0
    %1822 = vmatpush2.msra.mxu0 0.0
    %1823 = vmatprep.subr.mxu0 0.0
    %1824 = vmatpush2.msra.mxu0 0.0
    %1825 = vmatprep.subr.mxu0 0.0
    %1826 = vmatpush2.msra.mxu0 0.0
    %1827 = vmatprep.subr.mxu0 0.0
    %1828 = vmatpush2.msra.mxu0 0.0
    %1829 = vmatprep.subr.mxu0 0.0
    %1830 = vmatpush2.msra.mxu0 0.0
    %1831 = vmatprep.subr.mxu0 0.0
    %1832 = vmatpush2.msra.mxu0 0.0
    %1833 = vmatprep.mubr.f32.mxu0 0.0
    %1834 = vmatmul.mubr.f32.gmra.mxu0 %v1767
    %v1835 = vpop.f32.mrf.mxu0
    %v1836 = vadd.f32 %v130, %v1835
    %v1837 = vpop.f32.mrf.mxu0
    %1838 = vdwg.mxu0
    %v1839 = vmax.f32 %v1836, 0.0
    %v1841 = vsel %vm213, %v1839, 0
    %1843 = vmatprep.subr.mxu0 0.0
    %1844 = vmatpush1.msra.mxu0 0.0
    %1845 = vmatprep.subr.mxu0 0.0
    %1846 = vmatpush1.msra.mxu0 0.0
    %1847 = vmatprep.subr.mxu0 0.0
    %1848 = vmatpush1.msra.mxu0 0.0
    %1849 = vmatprep.subr.mxu0 0.0
    %1850 = vmatpush1.msra.mxu0 0.0
    %1851 = vmatprep.subr.mxu0 0.0
    %1852 = vmatpush1.msra.mxu0 0.0
    %1853 = vmatprep.subr.mxu0 0.0
    %1854 = vmatpush1.msra.mxu0 0.0
    %1855 = vmatprep.subr.mxu0 0.0
    %1856 = vmatpush1.msra.mxu0 0.0
    %1857 = vmatprep.subr.mxu0 0.0
    %1858 = vmatpush1.msra.mxu0 0.0
    %1859 = vmatprep.subr.mxu0 0.0
    %1860 = vmatpush1.msra.mxu0 0.0
    %1861 = vmatprep.subr.mxu0 0.0
    %1862 = vmatpush1.msra.mxu0 0.0
    %1863 = vmatprep.subr.mxu0 0.0
    %1864 = vmatpush1.msra.mxu0 0.0
    %1865 = vmatprep.subr.mxu0 0.0
    %1866 = vmatpush1.msra.mxu0 0.0
    %1867 = vmatprep.subr.mxu0 0.0
    %1868 = vmatpush1.msra.mxu0 %v88
    %1869 = vmatprep.subr.mxu0 0.0
    %1870 = vmatpush1.msra.mxu0 %v87
    %1871 = vmatprep.subr.mxu0 0.0
    %1872 = vmatpush1.msra.mxu0 %v86
    %1873 = vmatprep.subr.mxu0 0.0
    %1874 = vmatpush1.msra.mxu0 %v85
    %1875 = vmatprep.subr.mxu0 0.0
    %1876 = vmatpush2.msra.mxu0 0.0
    %1877 = vmatprep.subr.mxu0 0.0
    %1878 = vmatpush2.msra.mxu0 0.0
    %1879 = vmatprep.subr.mxu0 0.0
    %1880 = vmatpush2.msra.mxu0 0.0
    %1881 = vmatprep.subr.mxu0 0.0
    %1882 = vmatpush2.msra.mxu0 0.0
    %1883 = vmatprep.subr.mxu0 0.0
    %1884 = vmatpush2.msra.mxu0 0.0
    %1885 = vmatprep.subr.mxu0 0.0
    %1886 = vmatpush2.msra.mxu0 0.0
    %1887 = vmatprep.subr.mxu0 0.0
    %1888 = vmatpush2.msra.mxu0 0.0
    %1889 = vmatprep.subr.mxu0 0.0
    %1890 = vmatpush2.msra.mxu0 0.0
    %1891 = vmatprep.subr.mxu0 0.0
    %1892 = vmatpush2.msra.mxu0 0.0
    %1893 = vmatprep.subr.mxu0 0.0
    %1894 = vmatpush2.msra.mxu0 0.0
    %1895 = vmatprep.subr.mxu0 0.0
    %1896 = vmatpush2.msra.mxu0 0.0
    %1897 = vmatprep.subr.mxu0 0.0
    %1898 = vmatpush2.msra.mxu0 0.0
    %1899 = vmatprep.subr.mxu0 0.0
    %1900 = vmatpush2.msra.mxu0 0.0
    %1901 = vmatprep.subr.mxu0 0.0
    %1902 = vmatpush2.msra.mxu0 0.0
    %1903 = vmatprep.subr.mxu0 0.0
    %1904 = vmatpush2.msra.mxu0 0.0
    %1905 = vmatprep.subr.mxu0 0.0
    %1906 = vmatpush2.msra.mxu0 0.0
    %1907 = vmatprep.mubr.f32.mxu0 0.0
    %1908 = vmatmul.mubr.f32.gmra.mxu0 %v1841
    %v1909 = vpop.f32.mrf.mxu0
    %v1910 = vadd.f32 %v211, %v1909
    %v1911 = vpop.f32.mrf.mxu0
    %1912 = vdwg.mxu0
    %1913 = vmatprep.subr.mxu0 0.0
    %1914 = vmatpush1.msra.mxu0 0.0
    %1915 = vmatprep.subr.mxu0 0.0
    %1916 = vmatpush1.msra.mxu0 0.0
    %1917 = vmatprep.subr.mxu0 0.0
    %1918 = vmatpush1.msra.mxu0 0.0
    %1919 = vmatprep.subr.mxu0 0.0
    %1920 = vmatpush1.msra.mxu0 0.0
    %1921 = vmatprep.subr.mxu0 0.0
    %1922 = vmatpush1.msra.mxu0 0.0
    %1923 = vmatprep.subr.mxu0 0.0
    %1924 = vmatpush1.msra.mxu0 0.0
    %1925 = vmatprep.subr.mxu0 0.0
    %1926 = vmatpush1.msra.mxu0 0.0
    %1927 = vmatprep.subr.mxu0 0.0
    %1928 = vmatpush1.msra.mxu0 0.0
    %1929 = vmatprep.subr.mxu0 0.0
    %1930 = vmatpush1.msra.mxu0 0.0
    %1931 = vmatprep.subr.mxu0 0.0
    %1932 = vmatpush1.msra.mxu0 0.0
    %1933 = vmatprep.subr.mxu0 0.0
    %1934 = vmatpush1.msra.mxu0 0.0
    %1935 = vmatprep.subr.mxu0 0.0
    %1936 = vmatpush1.msra.mxu0 0.0
    %1937 = vmatprep.subr.mxu0 0.0
    %1938 = vmatpush1.msra.mxu0 %v93
    %1939 = vmatprep.subr.mxu0 0.0
    %1940 = vmatpush1.msra.mxu0 %v92
    %1941 = vmatprep.subr.mxu0 0.0
    %1942 = vmatpush1.msra.mxu0 %v91
    %1943 = vmatprep.subr.mxu0 0.0
    %1944 = vmatpush1.msra.mxu0 %v90
    %1945 = vmatprep.subr.mxu0 0.0
    %1946 = vmatpush2.msra.mxu0 0.0
    %1947 = vmatprep.subr.mxu0 0.0
    %1948 = vmatpush2.msra.mxu0 0.0
    %1949 = vmatprep.subr.mxu0 0.0
    %1950 = vmatpush2.msra.mxu0 0.0
    %1951 = vmatprep.subr.mxu0 0.0
    %1952 = vmatpush2.msra.mxu0 0.0
    %1953 = vmatprep.subr.mxu0 0.0
    %1954 = vmatpush2.msra.mxu0 0.0
    %1955 = vmatprep.subr.mxu0 0.0
    %1956 = vmatpush2.msra.mxu0 0.0
    %1957 = vmatprep.subr.mxu0 0.0
    %1958 = vmatpush2.msra.mxu0 0.0
    %1959 = vmatprep.subr.mxu0 0.0
    %1960 = vmatpush2.msra.mxu0 0.0
    %1961 = vmatprep.subr.mxu0 0.0
    %1962 = vmatpush2.msra.mxu0 0.0
    %1963 = vmatprep.subr.mxu0 0.0
    %1964 = vmatpush2.msra.mxu0 0.0
    %1965 = vmatprep.subr.mxu0 0.0
    %1966 = vmatpush2.msra.mxu0 0.0
    %1967 = vmatprep.subr.mxu0 0.0
    %1968 = vmatpush2.msra.mxu0 0.0
    %1969 = vmatprep.subr.mxu0 0.0
    %1970 = vmatpush2.msra.mxu0 0.0
    %1971 = vmatprep.subr.mxu0 0.0
    %1972 = vmatpush2.msra.mxu0 0.0
    %1973 = vmatprep.subr.mxu0 0.0
    %1974 = vmatpush2.msra.mxu0 0.0
    %1975 = vmatprep.subr.mxu0 0.0
    %1976 = vmatpush2.msra.mxu0 0.0
    %1977 = vmatprep.mubr.f32.mxu0 0.0
    %1978 = vmatmul.mubr.f32.gmra.mxu0 %v1841
    %v1979 = vpop.f32.mrf.mxu0
    %v1980 = vadd.f32 %v291, %v1979
    %v1981 = vpop.f32.mrf.mxu0
    %1982 = vdwg.mxu0
    %1983 = vmatprep.subr.mxu0 0.0
    %1984 = vmatpush1.msra.mxu0 0.0
    %1985 = vmatprep.subr.mxu0 0.0
    %1986 = vmatpush1.msra.mxu0 0.0
    %1987 = vmatprep.subr.mxu0 0.0
    %1988 = vmatpush1.msra.mxu0 0.0
    %1989 = vmatprep.subr.mxu0 0.0
    %1990 = vmatpush1.msra.mxu0 0.0
    %1991 = vmatprep.subr.mxu0 0.0
    %1992 = vmatpush1.msra.mxu0 0.0
    %1993 = vmatprep.subr.mxu0 0.0
    %1994 = vmatpush1.msra.mxu0 0.0
    %1995 = vmatprep.subr.mxu0 0.0
    %1996 = vmatpush1.msra.mxu0 0.0
    %1997 = vmatprep.subr.mxu0 0.0
    %1998 = vmatpush1.msra.mxu0 0.0
    %1999 = vmatprep.subr.mxu0 0.0
    %2000 = vmatpush1.msra.mxu0 0.0
    %2001 = vmatprep.subr.mxu0 0.0
    %2002 = vmatpush1.msra.mxu0 0.0
    %2003 = vmatprep.subr.mxu0 0.0
    %2004 = vmatpush1.msra.mxu0 0.0
    %2005 = vmatprep.subr.mxu0 0.0
    %2006 = vmatpush1.msra.mxu0 0.0
    %2007 = vmatprep.subr.mxu0 0.0
    %2008 = vmatpush1.msra.mxu0 %v98
    %2009 = vmatprep.subr.mxu0 0.0
    %2010 = vmatpush1.msra.mxu0 %v97
    %2011 = vmatprep.subr.mxu0 0.0
    %2012 = vmatpush1.msra.mxu0 %v96
    %2013 = vmatprep.subr.mxu0 0.0
    %2014 = vmatpush1.msra.mxu0 %v95
    %2015 = vmatprep.subr.mxu0 0.0
    %2016 = vmatpush2.msra.mxu0 0.0
    %2017 = vmatprep.subr.mxu0 0.0
    %2018 = vmatpush2.msra.mxu0 0.0
    %2019 = vmatprep.subr.mxu0 0.0
    %2020 = vmatpush2.msra.mxu0 0.0
    %2021 = vmatprep.subr.mxu0 0.0
    %2022 = vmatpush2.msra.mxu0 0.0
    %2023 = vmatprep.subr.mxu0 0.0
    %2024 = vmatpush2.msra.mxu0 0.0
    %2025 = vmatprep.subr.mxu0 0.0
    %2026 = vmatpush2.msra.mxu0 0.0
    %2027 = vmatprep.subr.mxu0 0.0
    %2028 = vmatpush2.msra.mxu0 0.0
    %2029 = vmatprep.subr.mxu0 0.0
    %2030 = vmatpush2.msra.mxu0 0.0
    %2031 = vmatprep.subr.mxu0 0.0
    %2032 = vmatpush2.msra.mxu0 0.0
    %2033 = vmatprep.subr.mxu0 0.0
    %2034 = vmatpush2.msra.mxu0 0.0
    %2035 = vmatprep.subr.mxu0 0.0
    %2036 = vmatpush2.msra.mxu0 0.0
    %2037 = vmatprep.subr.mxu0 0.0
    %2038 = vmatpush2.msra.mxu0 0.0
    %2039 = vmatprep.subr.mxu0 0.0
    %2040 = vmatpush2.msra.mxu0 0.0
    %2041 = vmatprep.subr.mxu0 0.0
    %2042 = vmatpush2.msra.mxu0 0.0
    %2043 = vmatprep.subr.mxu0 0.0
    %2044 = vmatpush2.msra.mxu0 0.0
    %2045 = vmatprep.subr.mxu0 0.0
    %2046 = vmatpush2.msra.mxu0 0.0
    %2047 = vmatprep.mubr.f32.mxu0 0.0
    %2048 = vmatmul.mubr.f32.gmra.mxu0 %v1841
    %v2049 = vpop.f32.mrf.mxu0
    %v2050 = vadd.f32 %v367, %v2049
    %v2051 = vpop.f32.mrf.mxu0
    %2052 = vdwg.mxu0
    %v2054 = vsel %vm213, %v1758, 0
    %2056 = vmatprep.subr.mxu0 0.0
    %2057 = vmatpush1.msra.mxu0 0.0
    %2058 = vmatprep.subr.mxu0 0.0
    %2059 = vmatpush1.msra.mxu0 0.0
    %2060 = vmatprep.subr.mxu0 0.0
    %2061 = vmatpush1.msra.mxu0 0.0
    %2062 = vmatprep.subr.mxu0 0.0
    %2063 = vmatpush1.msra.mxu0 0.0
    %2064 = vmatprep.subr.mxu0 0.0
    %2065 = vmatpush1.msra.mxu0 0.0
    %2066 = vmatprep.subr.mxu0 0.0
    %2067 = vmatpush1.msra.mxu0 0.0
    %2068 = vmatprep.subr.mxu0 0.0
    %2069 = vmatpush1.msra.mxu0 0.0
    %2070 = vmatprep.subr.mxu0 0.0
    %2071 = vmatpush1.msra.mxu0 0.0
    %2072 = vmatprep.subr.mxu0 0.0
    %2073 = vmatpush1.msra.mxu0 0.0
    %2074 = vmatprep.subr.mxu0 0.0
    %2075 = vmatpush1.msra.mxu0 0.0
    %2076 = vmatprep.subr.mxu0 0.0
    %2077 = vmatpush1.msra.mxu0 0.0
    %2078 = vmatprep.subr.mxu0 0.0
    %2079 = vmatpush1.msra.mxu0 0.0
    %2080 = vmatprep.subr.mxu0 0.0
    %2081 = vmatpush1.msra.mxu0 %v107
    %2082 = vmatprep.subr.mxu0 0.0
    %2083 = vmatpush1.msra.mxu0 %v106
    %2084 = vmatprep.subr.mxu0 0.0
    %2085 = vmatpush1.msra.mxu0 %v105
    %2086 = vmatprep.subr.mxu0 0.0
    %2087 = vmatpush1.msra.mxu0 %v104
    %2088 = vmatprep.subr.mxu0 0.0
    %2089 = vmatpush2.msra.mxu0 0.0
    %2090 = vmatprep.subr.mxu0 0.0
    %2091 = vmatpush2.msra.mxu0 0.0
    %2092 = vmatprep.subr.mxu0 0.0
    %2093 = vmatpush2.msra.mxu0 0.0
    %2094 = vmatprep.subr.mxu0 0.0
    %2095 = vmatpush2.msra.mxu0 0.0
    %2096 = vmatprep.subr.mxu0 0.0
    %2097 = vmatpush2.msra.mxu0 0.0
    %2098 = vmatprep.subr.mxu0 0.0
    %2099 = vmatpush2.msra.mxu0 0.0
    %2100 = vmatprep.subr.mxu0 0.0
    %2101 = vmatpush2.msra.mxu0 0.0
    %2102 = vmatprep.subr.mxu0 0.0
    %2103 = vmatpush2.msra.mxu0 0.0
    %2104 = vmatprep.subr.mxu0 0.0
    %2105 = vmatpush2.msra.mxu0 0.0
    %2106 = vmatprep.subr.mxu0 0.0
    %2107 = vmatpush2.msra.mxu0 0.0
    %2108 = vmatprep.subr.mxu0 0.0
    %2109 = vmatpush2.msra.mxu0 0.0
    %2110 = vmatprep.subr.mxu0 0.0
    %2111 = vmatpush2.msra.mxu0 0.0
    %2112 = vmatprep.subr.mxu0 0.0
    %2113 = vmatpush2.msra.mxu0 0.0
    %2114 = vmatprep.subr.mxu0 0.0
    %2115 = vmatpush2.msra.mxu0 0.0
    %2116 = vmatprep.subr.mxu0 0.0
    %2117 = vmatpush2.msra.mxu0 0.0
    %2118 = vmatprep.subr.mxu0 0.0
    %2119 = vmatpush2.msra.mxu0 0.0
    %2120 = vmatprep.mubr.f32.mxu0 0.0
    %2121 = vmatmul.mubr.f32.gmra.mxu0 %v2054
    %v2122 = vpop.f32.mrf.mxu0
    %v2123 = vadd.f32 %v443, %v2122
    %v2124 = vpop.f32.mrf.mxu0
    %2125 = vdwg.mxu0
    %2126 = vmatprep.subr.mxu0 0.0
    %2127 = vmatpush1.msra.mxu0 0.0
    %2128 = vmatprep.subr.mxu0 0.0
    %2129 = vmatpush1.msra.mxu0 0.0
    %2130 = vmatprep.subr.mxu0 0.0
    %2131 = vmatpush1.msra.mxu0 0.0
    %2132 = vmatprep.subr.mxu0 0.0
    %2133 = vmatpush1.msra.mxu0 0.0
    %2134 = vmatprep.subr.mxu0 0.0
    %2135 = vmatpush1.msra.mxu0 0.0
    %2136 = vmatprep.subr.mxu0 0.0
    %2137 = vmatpush1.msra.mxu0 0.0
    %2138 = vmatprep.subr.mxu0 0.0
    %2139 = vmatpush1.msra.mxu0 0.0
    %2140 = vmatprep.subr.mxu0 0.0
    %2141 = vmatpush1.msra.mxu0 0.0
    %2142 = vmatprep.subr.mxu0 0.0
    %2143 = vmatpush1.msra.mxu0 0.0
    %2144 = vmatprep.subr.mxu0 0.0
    %2145 = vmatpush1.msra.mxu0 0.0
    %2146 = vmatprep.subr.mxu0 0.0
    %2147 = vmatpush1.msra.mxu0 0.0
    %2148 = vmatprep.subr.mxu0 0.0
    %2149 = vmatpush1.msra.mxu0 0.0
    %2150 = vmatprep.subr.mxu0 0.0
    %2151 = vmatpush1.msra.mxu0 %v112
    %2152 = vmatprep.subr.mxu0 0.0
    %2153 = vmatpush1.msra.mxu0 %v111
    %2154 = vmatprep.subr.mxu0 0.0
    %2155 = vmatpush1.msra.mxu0 %v110
    %2156 = vmatprep.subr.mxu0 0.0
    %2157 = vmatpush1.msra.mxu0 %v109
    %2158 = vmatprep.subr.mxu0 0.0
    %2159 = vmatpush2.msra.mxu0 0.0
    %2160 = vmatprep.subr.mxu0 0.0
    %2161 = vmatpush2.msra.mxu0 0.0
    %2162 = vmatprep.subr.mxu0 0.0
    %2163 = vmatpush2.msra.mxu0 0.0
    %2164 = vmatprep.subr.mxu0 0.0
    %2165 = vmatpush2.msra.mxu0 0.0
    %2166 = vmatprep.subr.mxu0 0.0
    %2167 = vmatpush2.msra.mxu0 0.0
    %2168 = vmatprep.subr.mxu0 0.0
    %2169 = vmatpush2.msra.mxu0 0.0
    %2170 = vmatprep.subr.mxu0 0.0
    %2171 = vmatpush2.msra.mxu0 0.0
    %2172 = vmatprep.subr.mxu0 0.0
    %2173 = vmatpush2.msra.mxu0 0.0
    %2174 = vmatprep.subr.mxu0 0.0
    %2175 = vmatpush2.msra.mxu0 0.0
    %2176 = vmatprep.subr.mxu0 0.0
    %2177 = vmatpush2.msra.mxu0 0.0
    %2178 = vmatprep.subr.mxu0 0.0
    %2179 = vmatpush2.msra.mxu0 0.0
    %2180 = vmatprep.subr.mxu0 0.0
    %2181 = vmatpush2.msra.mxu0 0.0
    %2182 = vmatprep.subr.mxu0 0.0
    %2183 = vmatpush2.msra.mxu0 0.0
    %2184 = vmatprep.subr.mxu0 0.0
    %2185 = vmatpush2.msra.mxu0 0.0
    %2186 = vmatprep.subr.mxu0 0.0
    %2187 = vmatpush2.msra.mxu0 0.0
    %2188 = vmatprep.subr.mxu0 0.0
    %2189 = vmatpush2.msra.mxu0 0.0
    %2190 = vmatprep.mubr.f32.mxu0 0.0
    %2191 = vmatmul.mubr.f32.gmra.mxu0 %v2054
    %v2192 = vpop.f32.mrf.mxu0
    %v2193 = vadd.f32 %v522, %v2192
    %v2194 = vpop.f32.mrf.mxu0
    %2195 = vdwg.mxu0
    %2196 = vmatprep.subr.mxu0 0.0
    %2197 = vmatpush1.msra.mxu0 0.0
    %2198 = vmatprep.subr.mxu0 0.0
    %2199 = vmatpush1.msra.mxu0 0.0
    %2200 = vmatprep.subr.mxu0 0.0
    %2201 = vmatpush1.msra.mxu0 0.0
    %2202 = vmatprep.subr.mxu0 0.0
    %2203 = vmatpush1.msra.mxu0 0.0
    %2204 = vmatprep.subr.mxu0 0.0
    %2205 = vmatpush1.msra.mxu0 0.0
    %2206 = vmatprep.subr.mxu0 0.0
    %2207 = vmatpush1.msra.mxu0 0.0
    %2208 = vmatprep.subr.mxu0 0.0
    %2209 = vmatpush1.msra.mxu0 0.0
    %2210 = vmatprep.subr.mxu0 0.0
    %2211 = vmatpush1.msra.mxu0 0.0
    %2212 = vmatprep.subr.mxu0 0.0
    %2213 = vmatpush1.msra.mxu0 0.0
    %2214 = vmatprep.subr.mxu0 0.0
    %2215 = vmatpush1.msra.mxu0 0.0
    %2216 = vmatprep.subr.mxu0 0.0
    %2217 = vmatpush1.msra.mxu0 0.0
    %2218 = vmatprep.subr.mxu0 0.0
    %2219 = vmatpush1.msra.mxu0 0.0
    %2220 = vmatprep.subr.mxu0 0.0
    %2221 = vmatpush1.msra.mxu0 %v117
    %2222 = vmatprep.subr.mxu0 0.0
    %2223 = vmatpush1.msra.mxu0 %v116
    %2224 = vmatprep.subr.mxu0 0.0
    %2225 = vmatpush1.msra.mxu0 %v115
    %2226 = vmatprep.subr.mxu0 0.0
    %2227 = vmatpush1.msra.mxu0 %v114
    %2228 = vmatprep.subr.mxu0 0.0
    %2229 = vmatpush2.msra.mxu0 0.0
    %2230 = vmatprep.subr.mxu0 0.0
    %2231 = vmatpush2.msra.mxu0 0.0
    %2232 = vmatprep.subr.mxu0 0.0
    %2233 = vmatpush2.msra.mxu0 0.0
    %2234 = vmatprep.subr.mxu0 0.0
    %2235 = vmatpush2.msra.mxu0 0.0
    %2236 = vmatprep.subr.mxu0 0.0
    %2237 = vmatpush2.msra.mxu0 0.0
    %2238 = vmatprep.subr.mxu0 0.0
    %2239 = vmatpush2.msra.mxu0 0.0
    %2240 = vmatprep.subr.mxu0 0.0
    %2241 = vmatpush2.msra.mxu0 0.0
    %2242 = vmatprep.subr.mxu0 0.0
    %2243 = vmatpush2.msra.mxu0 0.0
    %2244 = vmatprep.subr.mxu0 0.0
    %2245 = vmatpush2.msra.mxu0 0.0
    %2246 = vmatprep.subr.mxu0 0.0
    %2247 = vmatpush2.msra.mxu0 0.0
    %2248 = vmatprep.subr.mxu0 0.0
    %2249 = vmatpush2.msra.mxu0 0.0
    %2250 = vmatprep.subr.mxu0 0.0
    %2251 = vmatpush2.msra.mxu0 0.0
    %2252 = vmatprep.subr.mxu0 0.0
    %2253 = vmatpush2.msra.mxu0 0.0
    %2254 = vmatprep.subr.mxu0 0.0
    %2255 = vmatpush2.msra.mxu0 0.0
    %2256 = vmatprep.subr.mxu0 0.0
    %2257 = vmatpush2.msra.mxu0 0.0
    %2258 = vmatprep.subr.mxu0 0.0
    %2259 = vmatpush2.msra.mxu0 0.0
    %2260 = vmatprep.mubr.f32.mxu0 0.0
    %2261 = vmatmul.mubr.f32.gmra.mxu0 %v2054
    %v2262 = vpop.f32.mrf.mxu0
    %v2263 = vadd.f32 %v598, %v2262
    %v2264 = vpop.f32.mrf.mxu0
    %2265 = vdwg.mxu0
    %v2266 = vadd.f32 %v1910, %v2123
    %v2267 = vxor.u32 %v2266, 2147483648
    %v2268 = vmul.f32 %v2267, 1.442695
    %v2269 = vpow.pop %v2268
    %v2270 = vadd.f32 %v2269, 1.0
    %v2271 = vrcp.pop %v2270
    %v2272 = vmul.f32 1.0, %v2271
    %v2273 = vadd.f32 %v1980, %v2193
    %v2274 = vxor.u32 %v2273, 2147483648
    %v2275 = vmul.f32 %v2274, 1.442695
    %v2276 = vpow.pop %v2275
    %v2277 = vadd.f32 %v2276, 1.0
    %v2278 = vrcp.pop %v2277
    %v2279 = vmul.f32 1.0, %v2278
    %v2280 = vmul.f32 %v2272, %v2263
    %v2281 = vadd.f32 %v2050, %v2280
    %v2282 = vtanh.pop %v2281
    %v2283 = vsub.f32 1.0, %v2279
    %v2284 = vmul.f32 %v2283, %v2282
    %v2285 = vmul.f32 %v2279, %v1758
    %v2286 = vadd.f32 %v2284, %v2285
    %v2287 = vmul.f32 %v2286, %v695
    %v2288 = vsel %vm213, %v2287, 0.0
    %2289 = vadd.xlane.f32.xlu0 %v2288
    %v2290 = vpop.xlane.xlu0 %2289
    %v2291 = vadd.f32 %v2290, %v705
    %s2292 = scalar_lea.vmem [#allocation3], 32
    %v2293 = vld [vmem:[%s2292] sm:$0xff]
    %v2295 = vsel %vm132, %v2293, 0
    %2297 = vmatprep.subr.mxu0 0.0
    %2298 = vmatpush1.msra.mxu0 0.0
    %2299 = vmatprep.subr.mxu0 0.0
    %2300 = vmatpush1.msra.mxu0 0.0
    %2301 = vmatprep.subr.mxu0 0.0
    %2302 = vmatpush1.msra.mxu0 0.0
    %2303 = vmatprep.subr.mxu0 0.0
    %2304 = vmatpush1.msra.mxu0 0.0
    %2305 = vmatprep.subr.mxu0 0.0
    %2306 = vmatpush1.msra.mxu0 0.0
    %2307 = vmatprep.subr.mxu0 0.0
    %2308 = vmatpush1.msra.mxu0 0.0
    %2309 = vmatprep.subr.mxu0 0.0
    %2310 = vmatpush1.msra.mxu0 0.0
    %2311 = vmatprep.subr.mxu0 0.0
    %2312 = vmatpush1.msra.mxu0 0.0
    %2313 = vmatprep.subr.mxu0 0.0
    %2314 = vmatpush1.msra.mxu0 0.0
    %2315 = vmatprep.subr.mxu0 0.0
    %2316 = vmatpush1.msra.mxu0 0.0
    %2317 = vmatprep.subr.mxu0 0.0
    %2318 = vmatpush1.msra.mxu0 0.0
    %2319 = vmatprep.subr.mxu0 0.0
    %2320 = vmatpush1.msra.mxu0 0.0
    %2321 = vmatprep.subr.mxu0 0.0
    %2322 = vmatpush1.msra.mxu0 0.0
    %2323 = vmatprep.subr.mxu0 0.0
    %2324 = vmatpush1.msra.mxu0 0.0
    %2325 = vmatprep.subr.mxu0 0.0
    %2326 = vmatpush1.msra.mxu0 %v83
    %2327 = vmatprep.subr.mxu0 0.0
    %2328 = vmatpush1.msra.mxu0 %v82
    %2329 = vmatprep.subr.mxu0 0.0
    %2330 = vmatpush2.msra.mxu0 0.0
    %2331 = vmatprep.subr.mxu0 0.0
    %2332 = vmatpush2.msra.mxu0 0.0
    %2333 = vmatprep.subr.mxu0 0.0
    %2334 = vmatpush2.msra.mxu0 0.0
    %2335 = vmatprep.subr.mxu0 0.0
    %2336 = vmatpush2.msra.mxu0 0.0
    %2337 = vmatprep.subr.mxu0 0.0
    %2338 = vmatpush2.msra.mxu0 0.0
    %2339 = vmatprep.subr.mxu0 0.0
    %2340 = vmatpush2.msra.mxu0 0.0
    %2341 = vmatprep.subr.mxu0 0.0
    %2342 = vmatpush2.msra.mxu0 0.0
    %2343 = vmatprep.subr.mxu0 0.0
    %2344 = vmatpush2.msra.mxu0 0.0
    %2345 = vmatprep.subr.mxu0 0.0
    %2346 = vmatpush2.msra.mxu0 0.0
    %2347 = vmatprep.subr.mxu0 0.0
    %2348 = vmatpush2.msra.mxu0 0.0
    %2349 = vmatprep.subr.mxu0 0.0
    %2350 = vmatpush2.msra.mxu0 0.0
    %2351 = vmatprep.subr.mxu0 0.0
    %2352 = vmatpush2.msra.mxu0 0.0
    %2353 = vmatprep.subr.mxu0 0.0
    %2354 = vmatpush2.msra.mxu0 0.0
    %2355 = vmatprep.subr.mxu0 0.0
    %2356 = vmatpush2.msra.mxu0 0.0
    %2357 = vmatprep.subr.mxu0 0.0
    %2358 = vmatpush2.msra.mxu0 0.0
    %2359 = vmatprep.subr.mxu0 0.0
    %2360 = vmatpush2.msra.mxu0 0.0
    %2361 = vmatprep.mubr.f32.mxu0 0.0
    %2362 = vmatmul.mubr.f32.gmra.mxu0 %v2295
    %v2363 = vpop.f32.mrf.mxu0
    %v2364 = vadd.f32 %v130, %v2363
    %v2365 = vpop.f32.mrf.mxu0
    %2366 = vdwg.mxu0
    %v2367 = vmax.f32 %v2364, 0.0
    %v2369 = vsel %vm213, %v2367, 0
    %2371 = vmatprep.subr.mxu0 0.0
    %2372 = vmatpush1.msra.mxu0 0.0
    %2373 = vmatprep.subr.mxu0 0.0
    %2374 = vmatpush1.msra.mxu0 0.0
    %2375 = vmatprep.subr.mxu0 0.0
    %2376 = vmatpush1.msra.mxu0 0.0
    %2377 = vmatprep.subr.mxu0 0.0
    %2378 = vmatpush1.msra.mxu0 0.0
    %2379 = vmatprep.subr.mxu0 0.0
    %2380 = vmatpush1.msra.mxu0 0.0
    %2381 = vmatprep.subr.mxu0 0.0
    %2382 = vmatpush1.msra.mxu0 0.0
    %2383 = vmatprep.subr.mxu0 0.0
    %2384 = vmatpush1.msra.mxu0 0.0
    %2385 = vmatprep.subr.mxu0 0.0
    %2386 = vmatpush1.msra.mxu0 0.0
    %2387 = vmatprep.subr.mxu0 0.0
    %2388 = vmatpush1.msra.mxu0 0.0
    %2389 = vmatprep.subr.mxu0 0.0
    %2390 = vmatpush1.msra.mxu0 0.0
    %2391 = vmatprep.subr.mxu0 0.0
    %2392 = vmatpush1.msra.mxu0 0.0
    %2393 = vmatprep.subr.mxu0 0.0
    %2394 = vmatpush1.msra.mxu0 0.0
    %2395 = vmatprep.subr.mxu0 0.0
    %2396 = vmatpush1.msra.mxu0 %v88
    %2397 = vmatprep.subr.mxu0 0.0
    %2398 = vmatpush1.msra.mxu0 %v87
    %2399 = vmatprep.subr.mxu0 0.0
    %2400 = vmatpush1.msra.mxu0 %v86
    %2401 = vmatprep.subr.mxu0 0.0
    %2402 = vmatpush1.msra.mxu0 %v85
    %2403 = vmatprep.subr.mxu0 0.0
    %2404 = vmatpush2.msra.mxu0 0.0
    %2405 = vmatprep.subr.mxu0 0.0
    %2406 = vmatpush2.msra.mxu0 0.0
    %2407 = vmatprep.subr.mxu0 0.0
    %2408 = vmatpush2.msra.mxu0 0.0
    %2409 = vmatprep.subr.mxu0 0.0
    %2410 = vmatpush2.msra.mxu0 0.0
    %2411 = vmatprep.subr.mxu0 0.0
    %2412 = vmatpush2.msra.mxu0 0.0
    %2413 = vmatprep.subr.mxu0 0.0
    %2414 = vmatpush2.msra.mxu0 0.0
    %2415 = vmatprep.subr.mxu0 0.0
    %2416 = vmatpush2.msra.mxu0 0.0
    %2417 = vmatprep.subr.mxu0 0.0
    %2418 = vmatpush2.msra.mxu0 0.0
    %2419 = vmatprep.subr.mxu0 0.0
    %2420 = vmatpush2.msra.mxu0 0.0
    %2421 = vmatprep.subr.mxu0 0.0
    %2422 = vmatpush2.msra.mxu0 0.0
    %2423 = vmatprep.subr.mxu0 0.0
    %2424 = vmatpush2.msra.mxu0 0.0
    %2425 = vmatprep.subr.mxu0 0.0
    %2426 = vmatpush2.msra.mxu0 0.0
    %2427 = vmatprep.subr.mxu0 0.0
    %2428 = vmatpush2.msra.mxu0 0.0
    %2429 = vmatprep.subr.mxu0 0.0
    %2430 = vmatpush2.msra.mxu0 0.0
    %2431 = vmatprep.subr.mxu0 0.0
    %2432 = vmatpush2.msra.mxu0 0.0
    %2433 = vmatprep.subr.mxu0 0.0
    %2434 = vmatpush2.msra.mxu0 0.0
    %2435 = vmatprep.mubr.f32.mxu0 0.0
    %2436 = vmatmul.mubr.f32.gmra.mxu0 %v2369
    %v2437 = vpop.f32.mrf.mxu0
    %v2438 = vadd.f32 %v211, %v2437
    %v2439 = vpop.f32.mrf.mxu0
    %2440 = vdwg.mxu0
    %2441 = vmatprep.subr.mxu0 0.0
    %2442 = vmatpush1.msra.mxu0 0.0
    %2443 = vmatprep.subr.mxu0 0.0
    %2444 = vmatpush1.msra.mxu0 0.0
    %2445 = vmatprep.subr.mxu0 0.0
    %2446 = vmatpush1.msra.mxu0 0.0
    %2447 = vmatprep.subr.mxu0 0.0
    %2448 = vmatpush1.msra.mxu0 0.0
    %2449 = vmatprep.subr.mxu0 0.0
    %2450 = vmatpush1.msra.mxu0 0.0
    %2451 = vmatprep.subr.mxu0 0.0
    %2452 = vmatpush1.msra.mxu0 0.0
    %2453 = vmatprep.subr.mxu0 0.0
    %2454 = vmatpush1.msra.mxu0 0.0
    %2455 = vmatprep.subr.mxu0 0.0
    %2456 = vmatpush1.msra.mxu0 0.0
    %2457 = vmatprep.subr.mxu0 0.0
    %2458 = vmatpush1.msra.mxu0 0.0
    %2459 = vmatprep.subr.mxu0 0.0
    %2460 = vmatpush1.msra.mxu0 0.0
    %2461 = vmatprep.subr.mxu0 0.0
    %2462 = vmatpush1.msra.mxu0 0.0
    %2463 = vmatprep.subr.mxu0 0.0
    %2464 = vmatpush1.msra.mxu0 0.0
    %2465 = vmatprep.subr.mxu0 0.0
    %2466 = vmatpush1.msra.mxu0 %v93
    %2467 = vmatprep.subr.mxu0 0.0
    %2468 = vmatpush1.msra.mxu0 %v92
    %2469 = vmatprep.subr.mxu0 0.0
    %2470 = vmatpush1.msra.mxu0 %v91
    %2471 = vmatprep.subr.mxu0 0.0
    %2472 = vmatpush1.msra.mxu0 %v90
    %2473 = vmatprep.subr.mxu0 0.0
    %2474 = vmatpush2.msra.mxu0 0.0
    %2475 = vmatprep.subr.mxu0 0.0
    %2476 = vmatpush2.msra.mxu0 0.0
    %2477 = vmatprep.subr.mxu0 0.0
    %2478 = vmatpush2.msra.mxu0 0.0
    %2479 = vmatprep.subr.mxu0 0.0
    %2480 = vmatpush2.msra.mxu0 0.0
    %2481 = vmatprep.subr.mxu0 0.0
    %2482 = vmatpush2.msra.mxu0 0.0
    %2483 = vmatprep.subr.mxu0 0.0
    %2484 = vmatpush2.msra.mxu0 0.0
    %2485 = vmatprep.subr.mxu0 0.0
    %2486 = vmatpush2.msra.mxu0 0.0
    %2487 = vmatprep.subr.mxu0 0.0
    %2488 = vmatpush2.msra.mxu0 0.0
    %2489 = vmatprep.subr.mxu0 0.0
    %2490 = vmatpush2.msra.mxu0 0.0
    %2491 = vmatprep.subr.mxu0 0.0
    %2492 = vmatpush2.msra.mxu0 0.0
    %2493 = vmatprep.subr.mxu0 0.0
    %2494 = vmatpush2.msra.mxu0 0.0
    %2495 = vmatprep.subr.mxu0 0.0
    %2496 = vmatpush2.msra.mxu0 0.0
    %2497 = vmatprep.subr.mxu0 0.0
    %2498 = vmatpush2.msra.mxu0 0.0
    %2499 = vmatprep.subr.mxu0 0.0
    %2500 = vmatpush2.msra.mxu0 0.0
    %2501 = vmatprep.subr.mxu0 0.0
    %2502 = vmatpush2.msra.mxu0 0.0
    %2503 = vmatprep.subr.mxu0 0.0
    %2504 = vmatpush2.msra.mxu0 0.0
    %2505 = vmatprep.mubr.f32.mxu0 0.0
    %2506 = vmatmul.mubr.f32.gmra.mxu0 %v2369
    %v2507 = vpop.f32.mrf.mxu0
    %v2508 = vadd.f32 %v291, %v2507
    %v2509 = vpop.f32.mrf.mxu0
    %2510 = vdwg.mxu0
    %2511 = vmatprep.subr.mxu0 0.0
    %2512 = vmatpush1.msra.mxu0 0.0
    %2513 = vmatprep.subr.mxu0 0.0
    %2514 = vmatpush1.msra.mxu0 0.0
    %2515 = vmatprep.subr.mxu0 0.0
    %2516 = vmatpush1.msra.mxu0 0.0
    %2517 = vmatprep.subr.mxu0 0.0
    %2518 = vmatpush1.msra.mxu0 0.0
    %2519 = vmatprep.subr.mxu0 0.0
    %2520 = vmatpush1.msra.mxu0 0.0
    %2521 = vmatprep.subr.mxu0 0.0
    %2522 = vmatpush1.msra.mxu0 0.0
    %2523 = vmatprep.subr.mxu0 0.0
    %2524 = vmatpush1.msra.mxu0 0.0
    %2525 = vmatprep.subr.mxu0 0.0
    %2526 = vmatpush1.msra.mxu0 0.0
    %2527 = vmatprep.subr.mxu0 0.0
    %2528 = vmatpush1.msra.mxu0 0.0
    %2529 = vmatprep.subr.mxu0 0.0
    %2530 = vmatpush1.msra.mxu0 0.0
    %2531 = vmatprep.subr.mxu0 0.0
    %2532 = vmatpush1.msra.mxu0 0.0
    %2533 = vmatprep.subr.mxu0 0.0
    %2534 = vmatpush1.msra.mxu0 0.0
    %2535 = vmatprep.subr.mxu0 0.0
    %2536 = vmatpush1.msra.mxu0 %v98
    %2537 = vmatprep.subr.mxu0 0.0
    %2538 = vmatpush1.msra.mxu0 %v97
    %2539 = vmatprep.subr.mxu0 0.0
    %2540 = vmatpush1.msra.mxu0 %v96
    %2541 = vmatprep.subr.mxu0 0.0
    %2542 = vmatpush1.msra.mxu0 %v95
    %2543 = vmatprep.subr.mxu0 0.0
    %2544 = vmatpush2.msra.mxu0 0.0
    %2545 = vmatprep.subr.mxu0 0.0
    %2546 = vmatpush2.msra.mxu0 0.0
    %2547 = vmatprep.subr.mxu0 0.0
    %2548 = vmatpush2.msra.mxu0 0.0
    %2549 = vmatprep.subr.mxu0 0.0
    %2550 = vmatpush2.msra.mxu0 0.0
    %2551 = vmatprep.subr.mxu0 0.0
    %2552 = vmatpush2.msra.mxu0 0.0
    %2553 = vmatprep.subr.mxu0 0.0
    %2554 = vmatpush2.msra.mxu0 0.0
    %2555 = vmatprep.subr.mxu0 0.0
    %2556 = vmatpush2.msra.mxu0 0.0
    %2557 = vmatprep.subr.mxu0 0.0
    %2558 = vmatpush2.msra.mxu0 0.0
    %2559 = vmatprep.subr.mxu0 0.0
    %2560 = vmatpush2.msra.mxu0 0.0
    %2561 = vmatprep.subr.mxu0 0.0
    %2562 = vmatpush2.msra.mxu0 0.0
    %2563 = vmatprep.subr.mxu0 0.0
    %2564 = vmatpush2.msra.mxu0 0.0
    %2565 = vmatprep.subr.mxu0 0.0
    %2566 = vmatpush2.msra.mxu0 0.0
    %2567 = vmatprep.subr.mxu0 0.0
    %2568 = vmatpush2.msra.mxu0 0.0
    %2569 = vmatprep.subr.mxu0 0.0
    %2570 = vmatpush2.msra.mxu0 0.0
    %2571 = vmatprep.subr.mxu0 0.0
    %2572 = vmatpush2.msra.mxu0 0.0
    %2573 = vmatprep.subr.mxu0 0.0
    %2574 = vmatpush2.msra.mxu0 0.0
    %2575 = vmatprep.mubr.f32.mxu0 0.0
    %2576 = vmatmul.mubr.f32.gmra.mxu0 %v2369
    %v2577 = vpop.f32.mrf.mxu0
    %v2578 = vadd.f32 %v367, %v2577
    %v2579 = vpop.f32.mrf.mxu0
    %2580 = vdwg.mxu0
    %v2582 = vsel %vm213, %v2286, 0
    %2584 = vmatprep.subr.mxu0 0.0
    %2585 = vmatpush1.msra.mxu0 0.0
    %2586 = vmatprep.subr.mxu0 0.0
    %2587 = vmatpush1.msra.mxu0 0.0
    %2588 = vmatprep.subr.mxu0 0.0
    %2589 = vmatpush1.msra.mxu0 0.0
    %2590 = vmatprep.subr.mxu0 0.0
    %2591 = vmatpush1.msra.mxu0 0.0
    %2592 = vmatprep.subr.mxu0 0.0
    %2593 = vmatpush1.msra.mxu0 0.0
    %2594 = vmatprep.subr.mxu0 0.0
    %2595 = vmatpush1.msra.mxu0 0.0
    %2596 = vmatprep.subr.mxu0 0.0
    %2597 = vmatpush1.msra.mxu0 0.0
    %2598 = vmatprep.subr.mxu0 0.0
    %2599 = vmatpush1.msra.mxu0 0.0
    %2600 = vmatprep.subr.mxu0 0.0
    %2601 = vmatpush1.msra.mxu0 0.0
    %2602 = vmatprep.subr.mxu0 0.0
    %2603 = vmatpush1.msra.mxu0 0.0
    %2604 = vmatprep.subr.mxu0 0.0
    %2605 = vmatpush1.msra.mxu0 0.0
    %2606 = vmatprep.subr.mxu0 0.0
    %2607 = vmatpush1.msra.mxu0 0.0
    %2608 = vmatprep.subr.mxu0 0.0
    %2609 = vmatpush1.msra.mxu0 %v107
    %2610 = vmatprep.subr.mxu0 0.0
    %2611 = vmatpush1.msra.mxu0 %v106
    %2612 = vmatprep.subr.mxu0 0.0
    %2613 = vmatpush1.msra.mxu0 %v105
    %2614 = vmatprep.subr.mxu0 0.0
    %2615 = vmatpush1.msra.mxu0 %v104
    %2616 = vmatprep.subr.mxu0 0.0
    %2617 = vmatpush2.msra.mxu0 0.0
    %2618 = vmatprep.subr.mxu0 0.0
    %2619 = vmatpush2.msra.mxu0 0.0
    %2620 = vmatprep.subr.mxu0 0.0
    %2621 = vmatpush2.msra.mxu0 0.0
    %2622 = vmatprep.subr.mxu0 0.0
    %2623 = vmatpush2.msra.mxu0 0.0
    %2624 = vmatprep.subr.mxu0 0.0
    %2625 = vmatpush2.msra.mxu0 0.0
    %2626 = vmatprep.subr.mxu0 0.0
    %2627 = vmatpush2.msra.mxu0 0.0
    %2628 = vmatprep.subr.mxu0 0.0
    %2629 = vmatpush2.msra.mxu0 0.0
    %2630 = vmatprep.subr.mxu0 0.0
    %2631 = vmatpush2.msra.mxu0 0.0
    %2632 = vmatprep.subr.mxu0 0.0
    %2633 = vmatpush2.msra.mxu0 0.0
    %2634 = vmatprep.subr.mxu0 0.0
    %2635 = vmatpush2.msra.mxu0 0.0
    %2636 = vmatprep.subr.mxu0 0.0
    %2637 = vmatpush2.msra.mxu0 0.0
    %2638 = vmatprep.subr.mxu0 0.0
    %2639 = vmatpush2.msra.mxu0 0.0
    %2640 = vmatprep.subr.mxu0 0.0
    %2641 = vmatpush2.msra.mxu0 0.0
    %2642 = vmatprep.subr.mxu0 0.0
    %2643 = vmatpush2.msra.mxu0 0.0
    %2644 = vmatprep.subr.mxu0 0.0
    %2645 = vmatpush2.msra.mxu0 0.0
    %2646 = vmatprep.subr.mxu0 0.0
    %2647 = vmatpush2.msra.mxu0 0.0
    %2648 = vmatprep.mubr.f32.mxu0 0.0
    %2649 = vmatmul.mubr.f32.gmra.mxu0 %v2582
    %v2650 = vpop.f32.mrf.mxu0
    %v2651 = vadd.f32 %v443, %v2650
    %v2652 = vpop.f32.mrf.mxu0
    %2653 = vdwg.mxu0
    %2654 = vmatprep.subr.mxu0 0.0
    %2655 = vmatpush1.msra.mxu0 0.0
    %2656 = vmatprep.subr.mxu0 0.0
    %2657 = vmatpush1.msra.mxu0 0.0
    %2658 = vmatprep.subr.mxu0 0.0
    %2659 = vmatpush1.msra.mxu0 0.0
    %2660 = vmatprep.subr.mxu0 0.0
    %2661 = vmatpush1.msra.mxu0 0.0
    %2662 = vmatprep.subr.mxu0 0.0
    %2663 = vmatpush1.msra.mxu0 0.0
    %2664 = vmatprep.subr.mxu0 0.0
    %2665 = vmatpush1.msra.mxu0 0.0
    %2666 = vmatprep.subr.mxu0 0.0
    %2667 = vmatpush1.msra.mxu0 0.0
    %2668 = vmatprep.subr.mxu0 0.0
    %2669 = vmatpush1.msra.mxu0 0.0
    %2670 = vmatprep.subr.mxu0 0.0
    %2671 = vmatpush1.msra.mxu0 0.0
    %2672 = vmatprep.subr.mxu0 0.0
    %2673 = vmatpush1.msra.mxu0 0.0
    %2674 = vmatprep.subr.mxu0 0.0
    %2675 = vmatpush1.msra.mxu0 0.0
    %2676 = vmatprep.subr.mxu0 0.0
    %2677 = vmatpush1.msra.mxu0 0.0
    %2678 = vmatprep.subr.mxu0 0.0
    %2679 = vmatpush1.msra.mxu0 %v112
    %2680 = vmatprep.subr.mxu0 0.0
    %2681 = vmatpush1.msra.mxu0 %v111
    %2682 = vmatprep.subr.mxu0 0.0
    %2683 = vmatpush1.msra.mxu0 %v110
    %2684 = vmatprep.subr.mxu0 0.0
    %2685 = vmatpush1.msra.mxu0 %v109
    %2686 = vmatprep.subr.mxu0 0.0
    %2687 = vmatpush2.msra.mxu0 0.0
    %2688 = vmatprep.subr.mxu0 0.0
    %2689 = vmatpush2.msra.mxu0 0.0
    %2690 = vmatprep.subr.mxu0 0.0
    %2691 = vmatpush2.msra.mxu0 0.0
    %2692 = vmatprep.subr.mxu0 0.0
    %2693 = vmatpush2.msra.mxu0 0.0
    %2694 = vmatprep.subr.mxu0 0.0
    %2695 = vmatpush2.msra.mxu0 0.0
    %2696 = vmatprep.subr.mxu0 0.0
    %2697 = vmatpush2.msra.mxu0 0.0
    %2698 = vmatprep.subr.mxu0 0.0
    %2699 = vmatpush2.msra.mxu0 0.0
    %2700 = vmatprep.subr.mxu0 0.0
    %2701 = vmatpush2.msra.mxu0 0.0
    %2702 = vmatprep.subr.mxu0 0.0
    %2703 = vmatpush2.msra.mxu0 0.0
    %2704 = vmatprep.subr.mxu0 0.0
    %2705 = vmatpush2.msra.mxu0 0.0
    %2706 = vmatprep.subr.mxu0 0.0
    %2707 = vmatpush2.msra.mxu0 0.0
    %2708 = vmatprep.subr.mxu0 0.0
    %2709 = vmatpush2.msra.mxu0 0.0
    %2710 = vmatprep.subr.mxu0 0.0
    %2711 = vmatpush2.msra.mxu0 0.0
    %2712 = vmatprep.subr.mxu0 0.0
    %2713 = vmatpush2.msra.mxu0 0.0
    %2714 = vmatprep.subr.mxu0 0.0
    %2715 = vmatpush2.msra.mxu0 0.0
    %2716 = vmatprep.subr.mxu0 0.0
    %2717 = vmatpush2.msra.mxu0 0.0
    %2718 = vmatprep.mubr.f32.mxu0 0.0
    %2719 = vmatmul.mubr.f32.gmra.mxu0 %v2582
    %v2720 = vpop.f32.mrf.mxu0
    %v2721 = vadd.f32 %v522, %v2720
    %v2722 = vpop.f32.mrf.mxu0
    %2723 = vdwg.mxu0
    %2724 = vmatprep.subr.mxu0 0.0
    %2725 = vmatpush1.msra.mxu0 0.0
    %2726 = vmatprep.subr.mxu0 0.0
    %2727 = vmatpush1.msra.mxu0 0.0
    %2728 = vmatprep.subr.mxu0 0.0
    %2729 = vmatpush1.msra.mxu0 0.0
    %2730 = vmatprep.subr.mxu0 0.0
    %2731 = vmatpush1.msra.mxu0 0.0
    %2732 = vmatprep.subr.mxu0 0.0
    %2733 = vmatpush1.msra.mxu0 0.0
    %2734 = vmatprep.subr.mxu0 0.0
    %2735 = vmatpush1.msra.mxu0 0.0
    %2736 = vmatprep.subr.mxu0 0.0
    %2737 = vmatpush1.msra.mxu0 0.0
    %2738 = vmatprep.subr.mxu0 0.0
    %2739 = vmatpush1.msra.mxu0 0.0
    %2740 = vmatprep.subr.mxu0 0.0
    %2741 = vmatpush1.msra.mxu0 0.0
    %2742 = vmatprep.subr.mxu0 0.0
    %2743 = vmatpush1.msra.mxu0 0.0
    %2744 = vmatprep.subr.mxu0 0.0
    %2745 = vmatpush1.msra.mxu0 0.0
    %2746 = vmatprep.subr.mxu0 0.0
    %2747 = vmatpush1.msra.mxu0 0.0
    %2748 = vmatprep.subr.mxu0 0.0
    %2749 = vmatpush1.msra.mxu0 %v117
    %2750 = vmatprep.subr.mxu0 0.0
    %2751 = vmatpush1.msra.mxu0 %v116
    %2752 = vmatprep.subr.mxu0 0.0
    %2753 = vmatpush1.msra.mxu0 %v115
    %2754 = vmatprep.subr.mxu0 0.0
    %2755 = vmatpush1.msra.mxu0 %v114
    %2756 = vmatprep.subr.mxu0 0.0
    %2757 = vmatpush2.msra.mxu0 0.0
    %2758 = vmatprep.subr.mxu0 0.0
    %2759 = vmatpush2.msra.mxu0 0.0
    %2760 = vmatprep.subr.mxu0 0.0
    %2761 = vmatpush2.msra.mxu0 0.0
    %2762 = vmatprep.subr.mxu0 0.0
    %2763 = vmatpush2.msra.mxu0 0.0
    %2764 = vmatprep.subr.mxu0 0.0
    %2765 = vmatpush2.msra.mxu0 0.0
    %2766 = vmatprep.subr.mxu0 0.0
    %2767 = vmatpush2.msra.mxu0 0.0
    %2768 = vmatprep.subr.mxu0 0.0
    %2769 = vmatpush2.msra.mxu0 0.0
    %2770 = vmatprep.subr.mxu0 0.0
    %2771 = vmatpush2.msra.mxu0 0.0
    %2772 = vmatprep.subr.mxu0 0.0
    %2773 = vmatpush2.msra.mxu0 0.0
    %2774 = vmatprep.subr.mxu0 0.0
    %2775 = vmatpush2.msra.mxu0 0.0
    %2776 = vmatprep.subr.mxu0 0.0
    %2777 = vmatpush2.msra.mxu0 0.0
    %2778 = vmatprep.subr.mxu0 0.0
    %2779 = vmatpush2.msra.mxu0 0.0
    %2780 = vmatprep.subr.mxu0 0.0
    %2781 = vmatpush2.msra.mxu0 0.0
    %2782 = vmatprep.subr.mxu0 0.0
    %2783 = vmatpush2.msra.mxu0 0.0
    %2784 = vmatprep.subr.mxu0 0.0
    %2785 = vmatpush2.msra.mxu0 0.0
    %2786 = vmatprep.subr.mxu0 0.0
    %2787 = vmatpush2.msra.mxu0 0.0
    %2788 = vmatprep.mubr.f32.mxu0 0.0
    %2789 = vmatmul.mubr.f32.gmra.mxu0 %v2582
    %v2790 = vpop.f32.mrf.mxu0
    %v2791 = vadd.f32 %v598, %v2790
    %v2792 = vpop.f32.mrf.mxu0
    %2793 = vdwg.mxu0
    %v2794 = vadd.f32 %v2438, %v2651
    %v2795 = vxor.u32 %v2794, 2147483648
    %v2796 = vmul.f32 %v2795, 1.442695
    %v2797 = vpow.pop %v2796
    %v2798 = vadd.f32 %v2797, 1.0
    %v2799 = vrcp.pop %v2798
    %v2800 = vmul.f32 1.0, %v2799
    %v2801 = vadd.f32 %v2508, %v2721
    %v2802 = vxor.u32 %v2801, 2147483648
    %v2803 = vmul.f32 %v2802, 1.442695
    %v2804 = vpow.pop %v2803
    %v2805 = vadd.f32 %v2804, 1.0
    %v2806 = vrcp.pop %v2805
    %v2807 = vmul.f32 1.0, %v2806
    %v2808 = vmul.f32 %v2800, %v2791
    %v2809 = vadd.f32 %v2578, %v2808
    %v2810 = vtanh.pop %v2809
    %v2811 = vsub.f32 1.0, %v2807
    %v2812 = vmul.f32 %v2811, %v2810
    %v2813 = vmul.f32 %v2807, %v2286
    %v2814 = vadd.f32 %v2812, %v2813
    %v2815 = vmul.f32 %v2814, %v695
    %v2816 = vsel %vm213, %v2815, 0.0
    %2817 = vadd.xlane.f32.xlu0 %v2816
    %v2818 = vpop.xlane.xlu0 %2817
    %v2819 = vadd.f32 %v2818, %v705
    %s2820 = scalar_lea.vmem [#allocation3], 40
    %v2821 = vld [vmem:[%s2820] sm:$0xff]
    %v2823 = vsel %vm132, %v2821, 0
    %2825 = vmatprep.subr.mxu0 0.0
    %2826 = vmatpush1.msra.mxu0 0.0
    %2827 = vmatprep.subr.mxu0 0.0
    %2828 = vmatpush1.msra.mxu0 0.0
    %2829 = vmatprep.subr.mxu0 0.0
    %2830 = vmatpush1.msra.mxu0 0.0
    %2831 = vmatprep.subr.mxu0 0.0
    %2832 = vmatpush1.msra.mxu0 0.0
    %2833 = vmatprep.subr.mxu0 0.0
    %2834 = vmatpush1.msra.mxu0 0.0
    %2835 = vmatprep.subr.mxu0 0.0
    %2836 = vmatpush1.msra.mxu0 0.0
    %2837 = vmatprep.subr.mxu0 0.0
    %2838 = vmatpush1.msra.mxu0 0.0
    %2839 = vmatprep.subr.mxu0 0.0
    %2840 = vmatpush1.msra.mxu0 0.0
    %2841 = vmatprep.subr.mxu0 0.0
    %2842 = vmatpush1.msra.mxu0 0.0
    %2843 = vmatprep.subr.mxu0 0.0
    %2844 = vmatpush1.msra.mxu0 0.0
    %2845 = vmatprep.subr.mxu0 0.0
    %2846 = vmatpush1.msra.mxu0 0.0
    %2847 = vmatprep.subr.mxu0 0.0
    %2848 = vmatpush1.msra.mxu0 0.0
    %2849 = vmatprep.subr.mxu0 0.0
    %2850 = vmatpush1.msra.mxu0 0.0
    %2851 = vmatprep.subr.mxu0 0.0
    %2852 = vmatpush1.msra.mxu0 0.0
    %2853 = vmatprep.subr.mxu0 0.0
    %2854 = vmatpush1.msra.mxu0 %v83
    %2855 = vmatprep.subr.mxu0 0.0
    %2856 = vmatpush1.msra.mxu0 %v82
    %2857 = vmatprep.subr.mxu0 0.0
    %2858 = vmatpush2.msra.mxu0 0.0
    %2859 = vmatprep.subr.mxu0 0.0
    %2860 = vmatpush2.msra.mxu0 0.0
    %2861 = vmatprep.subr.mxu0 0.0
    %2862 = vmatpush2.msra.mxu0 0.0
    %2863 = vmatprep.subr.mxu0 0.0
    %2864 = vmatpush2.msra.mxu0 0.0
    %2865 = vmatprep.subr.mxu0 0.0
    %2866 = vmatpush2.msra.mxu0 0.0
    %2867 = vmatprep.subr.mxu0 0.0
    %2868 = vmatpush2.msra.mxu0 0.0
    %2869 = vmatprep.subr.mxu0 0.0
    %2870 = vmatpush2.msra.mxu0 0.0
    %2871 = vmatprep.subr.mxu0 0.0
    %2872 = vmatpush2.msra.mxu0 0.0
    %2873 = vmatprep.subr.mxu0 0.0
    %2874 = vmatpush2.msra.mxu0 0.0
    %2875 = vmatprep.subr.mxu0 0.0
    %2876 = vmatpush2.msra.mxu0 0.0
    %2877 = vmatprep.subr.mxu0 0.0
    %2878 = vmatpush2.msra.mxu0 0.0
    %2879 = vmatprep.subr.mxu0 0.0
    %2880 = vmatpush2.msra.mxu0 0.0
    %2881 = vmatprep.subr.mxu0 0.0
    %2882 = vmatpush2.msra.mxu0 0.0
    %2883 = vmatprep.subr.mxu0 0.0
    %2884 = vmatpush2.msra.mxu0 0.0
    %2885 = vmatprep.subr.mxu0 0.0
    %2886 = vmatpush2.msra.mxu0 0.0
    %2887 = vmatprep.subr.mxu0 0.0
    %2888 = vmatpush2.msra.mxu0 0.0
    %2889 = vmatprep.mubr.f32.mxu0 0.0
    %2890 = vmatmul.mubr.f32.gmra.mxu0 %v2823
    %v2891 = vpop.f32.mrf.mxu0
    %v2892 = vadd.f32 %v130, %v2891
    %v2893 = vpop.f32.mrf.mxu0
    %2894 = vdwg.mxu0
    %v2895 = vmax.f32 %v2892, 0.0
    %v2897 = vsel %vm213, %v2895, 0
    %2899 = vmatprep.subr.mxu0 0.0
    %2900 = vmatpush1.msra.mxu0 0.0
    %2901 = vmatprep.subr.mxu0 0.0
    %2902 = vmatpush1.msra.mxu0 0.0
    %2903 = vmatprep.subr.mxu0 0.0
    %2904 = vmatpush1.msra.mxu0 0.0
    %2905 = vmatprep.subr.mxu0 0.0
    %2906 = vmatpush1.msra.mxu0 0.0
    %2907 = vmatprep.subr.mxu0 0.0
    %2908 = vmatpush1.msra.mxu0 0.0
    %2909 = vmatprep.subr.mxu0 0.0
    %2910 = vmatpush1.msra.mxu0 0.0
    %2911 = vmatprep.subr.mxu0 0.0
    %2912 = vmatpush1.msra.mxu0 0.0
    %2913 = vmatprep.subr.mxu0 0.0
    %2914 = vmatpush1.msra.mxu0 0.0
    %2915 = vmatprep.subr.mxu0 0.0
    %2916 = vmatpush1.msra.mxu0 0.0
    %2917 = vmatprep.subr.mxu0 0.0
    %2918 = vmatpush1.msra.mxu0 0.0
    %2919 = vmatprep.subr.mxu0 0.0
    %2920 = vmatpush1.msra.mxu0 0.0
    %2921 = vmatprep.subr.mxu0 0.0
    %2922 = vmatpush1.msra.mxu0 0.0
    %2923 = vmatprep.subr.mxu0 0.0
    %2924 = vmatpush1.msra.mxu0 %v88
    %2925 = vmatprep.subr.mxu0 0.0
    %2926 = vmatpush1.msra.mxu0 %v87
    %2927 = vmatprep.subr.mxu0 0.0
    %2928 = vmatpush1.msra.mxu0 %v86
    %2929 = vmatprep.subr.mxu0 0.0
    %2930 = vmatpush1.msra.mxu0 %v85
    %2931 = vmatprep.subr.mxu0 0.0
    %2932 = vmatpush2.msra.mxu0 0.0
    %2933 = vmatprep.subr.mxu0 0.0
    %2934 = vmatpush2.msra.mxu0 0.0
    %2935 = vmatprep.subr.mxu0 0.0
    %2936 = vmatpush2.msra.mxu0 0.0
    %2937 = vmatprep.subr.mxu0 0.0
    %2938 = vmatpush2.msra.mxu0 0.0
    %2939 = vmatprep.subr.mxu0 0.0
    %2940 = vmatpush2.msra.mxu0 0.0
    %2941 = vmatprep.subr.mxu0 0.0
    %2942 = vmatpush2.msra.mxu0 0.0
    %2943 = vmatprep.subr.mxu0 0.0
    %2944 = vmatpush2.msra.mxu0 0.0
    %2945 = vmatprep.subr.mxu0 0.0
    %2946 = vmatpush2.msra.mxu0 0.0
    %2947 = vmatprep.subr.mxu0 0.0
    %2948 = vmatpush2.msra.mxu0 0.0
    %2949 = vmatprep.subr.mxu0 0.0
    %2950 = vmatpush2.msra.mxu0 0.0
    %2951 = vmatprep.subr.mxu0 0.0
    %2952 = vmatpush2.msra.mxu0 0.0
    %2953 = vmatprep.subr.mxu0 0.0
    %2954 = vmatpush2.msra.mxu0 0.0
    %2955 = vmatprep.subr.mxu0 0.0
    %2956 = vmatpush2.msra.mxu0 0.0
    %2957 = vmatprep.subr.mxu0 0.0
    %2958 = vmatpush2.msra.mxu0 0.0
    %2959 = vmatprep.subr.mxu0 0.0
    %2960 = vmatpush2.msra.mxu0 0.0
    %2961 = vmatprep.subr.mxu0 0.0
    %2962 = vmatpush2.msra.mxu0 0.0
    %2963 = vmatprep.mubr.f32.mxu0 0.0
    %2964 = vmatmul.mubr.f32.gmra.mxu0 %v2897
    %v2965 = vpop.f32.mrf.mxu0
    %v2966 = vadd.f32 %v211, %v2965
    %v2967 = vpop.f32.mrf.mxu0
    %2968 = vdwg.mxu0
    %2969 = vmatprep.subr.mxu0 0.0
    %2970 = vmatpush1.msra.mxu0 0.0
    %2971 = vmatprep.subr.mxu0 0.0
    %2972 = vmatpush1.msra.mxu0 0.0
    %2973 = vmatprep.subr.mxu0 0.0
    %2974 = vmatpush1.msra.mxu0 0.0
    %2975 = vmatprep.subr.mxu0 0.0
    %2976 = vmatpush1.msra.mxu0 0.0
    %2977 = vmatprep.subr.mxu0 0.0
    %2978 = vmatpush1.msra.mxu0 0.0
    %2979 = vmatprep.subr.mxu0 0.0
    %2980 = vmatpush1.msra.mxu0 0.0
    %2981 = vmatprep.subr.mxu0 0.0
    %2982 = vmatpush1.msra.mxu0 0.0
    %2983 = vmatprep.subr.mxu0 0.0
    %2984 = vmatpush1.msra.mxu0 0.0
    %2985 = vmatprep.subr.mxu0 0.0
    %2986 = vmatpush1.msra.mxu0 0.0
    %2987 = vmatprep.subr.mxu0 0.0
    %2988 = vmatpush1.msra.mxu0 0.0
    %2989 = vmatprep.subr.mxu0 0.0
    %2990 = vmatpush1.msra.mxu0 0.0
    %2991 = vmatprep.subr.mxu0 0.0
    %2992 = vmatpush1.msra.mxu0 0.0
    %2993 = vmatprep.subr.mxu0 0.0
    %2994 = vmatpush1.msra.mxu0 %v93
    %2995 = vmatprep.subr.mxu0 0.0
    %2996 = vmatpush1.msra.mxu0 %v92
    %2997 = vmatprep.subr.mxu0 0.0
    %2998 = vmatpush1.msra.mxu0 %v91
    %2999 = vmatprep.subr.mxu0 0.0
    %3000 = vmatpush1.msra.mxu0 %v90
    %3001 = vmatprep.subr.mxu0 0.0
    %3002 = vmatpush2.msra.mxu0 0.0
    %3003 = vmatprep.subr.mxu0 0.0
    %3004 = vmatpush2.msra.mxu0 0.0
    %3005 = vmatprep.subr.mxu0 0.0
    %3006 = vmatpush2.msra.mxu0 0.0
    %3007 = vmatprep.subr.mxu0 0.0
    %3008 = vmatpush2.msra.mxu0 0.0
    %3009 = vmatprep.subr.mxu0 0.0
    %3010 = vmatpush2.msra.mxu0 0.0
    %3011 = vmatprep.subr.mxu0 0.0
    %3012 = vmatpush2.msra.mxu0 0.0
    %3013 = vmatprep.subr.mxu0 0.0
    %3014 = vmatpush2.msra.mxu0 0.0
    %3015 = vmatprep.subr.mxu0 0.0
    %3016 = vmatpush2.msra.mxu0 0.0
    %3017 = vmatprep.subr.mxu0 0.0
    %3018 = vmatpush2.msra.mxu0 0.0
    %3019 = vmatprep.subr.mxu0 0.0
    %3020 = vmatpush2.msra.mxu0 0.0
    %3021 = vmatprep.subr.mxu0 0.0
    %3022 = vmatpush2.msra.mxu0 0.0
    %3023 = vmatprep.subr.mxu0 0.0
    %3024 = vmatpush2.msra.mxu0 0.0
    %3025 = vmatprep.subr.mxu0 0.0
    %3026 = vmatpush2.msra.mxu0 0.0
    %3027 = vmatprep.subr.mxu0 0.0
    %3028 = vmatpush2.msra.mxu0 0.0
    %3029 = vmatprep.subr.mxu0 0.0
    %3030 = vmatpush2.msra.mxu0 0.0
    %3031 = vmatprep.subr.mxu0 0.0
    %3032 = vmatpush2.msra.mxu0 0.0
    %3033 = vmatprep.mubr.f32.mxu0 0.0
    %3034 = vmatmul.mubr.f32.gmra.mxu0 %v2897
    %v3035 = vpop.f32.mrf.mxu0
    %v3036 = vadd.f32 %v291, %v3035
    %v3037 = vpop.f32.mrf.mxu0
    %3038 = vdwg.mxu0
    %3039 = vmatprep.subr.mxu0 0.0
    %3040 = vmatpush1.msra.mxu0 0.0
    %3041 = vmatprep.subr.mxu0 0.0
    %3042 = vmatpush1.msra.mxu0 0.0
    %3043 = vmatprep.subr.mxu0 0.0
    %3044 = vmatpush1.msra.mxu0 0.0
    %3045 = vmatprep.subr.mxu0 0.0
    %3046 = vmatpush1.msra.mxu0 0.0
    %3047 = vmatprep.subr.mxu0 0.0
    %3048 = vmatpush1.msra.mxu0 0.0
    %3049 = vmatprep.subr.mxu0 0.0
    %3050 = vmatpush1.msra.mxu0 0.0
    %3051 = vmatprep.subr.mxu0 0.0
    %3052 = vmatpush1.msra.mxu0 0.0
    %3053 = vmatprep.subr.mxu0 0.0
    %3054 = vmatpush1.msra.mxu0 0.0
    %3055 = vmatprep.subr.mxu0 0.0
    %3056 = vmatpush1.msra.mxu0 0.0
    %3057 = vmatprep.subr.mxu0 0.0
    %3058 = vmatpush1.msra.mxu0 0.0
    %3059 = vmatprep.subr.mxu0 0.0
    %3060 = vmatpush1.msra.mxu0 0.0
    %3061 = vmatprep.subr.mxu0 0.0
    %3062 = vmatpush1.msra.mxu0 0.0
    %3063 = vmatprep.subr.mxu0 0.0
    %3064 = vmatpush1.msra.mxu0 %v98
    %3065 = vmatprep.subr.mxu0 0.0
    %3066 = vmatpush1.msra.mxu0 %v97
    %3067 = vmatprep.subr.mxu0 0.0
    %3068 = vmatpush1.msra.mxu0 %v96
    %3069 = vmatprep.subr.mxu0 0.0
    %3070 = vmatpush1.msra.mxu0 %v95
    %3071 = vmatprep.subr.mxu0 0.0
    %3072 = vmatpush2.msra.mxu0 0.0
    %3073 = vmatprep.subr.mxu0 0.0
    %3074 = vmatpush2.msra.mxu0 0.0
    %3075 = vmatprep.subr.mxu0 0.0
    %3076 = vmatpush2.msra.mxu0 0.0
    %3077 = vmatprep.subr.mxu0 0.0
    %3078 = vmatpush2.msra.mxu0 0.0
    %3079 = vmatprep.subr.mxu0 0.0
    %3080 = vmatpush2.msra.mxu0 0.0
    %3081 = vmatprep.subr.mxu0 0.0
    %3082 = vmatpush2.msra.mxu0 0.0
    %3083 = vmatprep.subr.mxu0 0.0
    %3084 = vmatpush2.msra.mxu0 0.0
    %3085 = vmatprep.subr.mxu0 0.0
    %3086 = vmatpush2.msra.mxu0 0.0
    %3087 = vmatprep.subr.mxu0 0.0
    %3088 = vmatpush2.msra.mxu0 0.0
    %3089 = vmatprep.subr.mxu0 0.0
    %3090 = vmatpush2.msra.mxu0 0.0
    %3091 = vmatprep.subr.mxu0 0.0
    %3092 = vmatpush2.msra.mxu0 0.0
    %3093 = vmatprep.subr.mxu0 0.0
    %3094 = vmatpush2.msra.mxu0 0.0
    %3095 = vmatprep.subr.mxu0 0.0
    %3096 = vmatpush2.msra.mxu0 0.0
    %3097 = vmatprep.subr.mxu0 0.0
    %3098 = vmatpush2.msra.mxu0 0.0
    %3099 = vmatprep.subr.mxu0 0.0
    %3100 = vmatpush2.msra.mxu0 0.0
    %3101 = vmatprep.subr.mxu0 0.0
    %3102 = vmatpush2.msra.mxu0 0.0
    %3103 = vmatprep.mubr.f32.mxu0 0.0
    %3104 = vmatmul.mubr.f32.gmra.mxu0 %v2897
    %v3105 = vpop.f32.mrf.mxu0
    %v3106 = vadd.f32 %v367, %v3105
    %v3107 = vpop.f32.mrf.mxu0
    %3108 = vdwg.mxu0
    %v3110 = vsel %vm213, %v2814, 0
    %3112 = vmatprep.subr.mxu0 0.0
    %3113 = vmatpush1.msra.mxu0 0.0
    %3114 = vmatprep.subr.mxu0 0.0
    %3115 = vmatpush1.msra.mxu0 0.0
    %3116 = vmatprep.subr.mxu0 0.0
    %3117 = vmatpush1.msra.mxu0 0.0
    %3118 = vmatprep.subr.mxu0 0.0
    %3119 = vmatpush1.msra.mxu0 0.0
    %3120 = vmatprep.subr.mxu0 0.0
    %3121 = vmatpush1.msra.mxu0 0.0
    %3122 = vmatprep.subr.mxu0 0.0
    %3123 = vmatpush1.msra.mxu0 0.0
    %3124 = vmatprep.subr.mxu0 0.0
    %3125 = vmatpush1.msra.mxu0 0.0
    %3126 = vmatprep.subr.mxu0 0.0
    %3127 = vmatpush1.msra.mxu0 0.0
    %3128 = vmatprep.subr.mxu0 0.0
    %3129 = vmatpush1.msra.mxu0 0.0
    %3130 = vmatprep.subr.mxu0 0.0
    %3131 = vmatpush1.msra.mxu0 0.0
    %3132 = vmatprep.subr.mxu0 0.0
    %3133 = vmatpush1.msra.mxu0 0.0
    %3134 = vmatprep.subr.mxu0 0.0
    %3135 = vmatpush1.msra.mxu0 0.0
    %3136 = vmatprep.subr.mxu0 0.0
    %3137 = vmatpush1.msra.mxu0 %v107
    %3138 = vmatprep.subr.mxu0 0.0
    %3139 = vmatpush1.msra.mxu0 %v106
    %3140 = vmatprep.subr.mxu0 0.0
    %3141 = vmatpush1.msra.mxu0 %v105
    %3142 = vmatprep.subr.mxu0 0.0
    %3143 = vmatpush1.msra.mxu0 %v104
    %3144 = vmatprep.subr.mxu0 0.0
    %3145 = vmatpush2.msra.mxu0 0.0
    %3146 = vmatprep.subr.mxu0 0.0
    %3147 = vmatpush2.msra.mxu0 0.0
    %3148 = vmatprep.subr.mxu0 0.0
    %3149 = vmatpush2.msra.mxu0 0.0
    %3150 = vmatprep.subr.mxu0 0.0
    %3151 = vmatpush2.msra.mxu0 0.0
    %3152 = vmatprep.subr.mxu0 0.0
    %3153 = vmatpush2.msra.mxu0 0.0
    %3154 = vmatprep.subr.mxu0 0.0
    %3155 = vmatpush2.msra.mxu0 0.0
    %3156 = vmatprep.subr.mxu0 0.0
    %3157 = vmatpush2.msra.mxu0 0.0
    %3158 = vmatprep.subr.mxu0 0.0
    %3159 = vmatpush2.msra.mxu0 0.0
    %3160 = vmatprep.subr.mxu0 0.0
    %3161 = vmatpush2.msra.mxu0 0.0
    %3162 = vmatprep.subr.mxu0 0.0
    %3163 = vmatpush2.msra.mxu0 0.0
    %3164 = vmatprep.subr.mxu0 0.0
    %3165 = vmatpush2.msra.mxu0 0.0
    %3166 = vmatprep.subr.mxu0 0.0
    %3167 = vmatpush2.msra.mxu0 0.0
    %3168 = vmatprep.subr.mxu0 0.0
    %3169 = vmatpush2.msra.mxu0 0.0
    %3170 = vmatprep.subr.mxu0 0.0
    %3171 = vmatpush2.msra.mxu0 0.0
    %3172 = vmatprep.subr.mxu0 0.0
    %3173 = vmatpush2.msra.mxu0 0.0
    %3174 = vmatprep.subr.mxu0 0.0
    %3175 = vmatpush2.msra.mxu0 0.0
    %3176 = vmatprep.mubr.f32.mxu0 0.0
    %3177 = vmatmul.mubr.f32.gmra.mxu0 %v3110
    %v3178 = vpop.f32.mrf.mxu0
    %v3179 = vadd.f32 %v443, %v3178
    %v3180 = vpop.f32.mrf.mxu0
    %3181 = vdwg.mxu0
    %3182 = vmatprep.subr.mxu0 0.0
    %3183 = vmatpush1.msra.mxu0 0.0
    %3184 = vmatprep.subr.mxu0 0.0
    %3185 = vmatpush1.msra.mxu0 0.0
    %3186 = vmatprep.subr.mxu0 0.0
    %3187 = vmatpush1.msra.mxu0 0.0
    %3188 = vmatprep.subr.mxu0 0.0
    %3189 = vmatpush1.msra.mxu0 0.0
    %3190 = vmatprep.subr.mxu0 0.0
    %3191 = vmatpush1.msra.mxu0 0.0
    %3192 = vmatprep.subr.mxu0 0.0
    %3193 = vmatpush1.msra.mxu0 0.0
    %3194 = vmatprep.subr.mxu0 0.0
    %3195 = vmatpush1.msra.mxu0 0.0
    %3196 = vmatprep.subr.mxu0 0.0
    %3197 = vmatpush1.msra.mxu0 0.0
    %3198 = vmatprep.subr.mxu0 0.0
    %3199 = vmatpush1.msra.mxu0 0.0
    %3200 = vmatprep.subr.mxu0 0.0
    %3201 = vmatpush1.msra.mxu0 0.0
    %3202 = vmatprep.subr.mxu0 0.0
    %3203 = vmatpush1.msra.mxu0 0.0
    %3204 = vmatprep.subr.mxu0 0.0
    %3205 = vmatpush1.msra.mxu0 0.0
    %3206 = vmatprep.subr.mxu0 0.0
    %3207 = vmatpush1.msra.mxu0 %v112
    %3208 = vmatprep.subr.mxu0 0.0
    %3209 = vmatpush1.msra.mxu0 %v111
    %3210 = vmatprep.subr.mxu0 0.0
    %3211 = vmatpush1.msra.mxu0 %v110
    %3212 = vmatprep.subr.mxu0 0.0
    %3213 = vmatpush1.msra.mxu0 %v109
    %3214 = vmatprep.subr.mxu0 0.0
    %3215 = vmatpush2.msra.mxu0 0.0
    %3216 = vmatprep.subr.mxu0 0.0
    %3217 = vmatpush2.msra.mxu0 0.0
    %3218 = vmatprep.subr.mxu0 0.0
    %3219 = vmatpush2.msra.mxu0 0.0
    %3220 = vmatprep.subr.mxu0 0.0
    %3221 = vmatpush2.msra.mxu0 0.0
    %3222 = vmatprep.subr.mxu0 0.0
    %3223 = vmatpush2.msra.mxu0 0.0
    %3224 = vmatprep.subr.mxu0 0.0
    %3225 = vmatpush2.msra.mxu0 0.0
    %3226 = vmatprep.subr.mxu0 0.0
    %3227 = vmatpush2.msra.mxu0 0.0
    %3228 = vmatprep.subr.mxu0 0.0
    %3229 = vmatpush2.msra.mxu0 0.0
    %3230 = vmatprep.subr.mxu0 0.0
    %3231 = vmatpush2.msra.mxu0 0.0
    %3232 = vmatprep.subr.mxu0 0.0
    %3233 = vmatpush2.msra.mxu0 0.0
    %3234 = vmatprep.subr.mxu0 0.0
    %3235 = vmatpush2.msra.mxu0 0.0
    %3236 = vmatprep.subr.mxu0 0.0
    %3237 = vmatpush2.msra.mxu0 0.0
    %3238 = vmatprep.subr.mxu0 0.0
    %3239 = vmatpush2.msra.mxu0 0.0
    %3240 = vmatprep.subr.mxu0 0.0
    %3241 = vmatpush2.msra.mxu0 0.0
    %3242 = vmatprep.subr.mxu0 0.0
    %3243 = vmatpush2.msra.mxu0 0.0
    %3244 = vmatprep.subr.mxu0 0.0
    %3245 = vmatpush2.msra.mxu0 0.0
    %3246 = vmatprep.mubr.f32.mxu0 0.0
    %3247 = vmatmul.mubr.f32.gmra.mxu0 %v3110
    %v3248 = vpop.f32.mrf.mxu0
    %v3249 = vadd.f32 %v522, %v3248
    %v3250 = vpop.f32.mrf.mxu0
    %3251 = vdwg.mxu0
    %3252 = vmatprep.subr.mxu0 0.0
    %3253 = vmatpush1.msra.mxu0 0.0
    %3254 = vmatprep.subr.mxu0 0.0
    %3255 = vmatpush1.msra.mxu0 0.0
    %3256 = vmatprep.subr.mxu0 0.0
    %3257 = vmatpush1.msra.mxu0 0.0
    %3258 = vmatprep.subr.mxu0 0.0
    %3259 = vmatpush1.msra.mxu0 0.0
    %3260 = vmatprep.subr.mxu0 0.0
    %3261 = vmatpush1.msra.mxu0 0.0
    %3262 = vmatprep.subr.mxu0 0.0
    %3263 = vmatpush1.msra.mxu0 0.0
    %3264 = vmatprep.subr.mxu0 0.0
    %3265 = vmatpush1.msra.mxu0 0.0
    %3266 = vmatprep.subr.mxu0 0.0
    %3267 = vmatpush1.msra.mxu0 0.0
    %3268 = vmatprep.subr.mxu0 0.0
    %3269 = vmatpush1.msra.mxu0 0.0
    %3270 = vmatprep.subr.mxu0 0.0
    %3271 = vmatpush1.msra.mxu0 0.0
    %3272 = vmatprep.subr.mxu0 0.0
    %3273 = vmatpush1.msra.mxu0 0.0
    %3274 = vmatprep.subr.mxu0 0.0
    %3275 = vmatpush1.msra.mxu0 0.0
    %3276 = vmatprep.subr.mxu0 0.0
    %3277 = vmatpush1.msra.mxu0 %v117
    %3278 = vmatprep.subr.mxu0 0.0
    %3279 = vmatpush1.msra.mxu0 %v116
    %3280 = vmatprep.subr.mxu0 0.0
    %3281 = vmatpush1.msra.mxu0 %v115
    %3282 = vmatprep.subr.mxu0 0.0
    %3283 = vmatpush1.msra.mxu0 %v114
    %3284 = vmatprep.subr.mxu0 0.0
    %3285 = vmatpush2.msra.mxu0 0.0
    %3286 = vmatprep.subr.mxu0 0.0
    %3287 = vmatpush2.msra.mxu0 0.0
    %3288 = vmatprep.subr.mxu0 0.0
    %3289 = vmatpush2.msra.mxu0 0.0
    %3290 = vmatprep.subr.mxu0 0.0
    %3291 = vmatpush2.msra.mxu0 0.0
    %3292 = vmatprep.subr.mxu0 0.0
    %3293 = vmatpush2.msra.mxu0 0.0
    %3294 = vmatprep.subr.mxu0 0.0
    %3295 = vmatpush2.msra.mxu0 0.0
    %3296 = vmatprep.subr.mxu0 0.0
    %3297 = vmatpush2.msra.mxu0 0.0
    %3298 = vmatprep.subr.mxu0 0.0
    %3299 = vmatpush2.msra.mxu0 0.0
    %3300 = vmatprep.subr.mxu0 0.0
    %3301 = vmatpush2.msra.mxu0 0.0
    %3302 = vmatprep.subr.mxu0 0.0
    %3303 = vmatpush2.msra.mxu0 0.0
    %3304 = vmatprep.subr.mxu0 0.0
    %3305 = vmatpush2.msra.mxu0 0.0
    %3306 = vmatprep.subr.mxu0 0.0
    %3307 = vmatpush2.msra.mxu0 0.0
    %3308 = vmatprep.subr.mxu0 0.0
    %3309 = vmatpush2.msra.mxu0 0.0
    %3310 = vmatprep.subr.mxu0 0.0
    %3311 = vmatpush2.msra.mxu0 0.0
    %3312 = vmatprep.subr.mxu0 0.0
    %3313 = vmatpush2.msra.mxu0 0.0
    %3314 = vmatprep.subr.mxu0 0.0
    %3315 = vmatpush2.msra.mxu0 0.0
    %3316 = vmatprep.mubr.f32.mxu0 0.0
    %3317 = vmatmul.mubr.f32.gmra.mxu0 %v3110
    %v3318 = vpop.f32.mrf.mxu0
    %v3319 = vadd.f32 %v598, %v3318
    %v3320 = vpop.f32.mrf.mxu0
    %3321 = vdwg.mxu0
    %v3322 = vadd.f32 %v2966, %v3179
    %v3323 = vxor.u32 %v3322, 2147483648
    %v3324 = vmul.f32 %v3323, 1.442695
    %v3325 = vpow.pop %v3324
    %v3326 = vadd.f32 %v3325, 1.0
    %v3327 = vrcp.pop %v3326
    %v3328 = vmul.f32 1.0, %v3327
    %v3329 = vadd.f32 %v3036, %v3249
    %v3330 = vxor.u32 %v3329, 2147483648
    %v3331 = vmul.f32 %v3330, 1.442695
    %v3332 = vpow.pop %v3331
    %v3333 = vadd.f32 %v3332, 1.0
    %v3334 = vrcp.pop %v3333
    %v3335 = vmul.f32 1.0, %v3334
    %v3336 = vmul.f32 %v3328, %v3319
    %v3337 = vadd.f32 %v3106, %v3336
    %v3338 = vtanh.pop %v3337
    %v3339 = vsub.f32 1.0, %v3335
    %v3340 = vmul.f32 %v3339, %v3338
    %v3341 = vmul.f32 %v3335, %v2814
    %v3342 = vadd.f32 %v3340, %v3341
    %v3343 = vmul.f32 %v3342, %v695
    %v3344 = vsel %vm213, %v3343, 0.0
    %3345 = vadd.xlane.f32.xlu0 %v3344
    %v3346 = vpop.xlane.xlu0 %3345
    %v3347 = vadd.f32 %v3346, %v705
    %s3348 = scalar_lea.vmem [#allocation3], 48
    %v3349 = vld [vmem:[%s3348] sm:$0xff]
    %v3351 = vsel %vm132, %v3349, 0
    %3353 = vmatprep.subr.mxu0 0.0
    %3354 = vmatpush1.msra.mxu0 0.0
    %3355 = vmatprep.subr.mxu0 0.0
    %3356 = vmatpush1.msra.mxu0 0.0
    %3357 = vmatprep.subr.mxu0 0.0
    %3358 = vmatpush1.msra.mxu0 0.0
    %3359 = vmatprep.subr.mxu0 0.0
    %3360 = vmatpush1.msra.mxu0 0.0
    %3361 = vmatprep.subr.mxu0 0.0
    %3362 = vmatpush1.msra.mxu0 0.0
    %3363 = vmatprep.subr.mxu0 0.0
    %3364 = vmatpush1.msra.mxu0 0.0
    %3365 = vmatprep.subr.mxu0 0.0
    %3366 = vmatpush1.msra.mxu0 0.0
    %3367 = vmatprep.subr.mxu0 0.0
    %3368 = vmatpush1.msra.mxu0 0.0
    %3369 = vmatprep.subr.mxu0 0.0
    %3370 = vmatpush1.msra.mxu0 0.0
    %3371 = vmatprep.subr.mxu0 0.0
    %3372 = vmatpush1.msra.mxu0 0.0
    %3373 = vmatprep.subr.mxu0 0.0
    %3374 = vmatpush1.msra.mxu0 0.0
    %3375 = vmatprep.subr.mxu0 0.0
    %3376 = vmatpush1.msra.mxu0 0.0
    %3377 = vmatprep.subr.mxu0 0.0
    %3378 = vmatpush1.msra.mxu0 0.0
    %3379 = vmatprep.subr.mxu0 0.0
    %3380 = vmatpush1.msra.mxu0 0.0
    %3381 = vmatprep.subr.mxu0 0.0
    %3382 = vmatpush1.msra.mxu0 %v83
    %3383 = vmatprep.subr.mxu0 0.0
    %3384 = vmatpush1.msra.mxu0 %v82
    %3385 = vmatprep.subr.mxu0 0.0
    %3386 = vmatpush2.msra.mxu0 0.0
    %3387 = vmatprep.subr.mxu0 0.0
    %3388 = vmatpush2.msra.mxu0 0.0
    %3389 = vmatprep.subr.mxu0 0.0
    %3390 = vmatpush2.msra.mxu0 0.0
    %3391 = vmatprep.subr.mxu0 0.0
    %3392 = vmatpush2.msra.mxu0 0.0
    %3393 = vmatprep.subr.mxu0 0.0
    %3394 = vmatpush2.msra.mxu0 0.0
    %3395 = vmatprep.subr.mxu0 0.0
    %3396 = vmatpush2.msra.mxu0 0.0
    %3397 = vmatprep.subr.mxu0 0.0
    %3398 = vmatpush2.msra.mxu0 0.0
    %3399 = vmatprep.subr.mxu0 0.0
    %3400 = vmatpush2.msra.mxu0 0.0
    %3401 = vmatprep.subr.mxu0 0.0
    %3402 = vmatpush2.msra.mxu0 0.0
    %3403 = vmatprep.subr.mxu0 0.0
    %3404 = vmatpush2.msra.mxu0 0.0
    %3405 = vmatprep.subr.mxu0 0.0
    %3406 = vmatpush2.msra.mxu0 0.0
    %3407 = vmatprep.subr.mxu0 0.0
    %3408 = vmatpush2.msra.mxu0 0.0
    %3409 = vmatprep.subr.mxu0 0.0
    %3410 = vmatpush2.msra.mxu0 0.0
    %3411 = vmatprep.subr.mxu0 0.0
    %3412 = vmatpush2.msra.mxu0 0.0
    %3413 = vmatprep.subr.mxu0 0.0
    %3414 = vmatpush2.msra.mxu0 0.0
    %3415 = vmatprep.subr.mxu0 0.0
    %3416 = vmatpush2.msra.mxu0 0.0
    %3417 = vmatprep.mubr.f32.mxu0 0.0
    %3418 = vmatmul.mubr.f32.gmra.mxu0 %v3351
    %v3419 = vpop.f32.mrf.mxu0
    %v3420 = vadd.f32 %v130, %v3419
    %v3421 = vpop.f32.mrf.mxu0
    %3422 = vdwg.mxu0
    %v3423 = vmax.f32 %v3420, 0.0
    %v3425 = vsel %vm213, %v3423, 0
    %3427 = vmatprep.subr.mxu0 0.0
    %3428 = vmatpush1.msra.mxu0 0.0
    %3429 = vmatprep.subr.mxu0 0.0
    %3430 = vmatpush1.msra.mxu0 0.0
    %3431 = vmatprep.subr.mxu0 0.0
    %3432 = vmatpush1.msra.mxu0 0.0
    %3433 = vmatprep.subr.mxu0 0.0
    %3434 = vmatpush1.msra.mxu0 0.0
    %3435 = vmatprep.subr.mxu0 0.0
    %3436 = vmatpush1.msra.mxu0 0.0
    %3437 = vmatprep.subr.mxu0 0.0
    %3438 = vmatpush1.msra.mxu0 0.0
    %3439 = vmatprep.subr.mxu0 0.0
    %3440 = vmatpush1.msra.mxu0 0.0
    %3441 = vmatprep.subr.mxu0 0.0
    %3442 = vmatpush1.msra.mxu0 0.0
    %3443 = vmatprep.subr.mxu0 0.0
    %3444 = vmatpush1.msra.mxu0 0.0
    %3445 = vmatprep.subr.mxu0 0.0
    %3446 = vmatpush1.msra.mxu0 0.0
    %3447 = vmatprep.subr.mxu0 0.0
    %3448 = vmatpush1.msra.mxu0 0.0
    %3449 = vmatprep.subr.mxu0 0.0
    %3450 = vmatpush1.msra.mxu0 0.0
    %3451 = vmatprep.subr.mxu0 0.0
    %3452 = vmatpush1.msra.mxu0 %v88
    %3453 = vmatprep.subr.mxu0 0.0
    %3454 = vmatpush1.msra.mxu0 %v87
    %3455 = vmatprep.subr.mxu0 0.0
    %3456 = vmatpush1.msra.mxu0 %v86
    %3457 = vmatprep.subr.mxu0 0.0
    %3458 = vmatpush1.msra.mxu0 %v85
    %3459 = vmatprep.subr.mxu0 0.0
    %3460 = vmatpush2.msra.mxu0 0.0
    %3461 = vmatprep.subr.mxu0 0.0
    %3462 = vmatpush2.msra.mxu0 0.0
    %3463 = vmatprep.subr.mxu0 0.0
    %3464 = vmatpush2.msra.mxu0 0.0
    %3465 = vmatprep.subr.mxu0 0.0
    %3466 = vmatpush2.msra.mxu0 0.0
    %3467 = vmatprep.subr.mxu0 0.0
    %3468 = vmatpush2.msra.mxu0 0.0
    %3469 = vmatprep.subr.mxu0 0.0
    %3470 = vmatpush2.msra.mxu0 0.0
    %3471 = vmatprep.subr.mxu0 0.0
    %3472 = vmatpush2.msra.mxu0 0.0
    %3473 = vmatprep.subr.mxu0 0.0
    %3474 = vmatpush2.msra.mxu0 0.0
    %3475 = vmatprep.subr.mxu0 0.0
    %3476 = vmatpush2.msra.mxu0 0.0
    %3477 = vmatprep.subr.mxu0 0.0
    %3478 = vmatpush2.msra.mxu0 0.0
    %3479 = vmatprep.subr.mxu0 0.0
    %3480 = vmatpush2.msra.mxu0 0.0
    %3481 = vmatprep.subr.mxu0 0.0
    %3482 = vmatpush2.msra.mxu0 0.0
    %3483 = vmatprep.subr.mxu0 0.0
    %3484 = vmatpush2.msra.mxu0 0.0
    %3485 = vmatprep.subr.mxu0 0.0
    %3486 = vmatpush2.msra.mxu0 0.0
    %3487 = vmatprep.subr.mxu0 0.0
    %3488 = vmatpush2.msra.mxu0 0.0
    %3489 = vmatprep.subr.mxu0 0.0
    %3490 = vmatpush2.msra.mxu0 0.0
    %3491 = vmatprep.mubr.f32.mxu0 0.0
    %3492 = vmatmul.mubr.f32.gmra.mxu0 %v3425
    %v3493 = vpop.f32.mrf.mxu0
    %v3494 = vadd.f32 %v211, %v3493
    %v3495 = vpop.f32.mrf.mxu0
    %3496 = vdwg.mxu0
    %3497 = vmatprep.subr.mxu0 0.0
    %3498 = vmatpush1.msra.mxu0 0.0
    %3499 = vmatprep.subr.mxu0 0.0
    %3500 = vmatpush1.msra.mxu0 0.0
    %3501 = vmatprep.subr.mxu0 0.0
    %3502 = vmatpush1.msra.mxu0 0.0
    %3503 = vmatprep.subr.mxu0 0.0
    %3504 = vmatpush1.msra.mxu0 0.0
    %3505 = vmatprep.subr.mxu0 0.0
    %3506 = vmatpush1.msra.mxu0 0.0
    %3507 = vmatprep.subr.mxu0 0.0
    %3508 = vmatpush1.msra.mxu0 0.0
    %3509 = vmatprep.subr.mxu0 0.0
    %3510 = vmatpush1.msra.mxu0 0.0
    %3511 = vmatprep.subr.mxu0 0.0
    %3512 = vmatpush1.msra.mxu0 0.0
    %3513 = vmatprep.subr.mxu0 0.0
    %3514 = vmatpush1.msra.mxu0 0.0
    %3515 = vmatprep.subr.mxu0 0.0
    %3516 = vmatpush1.msra.mxu0 0.0
    %3517 = vmatprep.subr.mxu0 0.0
    %3518 = vmatpush1.msra.mxu0 0.0
    %3519 = vmatprep.subr.mxu0 0.0
    %3520 = vmatpush1.msra.mxu0 0.0
    %3521 = vmatprep.subr.mxu0 0.0
    %3522 = vmatpush1.msra.mxu0 %v93
    %3523 = vmatprep.subr.mxu0 0.0
    %3524 = vmatpush1.msra.mxu0 %v92
    %3525 = vmatprep.subr.mxu0 0.0
    %3526 = vmatpush1.msra.mxu0 %v91
    %3527 = vmatprep.subr.mxu0 0.0
    %3528 = vmatpush1.msra.mxu0 %v90
    %3529 = vmatprep.subr.mxu0 0.0
    %3530 = vmatpush2.msra.mxu0 0.0
    %3531 = vmatprep.subr.mxu0 0.0
    %3532 = vmatpush2.msra.mxu0 0.0
    %3533 = vmatprep.subr.mxu0 0.0
    %3534 = vmatpush2.msra.mxu0 0.0
    %3535 = vmatprep.subr.mxu0 0.0
    %3536 = vmatpush2.msra.mxu0 0.0
    %3537 = vmatprep.subr.mxu0 0.0
    %3538 = vmatpush2.msra.mxu0 0.0
    %3539 = vmatprep.subr.mxu0 0.0
    %3540 = vmatpush2.msra.mxu0 0.0
    %3541 = vmatprep.subr.mxu0 0.0
    %3542 = vmatpush2.msra.mxu0 0.0
    %3543 = vmatprep.subr.mxu0 0.0
    %3544 = vmatpush2.msra.mxu0 0.0
    %3545 = vmatprep.subr.mxu0 0.0
    %3546 = vmatpush2.msra.mxu0 0.0
    %3547 = vmatprep.subr.mxu0 0.0
    %3548 = vmatpush2.msra.mxu0 0.0
    %3549 = vmatprep.subr.mxu0 0.0
    %3550 = vmatpush2.msra.mxu0 0.0
    %3551 = vmatprep.subr.mxu0 0.0
    %3552 = vmatpush2.msra.mxu0 0.0
    %3553 = vmatprep.subr.mxu0 0.0
    %3554 = vmatpush2.msra.mxu0 0.0
    %3555 = vmatprep.subr.mxu0 0.0
    %3556 = vmatpush2.msra.mxu0 0.0
    %3557 = vmatprep.subr.mxu0 0.0
    %3558 = vmatpush2.msra.mxu0 0.0
    %3559 = vmatprep.subr.mxu0 0.0
    %3560 = vmatpush2.msra.mxu0 0.0
    %3561 = vmatprep.mubr.f32.mxu0 0.0
    %3562 = vmatmul.mubr.f32.gmra.mxu0 %v3425
    %v3563 = vpop.f32.mrf.mxu0
    %v3564 = vadd.f32 %v291, %v3563
    %v3565 = vpop.f32.mrf.mxu0
    %3566 = vdwg.mxu0
    %3567 = vmatprep.subr.mxu0 0.0
    %3568 = vmatpush1.msra.mxu0 0.0
    %3569 = vmatprep.subr.mxu0 0.0
    %3570 = vmatpush1.msra.mxu0 0.0
    %3571 = vmatprep.subr.mxu0 0.0
    %3572 = vmatpush1.msra.mxu0 0.0
    %3573 = vmatprep.subr.mxu0 0.0
    %3574 = vmatpush1.msra.mxu0 0.0
    %3575 = vmatprep.subr.mxu0 0.0
    %3576 = vmatpush1.msra.mxu0 0.0
    %3577 = vmatprep.subr.mxu0 0.0
    %3578 = vmatpush1.msra.mxu0 0.0
    %3579 = vmatprep.subr.mxu0 0.0
    %3580 = vmatpush1.msra.mxu0 0.0
    %3581 = vmatprep.subr.mxu0 0.0
    %3582 = vmatpush1.msra.mxu0 0.0
    %3583 = vmatprep.subr.mxu0 0.0
    %3584 = vmatpush1.msra.mxu0 0.0
    %3585 = vmatprep.subr.mxu0 0.0
    %3586 = vmatpush1.msra.mxu0 0.0
    %3587 = vmatprep.subr.mxu0 0.0
    %3588 = vmatpush1.msra.mxu0 0.0
    %3589 = vmatprep.subr.mxu0 0.0
    %3590 = vmatpush1.msra.mxu0 0.0
    %3591 = vmatprep.subr.mxu0 0.0
    %3592 = vmatpush1.msra.mxu0 %v98
    %3593 = vmatprep.subr.mxu0 0.0
    %3594 = vmatpush1.msra.mxu0 %v97
    %3595 = vmatprep.subr.mxu0 0.0
    %3596 = vmatpush1.msra.mxu0 %v96
    %3597 = vmatprep.subr.mxu0 0.0
    %3598 = vmatpush1.msra.mxu0 %v95
    %3599 = vmatprep.subr.mxu0 0.0
    %3600 = vmatpush2.msra.mxu0 0.0
    %3601 = vmatprep.subr.mxu0 0.0
    %3602 = vmatpush2.msra.mxu0 0.0
    %3603 = vmatprep.subr.mxu0 0.0
    %3604 = vmatpush2.msra.mxu0 0.0
    %3605 = vmatprep.subr.mxu0 0.0
    %3606 = vmatpush2.msra.mxu0 0.0
    %3607 = vmatprep.subr.mxu0 0.0
    %3608 = vmatpush2.msra.mxu0 0.0
    %3609 = vmatprep.subr.mxu0 0.0
    %3610 = vmatpush2.msra.mxu0 0.0
    %3611 = vmatprep.subr.mxu0 0.0
    %3612 = vmatpush2.msra.mxu0 0.0
    %3613 = vmatprep.subr.mxu0 0.0
    %3614 = vmatpush2.msra.mxu0 0.0
    %3615 = vmatprep.subr.mxu0 0.0
    %3616 = vmatpush2.msra.mxu0 0.0
    %3617 = vmatprep.subr.mxu0 0.0
    %3618 = vmatpush2.msra.mxu0 0.0
    %3619 = vmatprep.subr.mxu0 0.0
    %3620 = vmatpush2.msra.mxu0 0.0
    %3621 = vmatprep.subr.mxu0 0.0
    %3622 = vmatpush2.msra.mxu0 0.0
    %3623 = vmatprep.subr.mxu0 0.0
    %3624 = vmatpush2.msra.mxu0 0.0
    %3625 = vmatprep.subr.mxu0 0.0
    %3626 = vmatpush2.msra.mxu0 0.0
    %3627 = vmatprep.subr.mxu0 0.0
    %3628 = vmatpush2.msra.mxu0 0.0
    %3629 = vmatprep.subr.mxu0 0.0
    %3630 = vmatpush2.msra.mxu0 0.0
    %3631 = vmatprep.mubr.f32.mxu0 0.0
    %3632 = vmatmul.mubr.f32.gmra.mxu0 %v3425
    %v3633 = vpop.f32.mrf.mxu0
    %v3634 = vadd.f32 %v367, %v3633
    %v3635 = vpop.f32.mrf.mxu0
    %3636 = vdwg.mxu0
    %v3638 = vsel %vm213, %v3342, 0
    %3640 = vmatprep.subr.mxu0 0.0
    %3641 = vmatpush1.msra.mxu0 0.0
    %3642 = vmatprep.subr.mxu0 0.0
    %3643 = vmatpush1.msra.mxu0 0.0
    %3644 = vmatprep.subr.mxu0 0.0
    %3645 = vmatpush1.msra.mxu0 0.0
    %3646 = vmatprep.subr.mxu0 0.0
    %3647 = vmatpush1.msra.mxu0 0.0
    %3648 = vmatprep.subr.mxu0 0.0
    %3649 = vmatpush1.msra.mxu0 0.0
    %3650 = vmatprep.subr.mxu0 0.0
    %3651 = vmatpush1.msra.mxu0 0.0
    %3652 = vmatprep.subr.mxu0 0.0
    %3653 = vmatpush1.msra.mxu0 0.0
    %3654 = vmatprep.subr.mxu0 0.0
    %3655 = vmatpush1.msra.mxu0 0.0
    %3656 = vmatprep.subr.mxu0 0.0
    %3657 = vmatpush1.msra.mxu0 0.0
    %3658 = vmatprep.subr.mxu0 0.0
    %3659 = vmatpush1.msra.mxu0 0.0
    %3660 = vmatprep.subr.mxu0 0.0
    %3661 = vmatpush1.msra.mxu0 0.0
    %3662 = vmatprep.subr.mxu0 0.0
    %3663 = vmatpush1.msra.mxu0 0.0
    %3664 = vmatprep.subr.mxu0 0.0
    %3665 = vmatpush1.msra.mxu0 %v107
    %3666 = vmatprep.subr.mxu0 0.0
    %3667 = vmatpush1.msra.mxu0 %v106
    %3668 = vmatprep.subr.mxu0 0.0
    %3669 = vmatpush1.msra.mxu0 %v105
    %3670 = vmatprep.subr.mxu0 0.0
    %3671 = vmatpush1.msra.mxu0 %v104
    %3672 = vmatprep.subr.mxu0 0.0
    %3673 = vmatpush2.msra.mxu0 0.0
    %3674 = vmatprep.subr.mxu0 0.0
    %3675 = vmatpush2.msra.mxu0 0.0
    %3676 = vmatprep.subr.mxu0 0.0
    %3677 = vmatpush2.msra.mxu0 0.0
    %3678 = vmatprep.subr.mxu0 0.0
    %3679 = vmatpush2.msra.mxu0 0.0
    %3680 = vmatprep.subr.mxu0 0.0
    %3681 = vmatpush2.msra.mxu0 0.0
    %3682 = vmatprep.subr.mxu0 0.0
    %3683 = vmatpush2.msra.mxu0 0.0
    %3684 = vmatprep.subr.mxu0 0.0
    %3685 = vmatpush2.msra.mxu0 0.0
    %3686 = vmatprep.subr.mxu0 0.0
    %3687 = vmatpush2.msra.mxu0 0.0
    %3688 = vmatprep.subr.mxu0 0.0
    %3689 = vmatpush2.msra.mxu0 0.0
    %3690 = vmatprep.subr.mxu0 0.0
    %3691 = vmatpush2.msra.mxu0 0.0
    %3692 = vmatprep.subr.mxu0 0.0
    %3693 = vmatpush2.msra.mxu0 0.0
    %3694 = vmatprep.subr.mxu0 0.0
    %3695 = vmatpush2.msra.mxu0 0.0
    %3696 = vmatprep.subr.mxu0 0.0
    %3697 = vmatpush2.msra.mxu0 0.0
    %3698 = vmatprep.subr.mxu0 0.0
    %3699 = vmatpush2.msra.mxu0 0.0
    %3700 = vmatprep.subr.mxu0 0.0
    %3701 = vmatpush2.msra.mxu0 0.0
    %3702 = vmatprep.subr.mxu0 0.0
    %3703 = vmatpush2.msra.mxu0 0.0
    %3704 = vmatprep.mubr.f32.mxu0 0.0
    %3705 = vmatmul.mubr.f32.gmra.mxu0 %v3638
    %v3706 = vpop.f32.mrf.mxu0
    %v3707 = vadd.f32 %v443, %v3706
    %v3708 = vpop.f32.mrf.mxu0
    %3709 = vdwg.mxu0
    %3710 = vmatprep.subr.mxu0 0.0
    %3711 = vmatpush1.msra.mxu0 0.0
    %3712 = vmatprep.subr.mxu0 0.0
    %3713 = vmatpush1.msra.mxu0 0.0
    %3714 = vmatprep.subr.mxu0 0.0
    %3715 = vmatpush1.msra.mxu0 0.0
    %3716 = vmatprep.subr.mxu0 0.0
    %3717 = vmatpush1.msra.mxu0 0.0
    %3718 = vmatprep.subr.mxu0 0.0
    %3719 = vmatpush1.msra.mxu0 0.0
    %3720 = vmatprep.subr.mxu0 0.0
    %3721 = vmatpush1.msra.mxu0 0.0
    %3722 = vmatprep.subr.mxu0 0.0
    %3723 = vmatpush1.msra.mxu0 0.0
    %3724 = vmatprep.subr.mxu0 0.0
    %3725 = vmatpush1.msra.mxu0 0.0
    %3726 = vmatprep.subr.mxu0 0.0
    %3727 = vmatpush1.msra.mxu0 0.0
    %3728 = vmatprep.subr.mxu0 0.0
    %3729 = vmatpush1.msra.mxu0 0.0
    %3730 = vmatprep.subr.mxu0 0.0
    %3731 = vmatpush1.msra.mxu0 0.0
    %3732 = vmatprep.subr.mxu0 0.0
    %3733 = vmatpush1.msra.mxu0 0.0
    %3734 = vmatprep.subr.mxu0 0.0
    %3735 = vmatpush1.msra.mxu0 %v112
    %3736 = vmatprep.subr.mxu0 0.0
    %3737 = vmatpush1.msra.mxu0 %v111
    %3738 = vmatprep.subr.mxu0 0.0
    %3739 = vmatpush1.msra.mxu0 %v110
    %3740 = vmatprep.subr.mxu0 0.0
    %3741 = vmatpush1.msra.mxu0 %v109
    %3742 = vmatprep.subr.mxu0 0.0
    %3743 = vmatpush2.msra.mxu0 0.0
    %3744 = vmatprep.subr.mxu0 0.0
    %3745 = vmatpush2.msra.mxu0 0.0
    %3746 = vmatprep.subr.mxu0 0.0
    %3747 = vmatpush2.msra.mxu0 0.0
    %3748 = vmatprep.subr.mxu0 0.0
    %3749 = vmatpush2.msra.mxu0 0.0
    %3750 = vmatprep.subr.mxu0 0.0
    %3751 = vmatpush2.msra.mxu0 0.0
    %3752 = vmatprep.subr.mxu0 0.0
    %3753 = vmatpush2.msra.mxu0 0.0
    %3754 = vmatprep.subr.mxu0 0.0
    %3755 = vmatpush2.msra.mxu0 0.0
    %3756 = vmatprep.subr.mxu0 0.0
    %3757 = vmatpush2.msra.mxu0 0.0
    %3758 = vmatprep.subr.mxu0 0.0
    %3759 = vmatpush2.msra.mxu0 0.0
    %3760 = vmatprep.subr.mxu0 0.0
    %3761 = vmatpush2.msra.mxu0 0.0
    %3762 = vmatprep.subr.mxu0 0.0
    %3763 = vmatpush2.msra.mxu0 0.0
    %3764 = vmatprep.subr.mxu0 0.0
    %3765 = vmatpush2.msra.mxu0 0.0
    %3766 = vmatprep.subr.mxu0 0.0
    %3767 = vmatpush2.msra.mxu0 0.0
    %3768 = vmatprep.subr.mxu0 0.0
    %3769 = vmatpush2.msra.mxu0 0.0
    %3770 = vmatprep.subr.mxu0 0.0
    %3771 = vmatpush2.msra.mxu0 0.0
    %3772 = vmatprep.subr.mxu0 0.0
    %3773 = vmatpush2.msra.mxu0 0.0
    %3774 = vmatprep.mubr.f32.mxu0 0.0
    %3775 = vmatmul.mubr.f32.gmra.mxu0 %v3638
    %v3776 = vpop.f32.mrf.mxu0
    %v3777 = vadd.f32 %v522, %v3776
    %v3778 = vpop.f32.mrf.mxu0
    %3779 = vdwg.mxu0
    %3780 = vmatprep.subr.mxu0 0.0
    %3781 = vmatpush1.msra.mxu0 0.0
    %3782 = vmatprep.subr.mxu0 0.0
    %3783 = vmatpush1.msra.mxu0 0.0
    %3784 = vmatprep.subr.mxu0 0.0
    %3785 = vmatpush1.msra.mxu0 0.0
    %3786 = vmatprep.subr.mxu0 0.0
    %3787 = vmatpush1.msra.mxu0 0.0
    %3788 = vmatprep.subr.mxu0 0.0
    %3789 = vmatpush1.msra.mxu0 0.0
    %3790 = vmatprep.subr.mxu0 0.0
    %3791 = vmatpush1.msra.mxu0 0.0
    %3792 = vmatprep.subr.mxu0 0.0
    %3793 = vmatpush1.msra.mxu0 0.0
    %3794 = vmatprep.subr.mxu0 0.0
    %3795 = vmatpush1.msra.mxu0 0.0
    %3796 = vmatprep.subr.mxu0 0.0
    %3797 = vmatpush1.msra.mxu0 0.0
    %3798 = vmatprep.subr.mxu0 0.0
    %3799 = vmatpush1.msra.mxu0 0.0
    %3800 = vmatprep.subr.mxu0 0.0
    %3801 = vmatpush1.msra.mxu0 0.0
    %3802 = vmatprep.subr.mxu0 0.0
    %3803 = vmatpush1.msra.mxu0 0.0
    %3804 = vmatprep.subr.mxu0 0.0
    %3805 = vmatpush1.msra.mxu0 %v117
    %3806 = vmatprep.subr.mxu0 0.0
    %3807 = vmatpush1.msra.mxu0 %v116
    %3808 = vmatprep.subr.mxu0 0.0
    %3809 = vmatpush1.msra.mxu0 %v115
    %3810 = vmatprep.subr.mxu0 0.0
    %3811 = vmatpush1.msra.mxu0 %v114
    %3812 = vmatprep.subr.mxu0 0.0
    %3813 = vmatpush2.msra.mxu0 0.0
    %3814 = vmatprep.subr.mxu0 0.0
    %3815 = vmatpush2.msra.mxu0 0.0
    %3816 = vmatprep.subr.mxu0 0.0
    %3817 = vmatpush2.msra.mxu0 0.0
    %3818 = vmatprep.subr.mxu0 0.0
    %3819 = vmatpush2.msra.mxu0 0.0
    %3820 = vmatprep.subr.mxu0 0.0
    %3821 = vmatpush2.msra.mxu0 0.0
    %3822 = vmatprep.subr.mxu0 0.0
    %3823 = vmatpush2.msra.mxu0 0.0
    %3824 = vmatprep.subr.mxu0 0.0
    %3825 = vmatpush2.msra.mxu0 0.0
    %3826 = vmatprep.subr.mxu0 0.0
    %3827 = vmatpush2.msra.mxu0 0.0
    %3828 = vmatprep.subr.mxu0 0.0
    %3829 = vmatpush2.msra.mxu0 0.0
    %3830 = vmatprep.subr.mxu0 0.0
    %3831 = vmatpush2.msra.mxu0 0.0
    %3832 = vmatprep.subr.mxu0 0.0
    %3833 = vmatpush2.msra.mxu0 0.0
    %3834 = vmatprep.subr.mxu0 0.0
    %3835 = vmatpush2.msra.mxu0 0.0
    %3836 = vmatprep.subr.mxu0 0.0
    %3837 = vmatpush2.msra.mxu0 0.0
    %3838 = vmatprep.subr.mxu0 0.0
    %3839 = vmatpush2.msra.mxu0 0.0
    %3840 = vmatprep.subr.mxu0 0.0
    %3841 = vmatpush2.msra.mxu0 0.0
    %3842 = vmatprep.subr.mxu0 0.0
    %3843 = vmatpush2.msra.mxu0 0.0
    %3844 = vmatprep.mubr.f32.mxu0 0.0
    %3845 = vmatmul.mubr.f32.gmra.mxu0 %v3638
    %v3846 = vpop.f32.mrf.mxu0
    %v3847 = vadd.f32 %v598, %v3846
    %v3848 = vpop.f32.mrf.mxu0
    %3849 = vdwg.mxu0
    %v3850 = vadd.f32 %v3494, %v3707
    %v3851 = vxor.u32 %v3850, 2147483648
    %v3852 = vmul.f32 %v3851, 1.442695
    %v3853 = vpow.pop %v3852
    %v3854 = vadd.f32 %v3853, 1.0
    %v3855 = vrcp.pop %v3854
    %v3856 = vmul.f32 1.0, %v3855
    %v3857 = vadd.f32 %v3564, %v3777
    %v3858 = vxor.u32 %v3857, 2147483648
    %v3859 = vmul.f32 %v3858, 1.442695
    %v3860 = vpow.pop %v3859
    %v3861 = vadd.f32 %v3860, 1.0
    %v3862 = vrcp.pop %v3861
    %v3863 = vmul.f32 1.0, %v3862
    %v3864 = vmul.f32 %v3856, %v3847
    %v3865 = vadd.f32 %v3634, %v3864
    %v3866 = vtanh.pop %v3865
    %v3867 = vsub.f32 1.0, %v3863
    %v3868 = vmul.f32 %v3867, %v3866
    %v3869 = vmul.f32 %v3863, %v3342
    %v3870 = vadd.f32 %v3868, %v3869
    %v3871 = vmul.f32 %v3870, %v695
    %v3872 = vsel %vm213, %v3871, 0.0
    %3873 = vadd.xlane.f32.xlu0 %v3872
    %v3874 = vpop.xlane.xlu0 %3873
    %v3875 = vadd.f32 %v3874, %v705
    %s3876 = scalar_lea.vmem [#allocation3], 56
    %v3877 = vld [vmem:[%s3876] sm:$0xff]
    %v3879 = vsel %vm132, %v3877, 0
    %3881 = vmatprep.subr.mxu0 0.0
    %3882 = vmatpush1.msra.mxu0 0.0
    %3883 = vmatprep.subr.mxu0 0.0
    %3884 = vmatpush1.msra.mxu0 0.0
    %3885 = vmatprep.subr.mxu0 0.0
    %3886 = vmatpush1.msra.mxu0 0.0
    %3887 = vmatprep.subr.mxu0 0.0
    %3888 = vmatpush1.msra.mxu0 0.0
    %3889 = vmatprep.subr.mxu0 0.0
    %3890 = vmatpush1.msra.mxu0 0.0
    %3891 = vmatprep.subr.mxu0 0.0
    %3892 = vmatpush1.msra.mxu0 0.0
    %3893 = vmatprep.subr.mxu0 0.0
    %3894 = vmatpush1.msra.mxu0 0.0
    %3895 = vmatprep.subr.mxu0 0.0
    %3896 = vmatpush1.msra.mxu0 0.0
    %3897 = vmatprep.subr.mxu0 0.0
    %3898 = vmatpush1.msra.mxu0 0.0
    %3899 = vmatprep.subr.mxu0 0.0
    %3900 = vmatpush1.msra.mxu0 0.0
    %3901 = vmatprep.subr.mxu0 0.0
    %3902 = vmatpush1.msra.mxu0 0.0
    %3903 = vmatprep.subr.mxu0 0.0
    %3904 = vmatpush1.msra.mxu0 0.0
    %3905 = vmatprep.subr.mxu0 0.0
    %3906 = vmatpush1.msra.mxu0 0.0
    %3907 = vmatprep.subr.mxu0 0.0
    %3908 = vmatpush1.msra.mxu0 0.0
    %3909 = vmatprep.subr.mxu0 0.0
    %3910 = vmatpush1.msra.mxu0 %v83
    %3911 = vmatprep.subr.mxu0 0.0
    %3912 = vmatpush1.msra.mxu0 %v82
    %3913 = vmatprep.subr.mxu0 0.0
    %3914 = vmatpush2.msra.mxu0 0.0
    %3915 = vmatprep.subr.mxu0 0.0
    %3916 = vmatpush2.msra.mxu0 0.0
    %3917 = vmatprep.subr.mxu0 0.0
    %3918 = vmatpush2.msra.mxu0 0.0
    %3919 = vmatprep.subr.mxu0 0.0
    %3920 = vmatpush2.msra.mxu0 0.0
    %3921 = vmatprep.subr.mxu0 0.0
    %3922 = vmatpush2.msra.mxu0 0.0
    %3923 = vmatprep.subr.mxu0 0.0
    %3924 = vmatpush2.msra.mxu0 0.0
    %3925 = vmatprep.subr.mxu0 0.0
    %3926 = vmatpush2.msra.mxu0 0.0
    %3927 = vmatprep.subr.mxu0 0.0
    %3928 = vmatpush2.msra.mxu0 0.0
    %3929 = vmatprep.subr.mxu0 0.0
    %3930 = vmatpush2.msra.mxu0 0.0
    %3931 = vmatprep.subr.mxu0 0.0
    %3932 = vmatpush2.msra.mxu0 0.0
    %3933 = vmatprep.subr.mxu0 0.0
    %3934 = vmatpush2.msra.mxu0 0.0
    %3935 = vmatprep.subr.mxu0 0.0
    %3936 = vmatpush2.msra.mxu0 0.0
    %3937 = vmatprep.subr.mxu0 0.0
    %3938 = vmatpush2.msra.mxu0 0.0
    %3939 = vmatprep.subr.mxu0 0.0
    %3940 = vmatpush2.msra.mxu0 0.0
    %3941 = vmatprep.subr.mxu0 0.0
    %3942 = vmatpush2.msra.mxu0 0.0
    %3943 = vmatprep.subr.mxu0 0.0
    %3944 = vmatpush2.msra.mxu0 0.0
    %3945 = vmatprep.mubr.f32.mxu0 0.0
    %3946 = vmatmul.mubr.f32.gmra.mxu0 %v3879
    %v3947 = vpop.f32.mrf.mxu0
    %v3948 = vadd.f32 %v130, %v3947
    %v3949 = vpop.f32.mrf.mxu0
    %3950 = vdwg.mxu0
    %v3951 = vmax.f32 %v3948, 0.0
    %v3953 = vsel %vm213, %v3951, 0
    %3955 = vmatprep.subr.mxu0 0.0
    %3956 = vmatpush1.msra.mxu0 0.0
    %3957 = vmatprep.subr.mxu0 0.0
    %3958 = vmatpush1.msra.mxu0 0.0
    %3959 = vmatprep.subr.mxu0 0.0
    %3960 = vmatpush1.msra.mxu0 0.0
    %3961 = vmatprep.subr.mxu0 0.0
    %3962 = vmatpush1.msra.mxu0 0.0
    %3963 = vmatprep.subr.mxu0 0.0
    %3964 = vmatpush1.msra.mxu0 0.0
    %3965 = vmatprep.subr.mxu0 0.0
    %3966 = vmatpush1.msra.mxu0 0.0
    %3967 = vmatprep.subr.mxu0 0.0
    %3968 = vmatpush1.msra.mxu0 0.0
    %3969 = vmatprep.subr.mxu0 0.0
    %3970 = vmatpush1.msra.mxu0 0.0
    %3971 = vmatprep.subr.mxu0 0.0
    %3972 = vmatpush1.msra.mxu0 0.0
    %3973 = vmatprep.subr.mxu0 0.0
    %3974 = vmatpush1.msra.mxu0 0.0
    %3975 = vmatprep.subr.mxu0 0.0
    %3976 = vmatpush1.msra.mxu0 0.0
    %3977 = vmatprep.subr.mxu0 0.0
    %3978 = vmatpush1.msra.mxu0 0.0
    %3979 = vmatprep.subr.mxu0 0.0
    %3980 = vmatpush1.msra.mxu0 %v88
    %3981 = vmatprep.subr.mxu0 0.0
    %3982 = vmatpush1.msra.mxu0 %v87
    %3983 = vmatprep.subr.mxu0 0.0
    %3984 = vmatpush1.msra.mxu0 %v86
    %3985 = vmatprep.subr.mxu0 0.0
    %3986 = vmatpush1.msra.mxu0 %v85
    %3987 = vmatprep.subr.mxu0 0.0
    %3988 = vmatpush2.msra.mxu0 0.0
    %3989 = vmatprep.subr.mxu0 0.0
    %3990 = vmatpush2.msra.mxu0 0.0
    %3991 = vmatprep.subr.mxu0 0.0
    %3992 = vmatpush2.msra.mxu0 0.0
    %3993 = vmatprep.subr.mxu0 0.0
    %3994 = vmatpush2.msra.mxu0 0.0
    %3995 = vmatprep.subr.mxu0 0.0
    %3996 = vmatpush2.msra.mxu0 0.0
    %3997 = vmatprep.subr.mxu0 0.0
    %3998 = vmatpush2.msra.mxu0 0.0
    %3999 = vmatprep.subr.mxu0 0.0
    %4000 = vmatpush2.msra.mxu0 0.0
    %4001 = vmatprep.subr.mxu0 0.0
    %4002 = vmatpush2.msra.mxu0 0.0
    %4003 = vmatprep.subr.mxu0 0.0
    %4004 = vmatpush2.msra.mxu0 0.0
    %4005 = vmatprep.subr.mxu0 0.0
    %4006 = vmatpush2.msra.mxu0 0.0
    %4007 = vmatprep.subr.mxu0 0.0
    %4008 = vmatpush2.msra.mxu0 0.0
    %4009 = vmatprep.subr.mxu0 0.0
    %4010 = vmatpush2.msra.mxu0 0.0
    %4011 = vmatprep.subr.mxu0 0.0
    %4012 = vmatpush2.msra.mxu0 0.0
    %4013 = vmatprep.subr.mxu0 0.0
    %4014 = vmatpush2.msra.mxu0 0.0
    %4015 = vmatprep.subr.mxu0 0.0
    %4016 = vmatpush2.msra.mxu0 0.0
    %4017 = vmatprep.subr.mxu0 0.0
    %4018 = vmatpush2.msra.mxu0 0.0
    %4019 = vmatprep.mubr.f32.mxu0 0.0
    %4020 = vmatmul.mubr.f32.gmra.mxu0 %v3953
    %v4021 = vpop.f32.mrf.mxu0
    %v4022 = vadd.f32 %v211, %v4021
    %v4023 = vpop.f32.mrf.mxu0
    %4024 = vdwg.mxu0
    %4025 = vmatprep.subr.mxu0 0.0
    %4026 = vmatpush1.msra.mxu0 0.0
    %4027 = vmatprep.subr.mxu0 0.0
    %4028 = vmatpush1.msra.mxu0 0.0
    %4029 = vmatprep.subr.mxu0 0.0
    %4030 = vmatpush1.msra.mxu0 0.0
    %4031 = vmatprep.subr.mxu0 0.0
    %4032 = vmatpush1.msra.mxu0 0.0
    %4033 = vmatprep.subr.mxu0 0.0
    %4034 = vmatpush1.msra.mxu0 0.0
    %4035 = vmatprep.subr.mxu0 0.0
    %4036 = vmatpush1.msra.mxu0 0.0
    %4037 = vmatprep.subr.mxu0 0.0
    %4038 = vmatpush1.msra.mxu0 0.0
    %4039 = vmatprep.subr.mxu0 0.0
    %4040 = vmatpush1.msra.mxu0 0.0
    %4041 = vmatprep.subr.mxu0 0.0
    %4042 = vmatpush1.msra.mxu0 0.0
    %4043 = vmatprep.subr.mxu0 0.0
    %4044 = vmatpush1.msra.mxu0 0.0
    %4045 = vmatprep.subr.mxu0 0.0
    %4046 = vmatpush1.msra.mxu0 0.0
    %4047 = vmatprep.subr.mxu0 0.0
    %4048 = vmatpush1.msra.mxu0 0.0
    %4049 = vmatprep.subr.mxu0 0.0
    %4050 = vmatpush1.msra.mxu0 %v93
    %4051 = vmatprep.subr.mxu0 0.0
    %4052 = vmatpush1.msra.mxu0 %v92
    %4053 = vmatprep.subr.mxu0 0.0
    %4054 = vmatpush1.msra.mxu0 %v91
    %4055 = vmatprep.subr.mxu0 0.0
    %4056 = vmatpush1.msra.mxu0 %v90
    %4057 = vmatprep.subr.mxu0 0.0
    %4058 = vmatpush2.msra.mxu0 0.0
    %4059 = vmatprep.subr.mxu0 0.0
    %4060 = vmatpush2.msra.mxu0 0.0
    %4061 = vmatprep.subr.mxu0 0.0
    %4062 = vmatpush2.msra.mxu0 0.0
    %4063 = vmatprep.subr.mxu0 0.0
    %4064 = vmatpush2.msra.mxu0 0.0
    %4065 = vmatprep.subr.mxu0 0.0
    %4066 = vmatpush2.msra.mxu0 0.0
    %4067 = vmatprep.subr.mxu0 0.0
    %4068 = vmatpush2.msra.mxu0 0.0
    %4069 = vmatprep.subr.mxu0 0.0
    %4070 = vmatpush2.msra.mxu0 0.0
    %4071 = vmatprep.subr.mxu0 0.0
    %4072 = vmatpush2.msra.mxu0 0.0
    %4073 = vmatprep.subr.mxu0 0.0
    %4074 = vmatpush2.msra.mxu0 0.0
    %4075 = vmatprep.subr.mxu0 0.0
    %4076 = vmatpush2.msra.mxu0 0.0
    %4077 = vmatprep.subr.mxu0 0.0
    %4078 = vmatpush2.msra.mxu0 0.0
    %4079 = vmatprep.subr.mxu0 0.0
    %4080 = vmatpush2.msra.mxu0 0.0
    %4081 = vmatprep.subr.mxu0 0.0
    %4082 = vmatpush2.msra.mxu0 0.0
    %4083 = vmatprep.subr.mxu0 0.0
    %4084 = vmatpush2.msra.mxu0 0.0
    %4085 = vmatprep.subr.mxu0 0.0
    %4086 = vmatpush2.msra.mxu0 0.0
    %4087 = vmatprep.subr.mxu0 0.0
    %4088 = vmatpush2.msra.mxu0 0.0
    %4089 = vmatprep.mubr.f32.mxu0 0.0
    %4090 = vmatmul.mubr.f32.gmra.mxu0 %v3953
    %v4091 = vpop.f32.mrf.mxu0
    %v4092 = vadd.f32 %v291, %v4091
    %v4093 = vpop.f32.mrf.mxu0
    %4094 = vdwg.mxu0
    %4095 = vmatprep.subr.mxu0 0.0
    %4096 = vmatpush1.msra.mxu0 0.0
    %4097 = vmatprep.subr.mxu0 0.0
    %4098 = vmatpush1.msra.mxu0 0.0
    %4099 = vmatprep.subr.mxu0 0.0
    %4100 = vmatpush1.msra.mxu0 0.0
    %4101 = vmatprep.subr.mxu0 0.0
    %4102 = vmatpush1.msra.mxu0 0.0
    %4103 = vmatprep.subr.mxu0 0.0
    %4104 = vmatpush1.msra.mxu0 0.0
    %4105 = vmatprep.subr.mxu0 0.0
    %4106 = vmatpush1.msra.mxu0 0.0
    %4107 = vmatprep.subr.mxu0 0.0
    %4108 = vmatpush1.msra.mxu0 0.0
    %4109 = vmatprep.subr.mxu0 0.0
    %4110 = vmatpush1.msra.mxu0 0.0
    %4111 = vmatprep.subr.mxu0 0.0
    %4112 = vmatpush1.msra.mxu0 0.0
    %4113 = vmatprep.subr.mxu0 0.0
    %4114 = vmatpush1.msra.mxu0 0.0
    %4115 = vmatprep.subr.mxu0 0.0
    %4116 = vmatpush1.msra.mxu0 0.0
    %4117 = vmatprep.subr.mxu0 0.0
    %4118 = vmatpush1.msra.mxu0 0.0
    %4119 = vmatprep.subr.mxu0 0.0
    %4120 = vmatpush1.msra.mxu0 %v98
    %4121 = vmatprep.subr.mxu0 0.0
    %4122 = vmatpush1.msra.mxu0 %v97
    %4123 = vmatprep.subr.mxu0 0.0
    %4124 = vmatpush1.msra.mxu0 %v96
    %4125 = vmatprep.subr.mxu0 0.0
    %4126 = vmatpush1.msra.mxu0 %v95
    %4127 = vmatprep.subr.mxu0 0.0
    %4128 = vmatpush2.msra.mxu0 0.0
    %4129 = vmatprep.subr.mxu0 0.0
    %4130 = vmatpush2.msra.mxu0 0.0
    %4131 = vmatprep.subr.mxu0 0.0
    %4132 = vmatpush2.msra.mxu0 0.0
    %4133 = vmatprep.subr.mxu0 0.0
    %4134 = vmatpush2.msra.mxu0 0.0
    %4135 = vmatprep.subr.mxu0 0.0
    %4136 = vmatpush2.msra.mxu0 0.0
    %4137 = vmatprep.subr.mxu0 0.0
    %4138 = vmatpush2.msra.mxu0 0.0
    %4139 = vmatprep.subr.mxu0 0.0
    %4140 = vmatpush2.msra.mxu0 0.0
    %4141 = vmatprep.subr.mxu0 0.0
    %4142 = vmatpush2.msra.mxu0 0.0
    %4143 = vmatprep.subr.mxu0 0.0
    %4144 = vmatpush2.msra.mxu0 0.0
    %4145 = vmatprep.subr.mxu0 0.0
    %4146 = vmatpush2.msra.mxu0 0.0
    %4147 = vmatprep.subr.mxu0 0.0
    %4148 = vmatpush2.msra.mxu0 0.0
    %4149 = vmatprep.subr.mxu0 0.0
    %4150 = vmatpush2.msra.mxu0 0.0
    %4151 = vmatprep.subr.mxu0 0.0
    %4152 = vmatpush2.msra.mxu0 0.0
    %4153 = vmatprep.subr.mxu0 0.0
    %4154 = vmatpush2.msra.mxu0 0.0
    %4155 = vmatprep.subr.mxu0 0.0
    %4156 = vmatpush2.msra.mxu0 0.0
    %4157 = vmatprep.subr.mxu0 0.0
    %4158 = vmatpush2.msra.mxu0 0.0
    %4159 = vmatprep.mubr.f32.mxu0 0.0
    %4160 = vmatmul.mubr.f32.gmra.mxu0 %v3953
    %v4161 = vpop.f32.mrf.mxu0
    %v4162 = vadd.f32 %v367, %v4161
    %v4163 = vpop.f32.mrf.mxu0
    %4164 = vdwg.mxu0
    %v4166 = vsel %vm213, %v3870, 0
    %4168 = vmatprep.subr.mxu0 0.0
    %4169 = vmatpush1.msra.mxu0 0.0
    %4170 = vmatprep.subr.mxu0 0.0
    %4171 = vmatpush1.msra.mxu0 0.0
    %4172 = vmatprep.subr.mxu0 0.0
    %4173 = vmatpush1.msra.mxu0 0.0
    %4174 = vmatprep.subr.mxu0 0.0
    %4175 = vmatpush1.msra.mxu0 0.0
    %4176 = vmatprep.subr.mxu0 0.0
    %4177 = vmatpush1.msra.mxu0 0.0
    %4178 = vmatprep.subr.mxu0 0.0
    %4179 = vmatpush1.msra.mxu0 0.0
    %4180 = vmatprep.subr.mxu0 0.0
    %4181 = vmatpush1.msra.mxu0 0.0
    %4182 = vmatprep.subr.mxu0 0.0
    %4183 = vmatpush1.msra.mxu0 0.0
    %4184 = vmatprep.subr.mxu0 0.0
    %4185 = vmatpush1.msra.mxu0 0.0
    %4186 = vmatprep.subr.mxu0 0.0
    %4187 = vmatpush1.msra.mxu0 0.0
    %4188 = vmatprep.subr.mxu0 0.0
    %4189 = vmatpush1.msra.mxu0 0.0
    %4190 = vmatprep.subr.mxu0 0.0
    %4191 = vmatpush1.msra.mxu0 0.0
    %4192 = vmatprep.subr.mxu0 0.0
    %4193 = vmatpush1.msra.mxu0 %v107
    %4194 = vmatprep.subr.mxu0 0.0
    %4195 = vmatpush1.msra.mxu0 %v106
    %4196 = vmatprep.subr.mxu0 0.0
    %4197 = vmatpush1.msra.mxu0 %v105
    %4198 = vmatprep.subr.mxu0 0.0
    %4199 = vmatpush1.msra.mxu0 %v104
    %4200 = vmatprep.subr.mxu0 0.0
    %4201 = vmatpush2.msra.mxu0 0.0
    %4202 = vmatprep.subr.mxu0 0.0
    %4203 = vmatpush2.msra.mxu0 0.0
    %4204 = vmatprep.subr.mxu0 0.0
    %4205 = vmatpush2.msra.mxu0 0.0
    %4206 = vmatprep.subr.mxu0 0.0
    %4207 = vmatpush2.msra.mxu0 0.0
    %4208 = vmatprep.subr.mxu0 0.0
    %4209 = vmatpush2.msra.mxu0 0.0
    %4210 = vmatprep.subr.mxu0 0.0
    %4211 = vmatpush2.msra.mxu0 0.0
    %4212 = vmatprep.subr.mxu0 0.0
    %4213 = vmatpush2.msra.mxu0 0.0
    %4214 = vmatprep.subr.mxu0 0.0
    %4215 = vmatpush2.msra.mxu0 0.0
    %4216 = vmatprep.subr.mxu0 0.0
    %4217 = vmatpush2.msra.mxu0 0.0
    %4218 = vmatprep.subr.mxu0 0.0
    %4219 = vmatpush2.msra.mxu0 0.0
    %4220 = vmatprep.subr.mxu0 0.0
    %4221 = vmatpush2.msra.mxu0 0.0
    %4222 = vmatprep.subr.mxu0 0.0
    %4223 = vmatpush2.msra.mxu0 0.0
    %4224 = vmatprep.subr.mxu0 0.0
    %4225 = vmatpush2.msra.mxu0 0.0
    %4226 = vmatprep.subr.mxu0 0.0
    %4227 = vmatpush2.msra.mxu0 0.0
    %4228 = vmatprep.subr.mxu0 0.0
    %4229 = vmatpush2.msra.mxu0 0.0
    %4230 = vmatprep.subr.mxu0 0.0
    %4231 = vmatpush2.msra.mxu0 0.0
    %4232 = vmatprep.mubr.f32.mxu0 0.0
    %4233 = vmatmul.mubr.f32.gmra.mxu0 %v4166
    %v4234 = vpop.f32.mrf.mxu0
    %v4235 = vadd.f32 %v443, %v4234
    %v4236 = vpop.f32.mrf.mxu0
    %4237 = vdwg.mxu0
    %4238 = vmatprep.subr.mxu0 0.0
    %4239 = vmatpush1.msra.mxu0 0.0
    %4240 = vmatprep.subr.mxu0 0.0
    %4241 = vmatpush1.msra.mxu0 0.0
    %4242 = vmatprep.subr.mxu0 0.0
    %4243 = vmatpush1.msra.mxu0 0.0
    %4244 = vmatprep.subr.mxu0 0.0
    %4245 = vmatpush1.msra.mxu0 0.0
    %4246 = vmatprep.subr.mxu0 0.0
    %4247 = vmatpush1.msra.mxu0 0.0
    %4248 = vmatprep.subr.mxu0 0.0
    %4249 = vmatpush1.msra.mxu0 0.0
    %4250 = vmatprep.subr.mxu0 0.0
    %4251 = vmatpush1.msra.mxu0 0.0
    %4252 = vmatprep.subr.mxu0 0.0
    %4253 = vmatpush1.msra.mxu0 0.0
    %4254 = vmatprep.subr.mxu0 0.0
    %4255 = vmatpush1.msra.mxu0 0.0
    %4256 = vmatprep.subr.mxu0 0.0
    %4257 = vmatpush1.msra.mxu0 0.0
    %4258 = vmatprep.subr.mxu0 0.0
    %4259 = vmatpush1.msra.mxu0 0.0
    %4260 = vmatprep.subr.mxu0 0.0
    %4261 = vmatpush1.msra.mxu0 0.0
    %4262 = vmatprep.subr.mxu0 0.0
    %4263 = vmatpush1.msra.mxu0 %v112
    %4264 = vmatprep.subr.mxu0 0.0
    %4265 = vmatpush1.msra.mxu0 %v111
    %4266 = vmatprep.subr.mxu0 0.0
    %4267 = vmatpush1.msra.mxu0 %v110
    %4268 = vmatprep.subr.mxu0 0.0
    %4269 = vmatpush1.msra.mxu0 %v109
    %4270 = vmatprep.subr.mxu0 0.0
    %4271 = vmatpush2.msra.mxu0 0.0
    %4272 = vmatprep.subr.mxu0 0.0
    %4273 = vmatpush2.msra.mxu0 0.0
    %4274 = vmatprep.subr.mxu0 0.0
    %4275 = vmatpush2.msra.mxu0 0.0
    %4276 = vmatprep.subr.mxu0 0.0
    %4277 = vmatpush2.msra.mxu0 0.0
    %4278 = vmatprep.subr.mxu0 0.0
    %4279 = vmatpush2.msra.mxu0 0.0
    %4280 = vmatprep.subr.mxu0 0.0
    %4281 = vmatpush2.msra.mxu0 0.0
    %4282 = vmatprep.subr.mxu0 0.0
    %4283 = vmatpush2.msra.mxu0 0.0
    %4284 = vmatprep.subr.mxu0 0.0
    %4285 = vmatpush2.msra.mxu0 0.0
    %4286 = vmatprep.subr.mxu0 0.0
    %4287 = vmatpush2.msra.mxu0 0.0
    %4288 = vmatprep.subr.mxu0 0.0
    %4289 = vmatpush2.msra.mxu0 0.0
    %4290 = vmatprep.subr.mxu0 0.0
    %4291 = vmatpush2.msra.mxu0 0.0
    %4292 = vmatprep.subr.mxu0 0.0
    %4293 = vmatpush2.msra.mxu0 0.0
    %4294 = vmatprep.subr.mxu0 0.0
    %4295 = vmatpush2.msra.mxu0 0.0
    %4296 = vmatprep.subr.mxu0 0.0
    %4297 = vmatpush2.msra.mxu0 0.0
    %4298 = vmatprep.subr.mxu0 0.0
    %4299 = vmatpush2.msra.mxu0 0.0
    %4300 = vmatprep.subr.mxu0 0.0
    %4301 = vmatpush2.msra.mxu0 0.0
    %4302 = vmatprep.mubr.f32.mxu0 0.0
    %4303 = vmatmul.mubr.f32.gmra.mxu0 %v4166
    %v4304 = vpop.f32.mrf.mxu0
    %v4305 = vadd.f32 %v522, %v4304
    %v4306 = vpop.f32.mrf.mxu0
    %4307 = vdwg.mxu0
    %4308 = vmatprep.subr.mxu0 0.0
    %4309 = vmatpush1.msra.mxu0 0.0
    %4310 = vmatprep.subr.mxu0 0.0
    %4311 = vmatpush1.msra.mxu0 0.0
    %4312 = vmatprep.subr.mxu0 0.0
    %4313 = vmatpush1.msra.mxu0 0.0
    %4314 = vmatprep.subr.mxu0 0.0
    %4315 = vmatpush1.msra.mxu0 0.0
    %4316 = vmatprep.subr.mxu0 0.0
    %4317 = vmatpush1.msra.mxu0 0.0
    %4318 = vmatprep.subr.mxu0 0.0
    %4319 = vmatpush1.msra.mxu0 0.0
    %4320 = vmatprep.subr.mxu0 0.0
    %4321 = vmatpush1.msra.mxu0 0.0
    %4322 = vmatprep.subr.mxu0 0.0
    %4323 = vmatpush1.msra.mxu0 0.0
    %4324 = vmatprep.subr.mxu0 0.0
    %4325 = vmatpush1.msra.mxu0 0.0
    %4326 = vmatprep.subr.mxu0 0.0
    %4327 = vmatpush1.msra.mxu0 0.0
    %4328 = vmatprep.subr.mxu0 0.0
    %4329 = vmatpush1.msra.mxu0 0.0
    %4330 = vmatprep.subr.mxu0 0.0
    %4331 = vmatpush1.msra.mxu0 0.0
    %4332 = vmatprep.subr.mxu0 0.0
    %4333 = vmatpush1.msra.mxu0 %v117
    %4334 = vmatprep.subr.mxu0 0.0
    %4335 = vmatpush1.msra.mxu0 %v116
    %4336 = vmatprep.subr.mxu0 0.0
    %4337 = vmatpush1.msra.mxu0 %v115
    %4338 = vmatprep.subr.mxu0 0.0
    %4339 = vmatpush1.msra.mxu0 %v114
    %4340 = vmatprep.subr.mxu0 0.0
    %4341 = vmatpush2.msra.mxu0 0.0
    %4342 = vmatprep.subr.mxu0 0.0
    %4343 = vmatpush2.msra.mxu0 0.0
    %4344 = vmatprep.subr.mxu0 0.0
    %4345 = vmatpush2.msra.mxu0 0.0
    %4346 = vmatprep.subr.mxu0 0.0
    %4347 = vmatpush2.msra.mxu0 0.0
    %4348 = vmatprep.subr.mxu0 0.0
    %4349 = vmatpush2.msra.mxu0 0.0
    %4350 = vmatprep.subr.mxu0 0.0
    %4351 = vmatpush2.msra.mxu0 0.0
    %4352 = vmatprep.subr.mxu0 0.0
    %4353 = vmatpush2.msra.mxu0 0.0
    %4354 = vmatprep.subr.mxu0 0.0
    %4355 = vmatpush2.msra.mxu0 0.0
    %4356 = vmatprep.subr.mxu0 0.0
    %4357 = vmatpush2.msra.mxu0 0.0
    %4358 = vmatprep.subr.mxu0 0.0
    %4359 = vmatpush2.msra.mxu0 0.0
    %4360 = vmatprep.subr.mxu0 0.0
    %4361 = vmatpush2.msra.mxu0 0.0
    %4362 = vmatprep.subr.mxu0 0.0
    %4363 = vmatpush2.msra.mxu0 0.0
    %4364 = vmatprep.subr.mxu0 0.0
    %4365 = vmatpush2.msra.mxu0 0.0
    %4366 = vmatprep.subr.mxu0 0.0
    %4367 = vmatpush2.msra.mxu0 0.0
    %4368 = vmatprep.subr.mxu0 0.0
    %4369 = vmatpush2.msra.mxu0 0.0
    %4370 = vmatprep.subr.mxu0 0.0
    %4371 = vmatpush2.msra.mxu0 0.0
    %4372 = vmatprep.mubr.f32.mxu0 0.0
    %4373 = vmatmul.mubr.f32.gmra.mxu0 %v4166
    %v4374 = vpop.f32.mrf.mxu0
    %v4375 = vadd.f32 %v598, %v4374
    %v4376 = vpop.f32.mrf.mxu0
    %4377 = vdwg.mxu0
    %v4378 = vadd.f32 %v4022, %v4235
    %v4379 = vxor.u32 %v4378, 2147483648
    %v4380 = vmul.f32 %v4379, 1.442695
    %v4381 = vpow.pop %v4380
    %v4382 = vadd.f32 %v4381, 1.0
    %v4383 = vrcp.pop %v4382
    %v4384 = vmul.f32 1.0, %v4383
    %v4385 = vadd.f32 %v4092, %v4305
    %v4386 = vxor.u32 %v4385, 2147483648
    %v4387 = vmul.f32 %v4386, 1.442695
    %v4388 = vpow.pop %v4387
    %v4389 = vadd.f32 %v4388, 1.0
    %v4390 = vrcp.pop %v4389
    %v4391 = vmul.f32 1.0, %v4390
    %v4392 = vmul.f32 %v4384, %v4375
    %v4393 = vadd.f32 %v4162, %v4392
    %v4394 = vtanh.pop %v4393
    %v4395 = vsub.f32 1.0, %v4391
    %v4396 = vmul.f32 %v4395, %v4394
    %v4397 = vmul.f32 %v4391, %v3870
    %v4398 = vadd.f32 %v4396, %v4397
    %v4399 = vmul.f32 %v4398, %v695
    %v4400 = vsel %vm213, %v4399, 0.0
    %4401 = vadd.xlane.f32.xlu0 %v4400
    %v4402 = vpop.xlane.xlu0 %4401
    %v4403 = vadd.f32 %v4402, %v705
    %v4404 = vmax.f32 %v707, %v1235
    %v4405 = vmax.f32 %v4404, %v1763
    %v4406 = vmax.f32 %v4405, %v2291
    %v4407 = vmax.f32 %v4406, %v2819
    %v4408 = vmax.f32 %v4407, %v3347
    %v4409 = vmax.f32 %v4408, %v3875
    %v4410 = vmax.f32 %v4409, %v4403
    %v4411 = vsub.f32 %v707, %v4410
    %v4412 = vmul.f32 %v4411, 1.442695
    %v4413 = vpow.pop %v4412
    %v4414 = vsub.f32 %v1235, %v4410
    %v4415 = vmul.f32 %v4414, 1.442695
    %v4416 = vpow.pop %v4415
    %v4417 = vsub.f32 %v1763, %v4410
    %v4418 = vmul.f32 %v4417, 1.442695
    %v4419 = vpow.pop %v4418
    %v4420 = vsub.f32 %v2291, %v4410
    %v4421 = vmul.f32 %v4420, 1.442695
    %v4422 = vpow.pop %v4421
    %v4423 = vsub.f32 %v2819, %v4410
    %v4424 = vmul.f32 %v4423, 1.442695
    %v4425 = vpow.pop %v4424
    %v4426 = vsub.f32 %v3347, %v4410
    %v4427 = vmul.f32 %v4426, 1.442695
    %v4428 = vpow.pop %v4427
    %v4429 = vsub.f32 %v3875, %v4410
    %v4430 = vmul.f32 %v4429, 1.442695
    %v4431 = vpow.pop %v4430
    %v4432 = vsub.f32 %v4403, %v4410
    %v4433 = vmul.f32 %v4432, 1.442695
    %v4434 = vpow.pop %v4433
    %v4435 = vadd.f32 %v4413, %v4416
    %v4436 = vadd.f32 %v4435, %v4419
    %v4437 = vadd.f32 %v4436, %v4422
    %v4438 = vadd.f32 %v4437, %v4425
    %v4439 = vadd.f32 %v4438, %v4428
    %v4440 = vadd.f32 %v4439, %v4431
    %v4441 = vadd.f32 %v4440, %v4434
    %v4442 = vld [vmem:[%s1] sm:$0xff]
    %v4443 = vmul.f32 %v4413, %v4442
    %4445 = vset.pattern.permute.xlu0 0
    %4446 = vperm.xlu0 %4445, %v4443
    %v4447 = vpop.permute.xlu0 %4446
    %v4449 = vmul.f32 %v690, %v4447
    %v4450 = vadd.f32 %v4449, 0.0
    %s4451 = scalar_lea.vmem %s1, 8
    %v4452 = vld [vmem:[%s4451] sm:$0xff]
    %v4453 = vmul.f32 %v4416, %v4452
    %4455 = vset.pattern.permute.xlu0 0
    %4456 = vperm.xlu0 %4455, %v4453
    %v4457 = vpop.permute.xlu0 %4456
    %v4459 = vmul.f32 %v1230, %v4457
    %v4460 = vadd.f32 %v4450, %v4459
    %s4461 = scalar_lea.vmem %s1, 16
    %v4462 = vld [vmem:[%s4461] sm:$0xff]
    %v4463 = vmul.f32 %v4419, %v4462
    %4465 = vset.pattern.permute.xlu0 0
    %4466 = vperm.xlu0 %4465, %v4463
    %v4467 = vpop.permute.xlu0 %4466
    %v4469 = vmul.f32 %v1758, %v4467
    %v4470 = vadd.f32 %v4460, %v4469
    %s4471 = scalar_lea.vmem %s1, 24
    %v4472 = vld [vmem:[%s4471] sm:$0xff]
    %v4473 = vmul.f32 %v4422, %v4472
    %4475 = vset.pattern.permute.xlu0 0
    %4476 = vperm.xlu0 %4475, %v4473
    %v4477 = vpop.permute.xlu0 %4476
    %v4479 = vmul.f32 %v2286, %v4477
    %v4480 = vadd.f32 %v4470, %v4479
    %s4481 = scalar_lea.vmem %s1, 32
    %v4482 = vld [vmem:[%s4481] sm:$0xff]
    %v4483 = vmul.f32 %v4425, %v4482
    %4485 = vset.pattern.permute.xlu0 0
    %4486 = vperm.xlu0 %4485, %v4483
    %v4487 = vpop.permute.xlu0 %4486
    %v4489 = vmul.f32 %v2814, %v4487
    %v4490 = vadd.f32 %v4480, %v4489
    %s4491 = scalar_lea.vmem %s1, 40
    %v4492 = vld [vmem:[%s4491] sm:$0xff]
    %v4493 = vmul.f32 %v4428, %v4492
    %4495 = vset.pattern.permute.xlu0 0
    %4496 = vperm.xlu0 %4495, %v4493
    %v4497 = vpop.permute.xlu0 %4496
    %v4499 = vmul.f32 %v3342, %v4497
    %v4500 = vadd.f32 %v4490, %v4499
    %s4501 = scalar_lea.vmem %s1, 48
    %v4502 = vld [vmem:[%s4501] sm:$0xff]
    %v4503 = vmul.f32 %v4431, %v4502
    %4505 = vset.pattern.permute.xlu0 0
    %4506 = vperm.xlu0 %4505, %v4503
    %v4507 = vpop.permute.xlu0 %4506
    %v4509 = vmul.f32 %v3870, %v4507
    %v4510 = vadd.f32 %v4500, %v4509
    %s4511 = scalar_lea.vmem %s1, 56
    %v4512 = vld [vmem:[%s4511] sm:$0xff]
    %v4513 = vmul.f32 %v4434, %v4512
    %4515 = vset.pattern.permute.xlu0 0
    %4516 = vperm.xlu0 %4515, %v4513
    %v4517 = vpop.permute.xlu0 %4516
    %v4519 = vmul.f32 %v4398, %v4517
    %v4520 = vadd.f32 %v4510, %v4519
    %4522 = vset.pattern.permute.xlu0 0
    %4523 = vperm.xlu0 %4522, %v4441
    %v4524 = vpop.permute.xlu0 %4523
    %v4526 = vrcp.pop %v4524
    %v4527 = vmul.f32 %v4520, %v4526
    %v4528 = vld [vmem:[%s10] sm:$0xff]
    %v4529 = vld [vmem:[%s10 + $0x8] sm:$0xff]
    %v4530 = vld [vmem:[%s10 + $0x10] sm:$0xff]
    %v4531 = vld [vmem:[%s10 + $0x18] sm:$0xff]
    %v4532 = vld [vmem:[%s11] sm:$0x1]
    %v4534 = vlaneseq
    %v4535 = vshrl.u32 %v4534, 7
    %v4536 = vsub.s32 0, %v4535
    %v4537 = vrot.slane %v4532, %v4536
    %v4540 = vsel %vm213, %v4527, 0
    %4542 = vmatprep.subr.mxu0 0.0
    %4543 = vmatpush1.msra.mxu0 0.0
    %4544 = vmatprep.subr.mxu0 0.0
    %4545 = vmatpush1.msra.mxu0 0.0
    %4546 = vmatprep.subr.mxu0 0.0
    %4547 = vmatpush1.msra.mxu0 0.0
    %4548 = vmatprep.subr.mxu0 0.0
    %4549 = vmatpush1.msra.mxu0 0.0
    %4550 = vmatprep.subr.mxu0 0.0
    %4551 = vmatpush1.msra.mxu0 0.0
    %4552 = vmatprep.subr.mxu0 0.0
    %4553 = vmatpush1.msra.mxu0 0.0
    %4554 = vmatprep.subr.mxu0 0.0
    %4555 = vmatpush1.msra.mxu0 0.0
    %4556 = vmatprep.subr.mxu0 0.0
    %4557 = vmatpush1.msra.mxu0 0.0
    %4558 = vmatprep.subr.mxu0 0.0
    %4559 = vmatpush1.msra.mxu0 0.0
    %4560 = vmatprep.subr.mxu0 0.0
    %4561 = vmatpush1.msra.mxu0 0.0
    %4562 = vmatprep.subr.mxu0 0.0
    %4563 = vmatpush1.msra.mxu0 0.0
    %4564 = vmatprep.subr.mxu0 0.0
    %4565 = vmatpush1.msra.mxu0 0.0
    %4566 = vmatprep.subr.mxu0 0.0
    %4567 = vmatpush1.msra.mxu0 %v4531
    %4568 = vmatprep.subr.mxu0 0.0
    %4569 = vmatpush1.msra.mxu0 %v4530
    %4570 = vmatprep.subr.mxu0 0.0
    %4571 = vmatpush1.msra.mxu0 %v4529
    %4572 = vmatprep.subr.mxu0 0.0
    %4573 = vmatpush1.msra.mxu0 %v4528
    %4574 = vmatprep.subr.mxu0 0.0
    %4575 = vmatpush2.msra.mxu0 0.0
    %4576 = vmatprep.subr.mxu0 0.0
    %4577 = vmatpush2.msra.mxu0 0.0
    %4578 = vmatprep.subr.mxu0 0.0
    %4579 = vmatpush2.msra.mxu0 0.0
    %4580 = vmatprep.subr.mxu0 0.0
    %4581 = vmatpush2.msra.mxu0 0.0
    %4582 = vmatprep.subr.mxu0 0.0
    %4583 = vmatpush2.msra.mxu0 0.0
    %4584 = vmatprep.subr.mxu0 0.0
    %4585 = vmatpush2.msra.mxu0 0.0
    %4586 = vmatprep.subr.mxu0 0.0
    %4587 = vmatpush2.msra.mxu0 0.0
    %4588 = vmatprep.subr.mxu0 0.0
    %4589 = vmatpush2.msra.mxu0 0.0
    %4590 = vmatprep.subr.mxu0 0.0
    %4591 = vmatpush2.msra.mxu0 0.0
    %4592 = vmatprep.subr.mxu0 0.0
    %4593 = vmatpush2.msra.mxu0 0.0
    %4594 = vmatprep.subr.mxu0 0.0
    %4595 = vmatpush2.msra.mxu0 0.0
    %4596 = vmatprep.subr.mxu0 0.0
    %4597 = vmatpush2.msra.mxu0 0.0
    %4598 = vmatprep.subr.mxu0 0.0
    %4599 = vmatpush2.msra.mxu0 0.0
    %4600 = vmatprep.subr.mxu0 0.0
    %4601 = vmatpush2.msra.mxu0 0.0
    %4602 = vmatprep.subr.mxu0 0.0
    %4603 = vmatpush2.msra.mxu0 0.0
    %4604 = vmatprep.subr.mxu0 0.0
    %4605 = vmatpush2.msra.mxu0 0.0
    %4606 = vmatprep.mubr.f32.mxu0 0.0
    %4607 = vmatmul.mubr.f32.gmra.mxu0 %v4540
    %v4608 = vpop.f32.mrf.mxu0
    %v4609 = vadd.f32 %v4537, %v4608
    %v4610 = vpop.f32.mrf.mxu0
    %4611 = vdwg.mxu0
    %vm4612 = vcmask 31744
    %4613 = vst.msk [vmem:[%s12] sm:$0xff] %vm4612, %v4609
    // Predicated region
    $region62: #{tpu_custom_call.1} parent=1 // pred_check
      _
    $region63: #{tpu_custom_call.1} parent=1 // pred_check_branch
      %4615 = sbr.rel (0) target = $region65
    $region64: #{tpu_custom_call.1} parent=1 // pred_region
      _
    $region65: #{tpu_custom_call.1} parent=1 // pred_fallthru
      _
    // Predicated region
    $region66: #{tpu_custom_call.1} parent=1 // pred_check
      _
    $region67: #{tpu_custom_call.1} parent=1 // pred_check_branch
      %4617 = sbr.rel (0) target = $region69
    $region68: #{tpu_custom_call.1} parent=1 // pred_region
      _
    $region69: #{tpu_custom_call.1} parent=1 // pred_fallthru
      _
    %4618 = vsyncpa [#allocation4], 1
    %4619 = vsyncpa [#allocation6], 1

</llo_original>
